<compile_context>
chip_gen: v7x
topology: tpu7x:2x2x1
jax: 0.10.0
libtpu: 0.0.40
codegen_flags: <defaults>
</compile_context>

<pallas_src>
import functools

import jax
import jax.numpy as jnp
from jax.experimental import pallas as pl
from jax.experimental.pallas import tpu as pltpu

EPS = 1e-5  # PyTorch nn.LayerNorm default


def _layernorm(x, g, b):
    mu = jnp.mean(x, axis=-1, keepdims=True)
    var = jnp.mean((x - mu) ** 2, axis=-1, keepdims=True)
    return (x - mu) * jax.lax.rsqrt(var + EPS) * g + b


# -----------------------------------------------------------------------------
# Fused Block kernel. grid = (B // bpp,); each program handles `bpp` batch
# elements with full, lane-dense (T, d) tiles (T = d = 128 in the toy config).
# -----------------------------------------------------------------------------
def block_kernel(x_ref, ln1g_ref, ln1b_ref, wqkv_ref, wo_ref, bo_ref,
                 ln2g_ref, ln2b_ref, w1_ref, b1_ref, w2_ref, b2_ref,
                 out_ref, *, n_head, bf16_exp):
    f32, bf16 = jnp.float32, jnp.bfloat16

    x = x_ref[...]                                    # (bpp, T, d) f32
    bpp, T, d = x.shape
    dh = d // n_head
    scale = d ** (-0.5)                               # model-dim scaling (reference)

    xn = _layernorm(x, ln1g_ref[0], ln1b_ref[0])      # norm1, f32, (bpp, T, d)
    xn2 = xn.reshape(bpp * T, d)                      # fold batch into matmul rows

    # Fused QKV projection: one (bpp*T, d) x (d, 3d) bf16 MXU matmul, f32 accum.
    qkv = jnp.dot(xn2.astype(bf16), wqkv_ref[...],
                  preferred_element_type=f32)         # (bpp*T, 3d) f32
    qkv_bf = qkv.astype(bf16)                         # single cast; q/k/v sliced from it

    # Causal mask, hoisted out of the per-(batch, head) loops.
    row = jax.lax.broadcasted_iota(jnp.int32, (T, T), 0)
    col = jax.lax.broadcasted_iota(jnp.int32, (T, T), 1)
    causal = row >= col

    # Per-head attention. Heads are concatenated and fed through ONE full-K
    # (bpp*T, d) x (d, d) output projection (instead of per-head K=dh matmuls).
    o_rows = []
    for b in range(bpp):                              # static unroll (tiny bpp)
        heads = []
        r0 = b * T
        for h in range(n_head):                       # static unroll over heads
            q = qkv_bf[r0:r0 + T, h * dh:(h + 1) * dh]
            k = qkv_bf[r0:r0 + T, d + h * dh:d + (h + 1) * dh]
            v = qkv_bf[r0:r0 + T, 2 * d + h * dh:2 * d + (h + 1) * dh]
            s = jax.lax.dot_general(q, k, (((1,), (1,)), ((), ())),
                                    preferred_element_type=f32) * scale
            s = jnp.where(causal, s, -1e30)           # f32-safe large negative
            m = jnp.max(s, axis=-1, keepdims=True)
            if bf16_exp:
                # bf16 EUP (v6e/v7x): exp in bf16, row-sum in f32.
                e = jnp.exp((s - m).astype(bf16))
                denom = jnp.sum(e.astype(f32), axis=-1, keepdims=True)
            else:
                # v5e: no bf16 EUP -> f32 exp.
                ef = jnp.exp(s - m)
                denom = jnp.sum(ef, axis=-1, keepdims=True)
                e = ef.astype(bf16)
            inv = pl.reciprocal(denom, approx=True)   # EUP slot, (T, 1) f32
            # Unnormalised PV matmul, normalise afterwards (flash-style).
            o = jnp.dot(e, v, preferred_element_type=f32) * inv   # (T, dh) f32
            heads.append(o)
        o_rows.append(jnp.concatenate(heads, axis=-1))            # (T, d)
    o_all = o_rows[0] if bpp == 1 else jnp.concatenate(o_rows, axis=0)  # (bpp*T, d)

    # Single full-K output projection (K = d = 128 fills the MXU depth).
    att = jnp.dot(o_all.astype(bf16), wo_ref[...],
                  preferred_element_type=f32)         # (bpp*T, d)
    w = att + bo_ref[0]                               # output-projection bias
    # NOTE: residual into LN2 is the LN1 output (matches the reference's
    # `x = norm1(x)` reassignment), not the raw block input.
    y = _layernorm(xn2 + w, ln2g_ref[0], ln2b_ref[0])

    # MLP (relu) + residual; bf16 MXU, f32 accumulation & elementwise.
    h1 = jnp.maximum(
        jnp.dot(y.astype(bf16), w1_ref[...], preferred_element_type=f32)
        + b1_ref[0], 0.0)
    mlp = jnp.dot(h1.astype(bf16), w2_ref[...],
                  preferred_element_type=f32) + b2_ref[0]
    out_ref[...] = (mlp + y).reshape(bpp, T, d).astype(out_ref.dtype)


_SEMANTICS = {
    "parallel": "parallel",
    "arbitrary": "arbitrary",
    "core_parallel": pltpu.CORE_PARALLEL,
}


def block_forward(x, p, n_head, *, bpp, semantics, bf16_exp):
    B, T, d = x.shape
    d_ff = p["w1"].shape[1]
    assert B % bpp == 0
    kernel = functools.partial(block_kernel, n_head=n_head, bf16_exp=bf16_exp)
    return pl.pallas_call(
        kernel,
        out_shape=jax.ShapeDtypeStruct((B, T, d), jnp.float32),
        grid=(B // bpp,),
        in_specs=[
            pl.BlockSpec((bpp, T, d), lambda b: (b, 0, 0)),   # x
            pl.BlockSpec((1, d), lambda b: (0, 0)),           # ln1 gamma
            pl.BlockSpec((1, d), lambda b: (0, 0)),           # ln1 beta
            pl.BlockSpec((d, 3 * d), lambda b: (0, 0)),       # fused Wqkv (bf16)
            pl.BlockSpec((d, d), lambda b: (0, 0)),           # Wo (bf16)
            pl.BlockSpec((1, d), lambda b: (0, 0)),           # bo
            pl.BlockSpec((1, d), lambda b: (0, 0)),           # ln2 gamma
            pl.BlockSpec((1, d), lambda b: (0, 0)),           # ln2 beta
            pl.BlockSpec((d, d_ff), lambda b: (0, 0)),        # W1 (bf16)
            pl.BlockSpec((1, d_ff), lambda b: (0, 0)),        # b1
            pl.BlockSpec((d_ff, d), lambda b: (0, 0)),        # W2 (bf16)
            pl.BlockSpec((1, d), lambda b: (0, 0)),           # b2
        ],
        out_specs=pl.BlockSpec((bpp, T, d), lambda b: (b, 0, 0)),
        compiler_params=pltpu.CompilerParams(
            dimension_semantics=(_SEMANTICS[semantics],),
            vmem_limit_bytes=32 * 1024 * 1024),
    )(x, p["ln1_g"], p["ln1_b"], p["wqkv"], p["wo"], p["bo"],
      p["ln2_g"], p["ln2_b"], p["w1"], p["b1"], p["w2"], p["b2"])


@functools.partial(jax.jit,
                   static_argnames=("n_head", "bpp", "semantics", "bf16_exp"))
def block_apply(x, params, n_head, bpp, semantics, bf16_exp):
    return block_forward(x, params, n_head,
                         bpp=bpp, semantics=semantics, bf16_exp=bf16_exp)


def _tpu_schedule(B):
    """Pick (bpp, semantics, bf16_exp) from the local TPU generation."""
    kind = jax.devices()[0].device_kind.lower()
    is_v7 = ("v7" in kind) or ("7x" in kind)
    single_tc = any(t in kind for t in
                    ("v5e", "v5 lite", "v5lite", "v6e", "v6 lite", "v6lite"))
    bf16_exp = ("v6" in kind) or is_v7           # bf16 EUP only on v6e / v7x
    if single_tc:
        # One TensorCore: fold the batch into one program (M = B*T rows),
        # no per-grid-step pipeline overhead.
        return B, "arbitrary", bf16_exp
    if is_v7 and B >= 2:
        # Two TensorCores per chip: shard the batch axis across them.
        return 1, "core_parallel", bf16_exp
    return 1, "parallel", bf16_exp               # v4 / v5p / unknown


# -----------------------------------------------------------------------------
# Pure-JAX reference with the SAME mixed precision (bf16 MXU inputs, f32 accum)
# so the Pallas kernel can be checked with a tight tolerance.
# -----------------------------------------------------------------------------
def block_reference(x, p, n_head):
    f32, bf16 = jnp.float32, jnp.bfloat16
    B, T, d = x.shape
    dh = d // n_head
    scale = d ** (-0.5)

    def mm(a, w):
        return jnp.einsum("...k,kn->...n", a.astype(bf16), w.astype(bf16),
                          preferred_element_type=f32)

    xn = _layernorm(x, p["ln1_g"][0], p["ln1_b"][0])
    qkv = mm(xn, p["wqkv"])
    mask = jnp.tril(jnp.ones((T, T), dtype=bool))
    heads = []
    for h in range(n_head):
        q = qkv[..., h * dh:(h + 1) * dh]
        k = qkv[..., d + h * dh:d + (h + 1) * dh]
        v = qkv[..., 2 * d + h * dh:2 * d + (h + 1) * dh]
        s = jnp.einsum("bqe,bke->bqk", q.astype(bf16), k.astype(bf16),
                       preferred_element_type=f32) * scale
        s = jnp.where(mask, s, -1e30)
        pw = jax.nn.softmax(s, axis=-1)
        heads.append(jnp.einsum("bqk,bke->bqe", pw.astype(bf16), v.astype(bf16),
                                preferred_element_type=f32))
    cat = jnp.concatenate(heads, axis=-1)
    w = mm(cat, p["wo"]) + p["bo"][0]
    y = _layernorm(xn + w, p["ln2_g"][0], p["ln2_b"][0])
    h1 = jnp.maximum(mm(y, p["w1"]) + p["b1"][0], 0.0)
    return mm(h1, p["w2"]) + p["b2"][0] + y


# -----------------------------------------------------------------------------
# Deterministic parameter construction (weights stored (in, out); Wqkv fused,
# Wo plain (d, d); MXU weights in bf16, LayerNorm params & biases in f32).
# -----------------------------------------------------------------------------
def init_params(key, d, n_head, d_ff):
    keys = iter(jax.random.split(key, 8))
    init = lambda shape: 0.02 * jax.random.normal(next(keys), shape, jnp.float32)
    return {
        "ln1_g": jnp.ones((1, d), jnp.float32),
        "ln1_b": jnp.zeros((1, d), jnp.float32),
        "ln2_g": jnp.ones((1, d), jnp.float32),
        "ln2_b": jnp.zeros((1, d), jnp.float32),
        # columns [0:d] = per-head Q weights, [d:2d] = K, [2d:3d] = V
        "wqkv": init((d, 3 * d)).astype(jnp.bfloat16),
        "wo": init((d, d)).astype(jnp.bfloat16),
        "bo": jnp.zeros((1, d), jnp.float32),
        "w1": init((d, d_ff)).astype(jnp.bfloat16),
        "b1": jnp.zeros((1, d_ff), jnp.float32),
        "w2": init((d_ff, d)).astype(jnp.bfloat16),
        "b2": jnp.zeros((1, d), jnp.float32),
    }


if __name__ == "__main__":
    # small, TPU-aligned config: B=2, T=128, d=128 (4 heads of 32), d_ff=256
    B, T, d, n_head, d_ff = 2, 128, 128, 4, 256

    key = jax.random.PRNGKey(0)
    k_param, k_x = jax.random.split(key)
    params = init_params(k_param, d, n_head, d_ff)
    x = jax.random.normal(k_x, (B, T, d), jnp.float32)

    bpp, sem, bf16_exp = _tpu_schedule(B)

    def run(bpp_, sem_, bf16_exp_):
        o = block_apply(x, params, n_head=n_head, bpp=bpp_,
                        semantics=sem_, bf16_exp=bf16_exp_)
        jax.block_until_ready(o)
        return o

    try:
        out = run(bpp, sem, bf16_exp)
    except Exception:
        # Conservative fallback: identical math, generic scheduling/precision.
        out = run(1, "parallel", False)

    ref = block_reference(x, params, n_head)
    assert out.shape == (B, T, d)
    assert jnp.all(jnp.isfinite(out))
    max_err = float(jnp.max(jnp.abs(out - ref)))
    assert max_err < 5e-2, f"max abs error vs reference: {max_err}"
    print("KERNEL_OK")
</pallas_src>

<mosaic_0001>
module attributes {stable_mosaic.version = 11 : i64} {
  func.func @block_kernel(%arg0: i32, %arg1: memref<1x128x128xf32, #tpu.memory_space<vmem>>, %arg2: memref<1x128xf32, #tpu.memory_space<vmem>>, %arg3: memref<1x128xf32, #tpu.memory_space<vmem>>, %arg4: memref<128x384xbf16, #tpu.memory_space<vmem>>, %arg5: memref<128x128xbf16, #tpu.memory_space<vmem>>, %arg6: memref<1x128xf32, #tpu.memory_space<vmem>>, %arg7: memref<1x128xf32, #tpu.memory_space<vmem>>, %arg8: memref<1x128xf32, #tpu.memory_space<vmem>>, %arg9: memref<128x256xbf16, #tpu.memory_space<vmem>>, %arg10: memref<1x256xf32, #tpu.memory_space<vmem>>, %arg11: memref<256x128xbf16, #tpu.memory_space<vmem>>, %arg12: memref<1x128xf32, #tpu.memory_space<vmem>>, %arg13: memref<1x128x128xf32, #tpu.memory_space<vmem>>) attributes {dimension_semantics = [#tpu.dimension_semantics<parallel>], iteration_bounds = array<i64: 2>, scalar_prefetch = 0 : i64, scratch_operands = 0 : i64, tpu.core_type = #tpu.core_type<tc>, window_params = [{transform_indices = @transform_0, window_bounds = array<i64: 1, 128, 128>}, {pipeline_mode = #tpu.pipeline_mode<synchronous>, transform_indices = @transform_1, window_bounds = array<i64: 1, 128>}, {pipeline_mode = #tpu.pipeline_mode<synchronous>, transform_indices = @transform_2, window_bounds = array<i64: 1, 128>}, {pipeline_mode = #tpu.pipeline_mode<synchronous>, transform_indices = @transform_3, window_bounds = array<i64: 128, 384>}, {pipeline_mode = #tpu.pipeline_mode<synchronous>, transform_indices = @transform_4, window_bounds = array<i64: 128, 128>}, {pipeline_mode = #tpu.pipeline_mode<synchronous>, transform_indices = @transform_5, window_bounds = array<i64: 1, 128>}, {pipeline_mode = #tpu.pipeline_mode<synchronous>, transform_indices = @transform_6, window_bounds = array<i64: 1, 128>}, {pipeline_mode = #tpu.pipeline_mode<synchronous>, transform_indices = @transform_7, window_bounds = array<i64: 1, 128>}, {pipeline_mode = #tpu.pipeline_mode<synchronous>, transform_indices = @transform_8, window_bounds = array<i64: 128, 256>}, {pipeline_mode = #tpu.pipeline_mode<synchronous>, transform_indices = @transform_9, window_bounds = array<i64: 1, 256>}, {pipeline_mode = #tpu.pipeline_mode<synchronous>, transform_indices = @transform_10, window_bounds = array<i64: 256, 128>}, {pipeline_mode = #tpu.pipeline_mode<synchronous>, transform_indices = @transform_11, window_bounds = array<i64: 1, 128>}, {transform_indices = @transform_12, window_bounds = array<i64: 1, 128, 128>}]} {
    %c0 = arith.constant 0 : index
    %c0_0 = arith.constant 0 : index
    %c0_1 = arith.constant 0 : index
    %0 = vector.load %arg1[%c0, %c0_0, %c0_1] : memref<1x128x128xf32, #tpu.memory_space<vmem>>, vector<1x128x128xf32>
    %c0_2 = arith.constant 0 : index
    %c0_3 = arith.constant 0 : index
    %1 = vector.load %arg2[%c0_2, %c0_3] : memref<1x128xf32, #tpu.memory_space<vmem>>, vector<1x128xf32>
    %2 = vector.shape_cast %1 : vector<1x128xf32> to vector<128xf32>
    %c0_4 = arith.constant 0 : index
    %c0_5 = arith.constant 0 : index
    %3 = vector.load %arg3[%c0_4, %c0_5] : memref<1x128xf32, #tpu.memory_space<vmem>>, vector<1x128xf32>
    %4 = vector.shape_cast %3 : vector<1x128xf32> to vector<128xf32>
    %cst = arith.constant dense<0.000000e+00> : vector<1x128xf32>
    %5 = vector.multi_reduction <add>, %0, %cst [2] : vector<1x128x128xf32> to vector<1x128xf32>
    %6 = vector.shape_cast %5 : vector<1x128xf32> to vector<1x128x1xf32>
    %cst_6 = arith.constant 1.280000e+02 : f32
    %7 = vector.broadcast %cst_6 : f32 to vector<1x128x1xf32>
    %8 = arith.divf %6, %7 : vector<1x128x1xf32>
    %9 = vector.broadcast %8 : vector<1x128x1xf32> to vector<1x128x128xf32>
    %10 = arith.subf %0, %9 : vector<1x128x128xf32>
    %11 = arith.mulf %10, %10 : vector<1x128x128xf32>
    %cst_7 = arith.constant dense<0.000000e+00> : vector<1x128xf32>
    %12 = vector.multi_reduction <add>, %11, %cst_7 [2] : vector<1x128x128xf32> to vector<1x128xf32>
    %13 = vector.shape_cast %12 : vector<1x128xf32> to vector<1x128x1xf32>
    %cst_8 = arith.constant 1.280000e+02 : f32
    %14 = vector.broadcast %cst_8 : f32 to vector<1x128x1xf32>
    %15 = arith.divf %13, %14 : vector<1x128x1xf32>
    %16 = vector.broadcast %8 : vector<1x128x1xf32> to vector<1x128x128xf32>
    %17 = arith.subf %0, %16 : vector<1x128x128xf32>
    %cst_9 = arith.constant 9.99999974E-6 : f32
    %18 = vector.broadcast %cst_9 : f32 to vector<1x128x1xf32>
    %19 = arith.addf %15, %18 : vector<1x128x1xf32>
    %20 = math.rsqrt %19 : vector<1x128x1xf32>
    %21 = vector.broadcast %20 : vector<1x128x1xf32> to vector<1x128x128xf32>
    %22 = arith.mulf %17, %21 : vector<1x128x128xf32>
    %23 = vector.shape_cast %2 : vector<128xf32> to vector<1x1x128xf32>
    %24 = vector.broadcast %23 : vector<1x1x128xf32> to vector<1x128x128xf32>
    %25 = arith.mulf %22, %24 : vector<1x128x128xf32>
    %26 = vector.shape_cast %4 : vector<128xf32> to vector<1x1x128xf32>
    %27 = vector.broadcast %26 : vector<1x1x128xf32> to vector<1x128x128xf32>
    %28 = arith.addf %25, %27 : vector<1x128x128xf32>
    %29 = vector.shape_cast %28 : vector<1x128x128xf32> to vector<128x128xf32>
    %30 = arith.truncf %29 : vector<128x128xf32> to vector<128x128xbf16>
    %c0_10 = arith.constant 0 : index
    %c0_11 = arith.constant 0 : index
    %31 = vector.load %arg4[%c0_10, %c0_11] : memref<128x384xbf16, #tpu.memory_space<vmem>>, vector<128x384xbf16>
    %cst_12 = arith.constant dense<0.000000e+00> : vector<128x384xf32>
    %32 = tpu.matmul %30, %31, %cst_12 {dimension_numbers = #tpu.dot_dimension_numbers<[1], [0], [0], [1], [0, 0, 1, 1], [], []>} : vector<128x128xbf16>, vector<128x384xbf16>, vector<128x384xf32> -> vector<128x384xf32>
    %33 = arith.truncf %32 : vector<128x384xf32> to vector<128x384xbf16>
    %34 = tpu.iota {dimensions = array<i32: 0>} : vector<128x128xi32>
    %35 = tpu.iota {dimensions = array<i32: 1>} : vector<128x128xi32>
    %36 = arith.cmpi sge, %34, %35 : vector<128x128xi32>
    %37 = vector.extract_strided_slice %33 {offsets = [0, 0], sizes = [128, 32], strides = [1, 1]} : vector<128x384xbf16> to vector<128x32xbf16>
    %38 = vector.extract_strided_slice %33 {offsets = [0, 128], sizes = [128, 32], strides = [1, 1]} : vector<128x384xbf16> to vector<128x32xbf16>
    %39 = vector.extract_strided_slice %33 {offsets = [0, 256], sizes = [128, 32], strides = [1, 1]} : vector<128x384xbf16> to vector<128x32xbf16>
    %cst_13 = arith.constant dense<0.000000e+00> : vector<128x128xf32>
    %40 = tpu.matmul %37, %38, %cst_13 {dimension_numbers = #tpu.dot_dimension_numbers<[1], [1], [0], [0], [0, 0, 1, 0], [], []>} : vector<128x32xbf16>, vector<128x32xbf16>, vector<128x128xf32> -> vector<128x128xf32>
    %cst_14 = arith.constant 0.0883883461 : f32
    %41 = vector.broadcast %cst_14 : f32 to vector<128x128xf32>
    %42 = arith.mulf %40, %41 : vector<128x128xf32>
    %cst_15 = arith.constant -1.000000e+30 : f32
    %43 = vector.broadcast %cst_15 : f32 to vector<128x128xf32>
    %44 = arith.select %36, %42, %43 : vector<128x128xi1>, vector<128x128xf32>
    %cst_16 = arith.constant dense<0xFF800000> : vector<128xf32>
    %45 = vector.multi_reduction <maximumf>, %44, %cst_16 [1] : vector<128x128xf32> to vector<128xf32>
    %46 = vector.shape_cast %45 : vector<128xf32> to vector<128x1xf32>
    %47 = vector.broadcast %46 : vector<128x1xf32> to vector<128x128xf32>
    %48 = arith.subf %44, %47 : vector<128x128xf32>
    %49 = math.exp %48 : vector<128x128xf32>
    %cst_17 = arith.constant dense<0.000000e+00> : vector<128xf32>
    %50 = vector.multi_reduction <add>, %49, %cst_17 [1] : vector<128x128xf32> to vector<128xf32>
    %51 = vector.shape_cast %50 : vector<128xf32> to vector<128x1xf32>
    %52 = arith.truncf %49 : vector<128x128xf32> to vector<128x128xbf16>
    %53 = tpu.reciprocal %51 {approx = true} : vector<128x1xf32> -> vector<128x1xf32>
    %cst_18 = arith.constant dense<0.000000e+00> : vector<128x32xf32>
    %54 = tpu.matmul %52, %39, %cst_18 {dimension_numbers = #tpu.dot_dimension_numbers<[1], [0], [0], [1], [0, 0, 1, 1], [], []>} : vector<128x128xbf16>, vector<128x32xbf16>, vector<128x32xf32> -> vector<128x32xf32>
    %55 = vector.broadcast %53 : vector<128x1xf32> to vector<128x32xf32>
    %56 = arith.mulf %54, %55 : vector<128x32xf32>
    %57 = vector.extract_strided_slice %33 {offsets = [0, 32], sizes = [128, 32], strides = [1, 1]} : vector<128x384xbf16> to vector<128x32xbf16>
    %58 = vector.extract_strided_slice %33 {offsets = [0, 160], sizes = [128, 32], strides = [1, 1]} : vector<128x384xbf16> to vector<128x32xbf16>
    %59 = vector.extract_strided_slice %33 {offsets = [0, 288], sizes = [128, 32], strides = [1, 1]} : vector<128x384xbf16> to vector<128x32xbf16>
    %cst_19 = arith.constant dense<0.000000e+00> : vector<128x128xf32>
    %60 = tpu.matmul %57, %58, %cst_19 {dimension_numbers = #tpu.dot_dimension_numbers<[1], [1], [0], [0], [0, 0, 1, 0], [], []>} : vector<128x32xbf16>, vector<128x32xbf16>, vector<128x128xf32> -> vector<128x128xf32>
    %cst_20 = arith.constant 0.0883883461 : f32
    %61 = vector.broadcast %cst_20 : f32 to vector<128x128xf32>
    %62 = arith.mulf %60, %61 : vector<128x128xf32>
    %cst_21 = arith.constant -1.000000e+30 : f32
    %63 = vector.broadcast %cst_21 : f32 to vector<128x128xf32>
    %64 = arith.select %36, %62, %63 : vector<128x128xi1>, vector<128x128xf32>
    %cst_22 = arith.constant dense<0xFF800000> : vector<128xf32>
    %65 = vector.multi_reduction <maximumf>, %64, %cst_22 [1] : vector<128x128xf32> to vector<128xf32>
    %66 = vector.shape_cast %65 : vector<128xf32> to vector<128x1xf32>
    %67 = vector.broadcast %66 : vector<128x1xf32> to vector<128x128xf32>
    %68 = arith.subf %64, %67 : vector<128x128xf32>
    %69 = math.exp %68 : vector<128x128xf32>
    %cst_23 = arith.constant dense<0.000000e+00> : vector<128xf32>
    %70 = vector.multi_reduction <add>, %69, %cst_23 [1] : vector<128x128xf32> to vector<128xf32>
    %71 = vector.shape_cast %70 : vector<128xf32> to vector<128x1xf32>
    %72 = arith.truncf %69 : vector<128x128xf32> to vector<128x128xbf16>
    %73 = tpu.reciprocal %71 {approx = true} : vector<128x1xf32> -> vector<128x1xf32>
    %cst_24 = arith.constant dense<0.000000e+00> : vector<128x32xf32>
    %74 = tpu.matmul %72, %59, %cst_24 {dimension_numbers = #tpu.dot_dimension_numbers<[1], [0], [0], [1], [0, 0, 1, 1], [], []>} : vector<128x128xbf16>, vector<128x32xbf16>, vector<128x32xf32> -> vector<128x32xf32>
    %75 = vector.broadcast %73 : vector<128x1xf32> to vector<128x32xf32>
    %76 = arith.mulf %74, %75 : vector<128x32xf32>
    %77 = vector.extract_strided_slice %33 {offsets = [0, 64], sizes = [128, 32], strides = [1, 1]} : vector<128x384xbf16> to vector<128x32xbf16>
    %78 = vector.extract_strided_slice %33 {offsets = [0, 192], sizes = [128, 32], strides = [1, 1]} : vector<128x384xbf16> to vector<128x32xbf16>
    %79 = vector.extract_strided_slice %33 {offsets = [0, 320], sizes = [128, 32], strides = [1, 1]} : vector<128x384xbf16> to vector<128x32xbf16>
    %cst_25 = arith.constant dense<0.000000e+00> : vector<128x128xf32>
    %80 = tpu.matmul %77, %78, %cst_25 {dimension_numbers = #tpu.dot_dimension_numbers<[1], [1], [0], [0], [0, 0, 1, 0], [], []>} : vector<128x32xbf16>, vector<128x32xbf16>, vector<128x128xf32> -> vector<128x128xf32>
    %cst_26 = arith.constant 0.0883883461 : f32
    %81 = vector.broadcast %cst_26 : f32 to vector<128x128xf32>
    %82 = arith.mulf %80, %81 : vector<128x128xf32>
    %cst_27 = arith.constant -1.000000e+30 : f32
    %83 = vector.broadcast %cst_27 : f32 to vector<128x128xf32>
    %84 = arith.select %36, %82, %83 : vector<128x128xi1>, vector<128x128xf32>
    %cst_28 = arith.constant dense<0xFF800000> : vector<128xf32>
    %85 = vector.multi_reduction <maximumf>, %84, %cst_28 [1] : vector<128x128xf32> to vector<128xf32>
    %86 = vector.shape_cast %85 : vector<128xf32> to vector<128x1xf32>
    %87 = vector.broadcast %86 : vector<128x1xf32> to vector<128x128xf32>
    %88 = arith.subf %84, %87 : vector<128x128xf32>
    %89 = math.exp %88 : vector<128x128xf32>
    %cst_29 = arith.constant dense<0.000000e+00> : vector<128xf32>
    %90 = vector.multi_reduction <add>, %89, %cst_29 [1] : vector<128x128xf32> to vector<128xf32>
    %91 = vector.shape_cast %90 : vector<128xf32> to vector<128x1xf32>
    %92 = arith.truncf %89 : vector<128x128xf32> to vector<128x128xbf16>
    %93 = tpu.reciprocal %91 {approx = true} : vector<128x1xf32> -> vector<128x1xf32>
    %cst_30 = arith.constant dense<0.000000e+00> : vector<128x32xf32>
    %94 = tpu.matmul %92, %79, %cst_30 {dimension_numbers = #tpu.dot_dimension_numbers<[1], [0], [0], [1], [0, 0, 1, 1], [], []>} : vector<128x128xbf16>, vector<128x32xbf16>, vector<128x32xf32> -> vector<128x32xf32>
    %95 = vector.broadcast %93 : vector<128x1xf32> to vector<128x32xf32>
    %96 = arith.mulf %94, %95 : vector<128x32xf32>
    %97 = vector.extract_strided_slice %33 {offsets = [0, 96], sizes = [128, 32], strides = [1, 1]} : vector<128x384xbf16> to vector<128x32xbf16>
    %98 = vector.extract_strided_slice %33 {offsets = [0, 224], sizes = [128, 32], strides = [1, 1]} : vector<128x384xbf16> to vector<128x32xbf16>
    %99 = vector.extract_strided_slice %33 {offsets = [0, 352], sizes = [128, 32], strides = [1, 1]} : vector<128x384xbf16> to vector<128x32xbf16>
    %cst_31 = arith.constant dense<0.000000e+00> : vector<128x128xf32>
    %100 = tpu.matmul %97, %98, %cst_31 {dimension_numbers = #tpu.dot_dimension_numbers<[1], [1], [0], [0], [0, 0, 1, 0], [], []>} : vector<128x32xbf16>, vector<128x32xbf16>, vector<128x128xf32> -> vector<128x128xf32>
    %cst_32 = arith.constant 0.0883883461 : f32
    %101 = vector.broadcast %cst_32 : f32 to vector<128x128xf32>
    %102 = arith.mulf %100, %101 : vector<128x128xf32>
    %cst_33 = arith.constant -1.000000e+30 : f32
    %103 = vector.broadcast %cst_33 : f32 to vector<128x128xf32>
    %104 = arith.select %36, %102, %103 : vector<128x128xi1>, vector<128x128xf32>
    %cst_34 = arith.constant dense<0xFF800000> : vector<128xf32>
    %105 = vector.multi_reduction <maximumf>, %104, %cst_34 [1] : vector<128x128xf32> to vector<128xf32>
    %106 = vector.shape_cast %105 : vector<128xf32> to vector<128x1xf32>
    %107 = vector.broadcast %106 : vector<128x1xf32> to vector<128x128xf32>
    %108 = arith.subf %104, %107 : vector<128x128xf32>
    %109 = math.exp %108 : vector<128x128xf32>
    %cst_35 = arith.constant dense<0.000000e+00> : vector<128xf32>
    %110 = vector.multi_reduction <add>, %109, %cst_35 [1] : vector<128x128xf32> to vector<128xf32>
    %111 = vector.shape_cast %110 : vector<128xf32> to vector<128x1xf32>
    %112 = arith.truncf %109 : vector<128x128xf32> to vector<128x128xbf16>
    %113 = tpu.reciprocal %111 {approx = true} : vector<128x1xf32> -> vector<128x1xf32>
    %cst_36 = arith.constant dense<0.000000e+00> : vector<128x32xf32>
    %114 = tpu.matmul %112, %99, %cst_36 {dimension_numbers = #tpu.dot_dimension_numbers<[1], [0], [0], [1], [0, 0, 1, 1], [], []>} : vector<128x128xbf16>, vector<128x32xbf16>, vector<128x32xf32> -> vector<128x32xf32>
    %115 = vector.broadcast %113 : vector<128x1xf32> to vector<128x32xf32>
    %116 = arith.mulf %114, %115 : vector<128x32xf32>
    %117 = tpu.concatenate %56, %76, %96, %116 in 1 : vector<128x32xf32>, vector<128x32xf32>, vector<128x32xf32>, vector<128x32xf32> -> vector<128x128xf32>
    %118 = arith.truncf %117 : vector<128x128xf32> to vector<128x128xbf16>
    %c0_37 = arith.constant 0 : index
    %c0_38 = arith.constant 0 : index
    %119 = vector.load %arg5[%c0_37, %c0_38] : memref<128x128xbf16, #tpu.memory_space<vmem>>, vector<128x128xbf16>
    %cst_39 = arith.constant dense<0.000000e+00> : vector<128x128xf32>
    %120 = tpu.matmul %118, %119, %cst_39 {dimension_numbers = #tpu.dot_dimension_numbers<[1], [0], [0], [1], [0, 0, 1, 1], [], []>} : vector<128x128xbf16>, vector<128x128xbf16>, vector<128x128xf32> -> vector<128x128xf32>
    %c0_40 = arith.constant 0 : index
    %c0_41 = arith.constant 0 : index
    %121 = vector.load %arg6[%c0_40, %c0_41] : memref<1x128xf32, #tpu.memory_space<vmem>>, vector<1x128xf32>
    %122 = vector.shape_cast %121 : vector<1x128xf32> to vector<128xf32>
    %123 = vector.shape_cast %122 : vector<128xf32> to vector<1x128xf32>
    %124 = vector.broadcast %123 : vector<1x128xf32> to vector<128x128xf32>
    %125 = arith.addf %120, %124 : vector<128x128xf32>
    %126 = arith.addf %29, %125 : vector<128x128xf32>
    %c0_42 = arith.constant 0 : index
    %c0_43 = arith.constant 0 : index
    %127 = vector.load %arg7[%c0_42, %c0_43] : memref<1x128xf32, #tpu.memory_space<vmem>>, vector<1x128xf32>
    %128 = vector.shape_cast %127 : vector<1x128xf32> to vector<128xf32>
    %c0_44 = arith.constant 0 : index
    %c0_45 = arith.constant 0 : index
    %129 = vector.load %arg8[%c0_44, %c0_45] : memref<1x128xf32, #tpu.memory_space<vmem>>, vector<1x128xf32>
    %130 = vector.shape_cast %129 : vector<1x128xf32> to vector<128xf32>
    %cst_46 = arith.constant dense<0.000000e+00> : vector<128xf32>
    %131 = vector.multi_reduction <add>, %126, %cst_46 [1] : vector<128x128xf32> to vector<128xf32>
    %132 = vector.shape_cast %131 : vector<128xf32> to vector<128x1xf32>
    %cst_47 = arith.constant 1.280000e+02 : f32
    %133 = vector.broadcast %cst_47 : f32 to vector<128x1xf32>
    %134 = arith.divf %132, %133 : vector<128x1xf32>
    %135 = vector.broadcast %134 : vector<128x1xf32> to vector<128x128xf32>
    %136 = arith.subf %126, %135 : vector<128x128xf32>
    %137 = arith.mulf %136, %136 : vector<128x128xf32>
    %cst_48 = arith.constant dense<0.000000e+00> : vector<128xf32>
    %138 = vector.multi_reduction <add>, %137, %cst_48 [1] : vector<128x128xf32> to vector<128xf32>
    %139 = vector.shape_cast %138 : vector<128xf32> to vector<128x1xf32>
    %cst_49 = arith.constant 1.280000e+02 : f32
    %140 = vector.broadcast %cst_49 : f32 to vector<128x1xf32>
    %141 = arith.divf %139, %140 : vector<128x1xf32>
    %142 = vector.broadcast %134 : vector<128x1xf32> to vector<128x128xf32>
    %143 = arith.subf %126, %142 : vector<128x128xf32>
    %cst_50 = arith.constant 9.99999974E-6 : f32
    %144 = vector.broadcast %cst_50 : f32 to vector<128x1xf32>
    %145 = arith.addf %141, %144 : vector<128x1xf32>
    %146 = math.rsqrt %145 : vector<128x1xf32>
    %147 = vector.broadcast %146 : vector<128x1xf32> to vector<128x128xf32>
    %148 = arith.mulf %143, %147 : vector<128x128xf32>
    %149 = vector.shape_cast %128 : vector<128xf32> to vector<1x128xf32>
    %150 = vector.broadcast %149 : vector<1x128xf32> to vector<128x128xf32>
    %151 = arith.mulf %148, %150 : vector<128x128xf32>
    %152 = vector.shape_cast %130 : vector<128xf32> to vector<1x128xf32>
    %153 = vector.broadcast %152 : vector<1x128xf32> to vector<128x128xf32>
    %154 = arith.addf %151, %153 : vector<128x128xf32>
    %155 = arith.truncf %154 : vector<128x128xf32> to vector<128x128xbf16>
    %c0_51 = arith.constant 0 : index
    %c0_52 = arith.constant 0 : index
    %156 = vector.load %arg9[%c0_51, %c0_52] : memref<128x256xbf16, #tpu.memory_space<vmem>>, vector<128x256xbf16>
    %cst_53 = arith.constant dense<0.000000e+00> : vector<128x256xf32>
    %157 = tpu.matmul %155, %156, %cst_53 {dimension_numbers = #tpu.dot_dimension_numbers<[1], [0], [0], [1], [0, 0, 1, 1], [], []>} : vector<128x128xbf16>, vector<128x256xbf16>, vector<128x256xf32> -> vector<128x256xf32>
    %c0_54 = arith.constant 0 : index
    %c0_55 = arith.constant 0 : index
    %158 = vector.load %arg10[%c0_54, %c0_55] : memref<1x256xf32, #tpu.memory_space<vmem>>, vector<1x256xf32>
    %159 = vector.shape_cast %158 : vector<1x256xf32> to vector<256xf32>
    %160 = vector.shape_cast %159 : vector<256xf32> to vector<1x256xf32>
    %161 = vector.broadcast %160 : vector<1x256xf32> to vector<128x256xf32>
    %162 = arith.addf %157, %161 : vector<128x256xf32>
    %cst_56 = arith.constant 0.000000e+00 : f32
    %163 = vector.broadcast %cst_56 : f32 to vector<128x256xf32>
    %164 = arith.maximumf %162, %163 : vector<128x256xf32>
    %165 = arith.truncf %164 : vector<128x256xf32> to vector<128x256xbf16>
    %c0_57 = arith.constant 0 : index
    %c0_58 = arith.constant 0 : index
    %166 = vector.load %arg11[%c0_57, %c0_58] : memref<256x128xbf16, #tpu.memory_space<vmem>>, vector<256x128xbf16>
    %cst_59 = arith.constant dense<0.000000e+00> : vector<128x128xf32>
    %167 = tpu.matmul %165, %166, %cst_59 {dimension_numbers = #tpu.dot_dimension_numbers<[1], [0], [0], [1], [0, 0, 1, 1], [], []>} : vector<128x256xbf16>, vector<256x128xbf16>, vector<128x128xf32> -> vector<128x128xf32>
    %c0_60 = arith.constant 0 : index
    %c0_61 = arith.constant 0 : index
    %168 = vector.load %arg12[%c0_60, %c0_61] : memref<1x128xf32, #tpu.memory_space<vmem>>, vector<1x128xf32>
    %169 = vector.shape_cast %168 : vector<1x128xf32> to vector<128xf32>
    %170 = vector.shape_cast %169 : vector<128xf32> to vector<1x128xf32>
    %171 = vector.broadcast %170 : vector<1x128xf32> to vector<128x128xf32>
    %172 = arith.addf %167, %171 : vector<128x128xf32>
    %173 = arith.addf %172, %154 : vector<128x128xf32>
    %174 = vector.shape_cast %173 : vector<128x128xf32> to vector<1x128x128xf32>
    %c0_62 = arith.constant 0 : index
    %c0_63 = arith.constant 0 : index
    %c0_64 = arith.constant 0 : index
    %175 = vector.load %arg13[%c0_62, %c0_63, %c0_64] : memref<1x128x128xf32, #tpu.memory_space<vmem>>, vector<1x128x128xf32>
    tpu.vector_store %arg13[%c0_62, %c0_63, %c0_64], %174 {strides = array<i32>} : memref<1x128x128xf32, #tpu.memory_space<vmem>>, vector<1x128x128xf32>,
    return
  }
  func.func @transform_0(%arg0: i32) -> (i32, i32, i32) {
    %c0_i32 = arith.constant 0 : i32
    %c0_i32_0 = arith.constant 0 : i32
    %c0_i32_1 = arith.constant 0 : i32
    return %arg0, %c0_i32, %c0_i32_0 : i32, i32, i32
  }
  func.func @transform_1(%arg0: i32) -> (i32, i32) {
    %c0_i32 = arith.constant 0 : i32
    %c0_i32_0 = arith.constant 0 : i32
    %c0_i32_1 = arith.constant 0 : i32
    return %c0_i32, %c0_i32_0 : i32, i32
  }
  func.func @transform_2(%arg0: i32) -> (i32, i32) {
    %c0_i32 = arith.constant 0 : i32
    %c0_i32_0 = arith.constant 0 : i32
    %c0_i32_1 = arith.constant 0 : i32
    return %c0_i32, %c0_i32_0 : i32, i32
  }
  func.func @transform_3(%arg0: i32) -> (i32, i32) {
    %c0_i32 = arith.constant 0 : i32
    %c0_i32_0 = arith.constant 0 : i32
    %c0_i32_1 = arith.constant 0 : i32
    return %c0_i32, %c0_i32_0 : i32, i32
  }
  func.func @transform_4(%arg0: i32) -> (i32, i32) {
    %c0_i32 = arith.constant 0 : i32
    %c0_i32_0 = arith.constant 0 : i32
    %c0_i32_1 = arith.constant 0 : i32
    return %c0_i32, %c0_i32_0 : i32, i32
  }
  func.func @transform_5(%arg0: i32) -> (i32, i32) {
    %c0_i32 = arith.constant 0 : i32
    %c0_i32_0 = arith.constant 0 : i32
    %c0_i32_1 = arith.constant 0 : i32
    return %c0_i32, %c0_i32_0 : i32, i32
  }
  func.func @transform_6(%arg0: i32) -> (i32, i32) {
    %c0_i32 = arith.constant 0 : i32
    %c0_i32_0 = arith.constant 0 : i32
    %c0_i32_1 = arith.constant 0 : i32
    return %c0_i32, %c0_i32_0 : i32, i32
  }
  func.func @transform_7(%arg0: i32) -> (i32, i32) {
    %c0_i32 = arith.constant 0 : i32
    %c0_i32_0 = arith.constant 0 : i32
    %c0_i32_1 = arith.constant 0 : i32
    return %c0_i32, %c0_i32_0 : i32, i32
  }
  func.func @transform_8(%arg0: i32) -> (i32, i32) {
    %c0_i32 = arith.constant 0 : i32
    %c0_i32_0 = arith.constant 0 : i32
    %c0_i32_1 = arith.constant 0 : i32
    return %c0_i32, %c0_i32_0 : i32, i32
  }
  func.func @transform_9(%arg0: i32) -> (i32, i32) {
    %c0_i32 = arith.constant 0 : i32
    %c0_i32_0 = arith.constant 0 : i32
    %c0_i32_1 = arith.constant 0 : i32
    return %c0_i32, %c0_i32_0 : i32, i32
  }
  func.func @transform_10(%arg0: i32) -> (i32, i32) {
    %c0_i32 = arith.constant 0 : i32
    %c0_i32_0 = arith.constant 0 : i32
    %c0_i32_1 = arith.constant 0 : i32
    return %c0_i32, %c0_i32_0 : i32, i32
  }
  func.func @transform_11(%arg0: i32) -> (i32, i32) {
    %c0_i32 = arith.constant 0 : i32
    %c0_i32_0 = arith.constant 0 : i32
    %c0_i32_1 = arith.constant 0 : i32
    return %c0_i32, %c0_i32_0 : i32, i32
  }
  func.func @transform_12(%arg0: i32) -> (i32, i32, i32) {
    %c0_i32 = arith.constant 0 : i32
    %c0_i32_0 = arith.constant 0 : i32
    %c0_i32_1 = arith.constant 0 : i32
    return %arg0, %c0_i32, %c0_i32_0 : i32, i32, i32
  }
}

</mosaic_0001>

<llo_original>
// kernel: block_apply.1
$region0: #{block_apply.1}
  #allocation0 [shape = 'u32[]', space=smem, size = 0x4, offset = 0x4, fixed_abs, tag = 'smem constant byte address 0x4 - core index']
  #allocation1 [shape = 'u32[144,128]{1,0:T(1,128)}', space=vmem, size = 0x12000, scoped, tag = 'internal scratch']
  %s0 = inlined_call_operand.hbm [shape: f32[2,128,128], index: 0, kind: input, shape index: {}]
  %s1 = inlined_call_operand.vmem [shape: f32[1,128], index: 1, kind: input, shape index: {}]
  %s2 = inlined_call_operand.vmem [shape: f32[1,128], index: 2, kind: input, shape index: {}]
  %s3 = inlined_call_operand.hbm [shape: bf16[128,384], index: 3, kind: input, shape index: {}]
  %s4 = inlined_call_operand.hbm [shape: bf16[128,128], index: 4, kind: input, shape index: {}]
  %s5 = inlined_call_operand.vmem [shape: f32[1,128], index: 5, kind: input, shape index: {}]
  %s6 = inlined_call_operand.vmem [shape: f32[1,128], index: 6, kind: input, shape index: {}]
  %s7 = inlined_call_operand.vmem [shape: f32[1,128], index: 7, kind: input, shape index: {}]
  %s8 = inlined_call_operand.hbm [shape: bf16[128,256], index: 8, kind: input, shape index: {}]
  %s9 = inlined_call_operand.vmem [shape: f32[1,256], index: 9, kind: input, shape index: {}]
  %s10 = inlined_call_operand.hbm [shape: bf16[256,128], index: 10, kind: input, shape index: {}]
  %s11 = inlined_call_operand.hbm [shape: f32[1,128], index: 11, kind: input, shape index: {}]
  %s12 = inlined_call_operand.hbm [shape: f32[2,128,128], index: 12, kind: output, shape index: {}]
  %s13 = sld [smem:[#allocation0]]
  $region105: #{block_apply.1} parent=0
    _
  %s15 = ssub.s32 1, %s13
  %s16 = scalar_select 0, %s15, %s13
  $region1: #{block_apply.1} parent=0
    #allocation2 [shape = 'u8[131072]{0}', space=vmem, size = 0x20000, scoped, tag = 'input window, operand 0']
    #allocation3 [shape = 's32[2]{0}', space=sflag, size = 0x8, scoped, tag = 'scoped memory for block_apply.1']
    #allocation4 [shape = 's32[2]{0}', space=sflag, size = 0x8, scoped, tag = 'scoped memory for block_apply.1']
    #allocation5 [shape = 'u8[98304]{0}', space=vmem, size = 0x18000, scoped, tag = 'input window, operand 3, single buffered']
    #allocation6 [shape = 's32[1]{0}', space=sflag, size = 0x4, scoped, tag = 'scoped memory for block_apply.1']
    #allocation7 [shape = 'u8[32768]{0}', space=vmem, size = 0x8000, scoped, tag = 'input window, operand 4, single buffered']
    #allocation8 [shape = 'u8[65536]{0}', space=vmem, size = 0x10000, scoped, tag = 'input window, operand 8, single buffered']
    #allocation9 [shape = 's32[1]{0}', space=sflag, size = 0x4, scoped, tag = 'scoped memory for block_apply.1']
    #allocation10 [shape = 'u8[65536]{0}', space=vmem, size = 0x10000, scoped, tag = 'input window, operand 10, single buffered']
    #allocation11 [shape = 'u8[512]{0}', space=vmem, size = 0x400, scoped, tag = 'input window, operand 11, single buffered']
    #allocation12 [shape = 's32[1]{0}', space=sflag, size = 0x4, scoped, tag = 'scoped memory for block_apply.1']
    #allocation13 [shape = 'u8[131072]{0}', space=vmem, size = 0x20000, scoped, tag = 'output window, operand 0']
    %17 = vsyncpa [#allocation3], 0
    %s18 = scalar_lea.sflag [#allocation3], 1
    %19 = vsyncpa %s18, 0
    %20 = vsyncpa [#allocation6], 0
    %21 = vsyncpa [#allocation9], 0
    %22 = vsyncpa [#allocation12], 0
    %23 = vsyncpa [#allocation4], 0
    %s24 = scalar_lea.sflag [#allocation4], 1
    %25 = vsyncpa %s24, 0
    loop: start=0, step=1, limit=4
    $region2: #{block_apply.1} parent=1 // loop_pre_header
      _
    $region3: #{block_apply.1} parent=1 // loop_header
      %s27 = sphi 0, %s31
      %p28 = scmp.ge.s32.totalorder %s27, 4
      %s37 = sphi 0, %s39
      %s40 = sphi 0, %s37
      %s41 = sphi 0, %s40
      %s57 = sphi 0, %s41
      %s61 = sphi 0, %s61
      %s63 = sphi 0, %s61
      %s64 = sphi 0, %s63
      %s78 = sphi 0, %s64
      %s82 = sphi 0, %s82
      %s84 = sphi 0, %s82
      %s85 = sphi 0, %s84
      %s99 = sphi 0, %s85
      %s103 = sphi 0, %s103
      %s105 = sphi 0, %s103
      %s106 = sphi 0, %s105
      %s120 = sphi 0, %s106
      %s124 = sphi 0, %s124
      %s126 = sphi 0, %s124
      %s127 = sphi 0, %s126
      %s141 = sphi 0, %s127
      %s145 = sphi 0, %s145
      %s147 = sphi 0, %s145
      %s148 = sphi 0, %s147
      %s162 = sphi 0, %s148
      %s166 = sphi 0, %s166
      %s168 = sphi 0, %s166
      %s169 = sphi 0, %s168
      %s183 = sphi 0, %s169
      %s187 = sphi 0, %s187
      %s189 = sphi 0, %s187
      %s190 = sphi 0, %s189
      %s204 = sphi 0, %s190
      %s208 = sphi 0, %s208
      %s210 = sphi 0, %s208
      %s211 = sphi 0, %s210
      %s225 = sphi 0, %s211
      %s229 = sphi 0, %s229
      %s231 = sphi 0, %s229
      %s232 = sphi 0, %s231
      %s246 = sphi 0, %s232
      %s250 = sphi 0, %s250
      %s252 = sphi 0, %s250
      %s253 = sphi 0, %s252
      %s267 = sphi 0, %s253
      %s271 = sphi 0, %s271
      %s273 = sphi 0, %s271
      %s274 = sphi 0, %s273
      %s288 = sphi 0, %s274
      %s294 = sphi 0, %s296
      %s297 = sphi 0, %s294
      %s298 = sphi 0, %s297
      %s314 = sphi 0, %s298
    $region4: #{block_apply.1} parent=1 // loop_header_branch
      %30 = sbr.rel (%p28) target = $region8
    $region5: #{block_apply.1} parent=1 // loop_body
      %s32 = ssub.s32 %s27, 1
      %s33 = ssub.s32 %s27, 2
      %s34 = sadd.s32 %s27, 1
      %s35 = ssub.s32 %s27, %s34
      %p36 = scmp.eq.s32.totalorder %s35, 0
      %s38 = sadd.s32 %s37, 1
      %s39 = scalar_select %p36, %s37, %s38
      %p42 = pneg %p36
      %p43 = scmp.eq.s32.totalorder %s27, 1
      %p44 = por %p42, %p43
      %p45 = scmp.ne.s32.totalorder %s37, %s40
      %p46 = scmp.eq.s32.totalorder %s27, 0
      %p47 = por %p45, %p46
      %p48 = scmp.ne.s32.totalorder %s37, %s40
      %p49 = scmp.eq.s32.totalorder %s32, 1
      %p50 = por %p48, %p49
      %p51 = scmp.ne.s32.totalorder %s40, %s41
      %p52 = scmp.eq.s32.totalorder %s32, 0
      %p53 = por %p51, %p52
      %p54 = scmp.ne.s32.totalorder %s40, %s41
      %p55 = scmp.eq.s32.totalorder %s33, 1
      %p56 = por %p54, %p55
      %p58 = scmp.ne.s32.totalorder %s41, %s57
      %p59 = scmp.eq.s32.totalorder %s33, 0
      %p60 = por %p58, %p59
      %s62 = sadd.s32 %s61, 1
      %p65 = scmp.eq.s32.totalorder %s27, 1
      %p66 = scmp.ne.s32.totalorder %s61, %s63
      %p67 = scmp.eq.s32.totalorder %s27, 0
      %p68 = por %p66, %p67
      %p69 = scmp.ne.s32.totalorder %s61, %s63
      %p70 = scmp.eq.s32.totalorder %s32, 1
      %p71 = por %p69, %p70
      %p72 = scmp.ne.s32.totalorder %s63, %s64
      %p73 = scmp.eq.s32.totalorder %s32, 0
      %p74 = por %p72, %p73
      %p75 = scmp.ne.s32.totalorder %s63, %s64
      %p76 = scmp.eq.s32.totalorder %s33, 1
      %p77 = por %p75, %p76
      %p79 = scmp.ne.s32.totalorder %s64, %s78
      %p80 = scmp.eq.s32.totalorder %s33, 0
      %p81 = por %p79, %p80
      %s83 = sadd.s32 %s82, 1
      %p86 = scmp.eq.s32.totalorder %s27, 1
      %p87 = scmp.ne.s32.totalorder %s82, %s84
      %p88 = scmp.eq.s32.totalorder %s27, 0
      %p89 = por %p87, %p88
      %p90 = scmp.ne.s32.totalorder %s82, %s84
      %p91 = scmp.eq.s32.totalorder %s32, 1
      %p92 = por %p90, %p91
      %p93 = scmp.ne.s32.totalorder %s84, %s85
      %p94 = scmp.eq.s32.totalorder %s32, 0
      %p95 = por %p93, %p94
      %p96 = scmp.ne.s32.totalorder %s84, %s85
      %p97 = scmp.eq.s32.totalorder %s33, 1
      %p98 = por %p96, %p97
      %p100 = scmp.ne.s32.totalorder %s85, %s99
      %p101 = scmp.eq.s32.totalorder %s33, 0
      %p102 = por %p100, %p101
      %s104 = sadd.s32 %s103, 1
      %p107 = scmp.eq.s32.totalorder %s27, 1
      %p108 = scmp.ne.s32.totalorder %s103, %s105
      %p109 = scmp.eq.s32.totalorder %s27, 0
      %p110 = por %p108, %p109
      %p111 = scmp.ne.s32.totalorder %s103, %s105
      %p112 = scmp.eq.s32.totalorder %s32, 1
      %p113 = por %p111, %p112
      %p114 = scmp.ne.s32.totalorder %s105, %s106
      %p115 = scmp.eq.s32.totalorder %s32, 0
      %p116 = por %p114, %p115
      %p117 = scmp.ne.s32.totalorder %s105, %s106
      %p118 = scmp.eq.s32.totalorder %s33, 1
      %p119 = por %p117, %p118
      %p121 = scmp.ne.s32.totalorder %s106, %s120
      %p122 = scmp.eq.s32.totalorder %s33, 0
      %p123 = por %p121, %p122
      %s125 = sadd.s32 %s124, 1
      %p128 = scmp.eq.s32.totalorder %s27, 1
      %p129 = scmp.ne.s32.totalorder %s124, %s126
      %p130 = scmp.eq.s32.totalorder %s27, 0
      %p131 = por %p129, %p130
      %p132 = scmp.ne.s32.totalorder %s124, %s126
      %p133 = scmp.eq.s32.totalorder %s32, 1
      %p134 = por %p132, %p133
      %p135 = scmp.ne.s32.totalorder %s126, %s127
      %p136 = scmp.eq.s32.totalorder %s32, 0
      %p137 = por %p135, %p136
      %p138 = scmp.ne.s32.totalorder %s126, %s127
      %p139 = scmp.eq.s32.totalorder %s33, 1
      %p140 = por %p138, %p139
      %p142 = scmp.ne.s32.totalorder %s127, %s141
      %p143 = scmp.eq.s32.totalorder %s33, 0
      %p144 = por %p142, %p143
      %s146 = sadd.s32 %s145, 1
      %p149 = scmp.eq.s32.totalorder %s27, 1
      %p150 = scmp.ne.s32.totalorder %s145, %s147
      %p151 = scmp.eq.s32.totalorder %s27, 0
      %p152 = por %p150, %p151
      %p153 = scmp.ne.s32.totalorder %s145, %s147
      %p154 = scmp.eq.s32.totalorder %s32, 1
      %p155 = por %p153, %p154
      %p156 = scmp.ne.s32.totalorder %s147, %s148
      %p157 = scmp.eq.s32.totalorder %s32, 0
      %p158 = por %p156, %p157
      %p159 = scmp.ne.s32.totalorder %s147, %s148
      %p160 = scmp.eq.s32.totalorder %s33, 1
      %p161 = por %p159, %p160
      %p163 = scmp.ne.s32.totalorder %s148, %s162
      %p164 = scmp.eq.s32.totalorder %s33, 0
      %p165 = por %p163, %p164
      %s167 = sadd.s32 %s166, 1
      %p170 = scmp.eq.s32.totalorder %s27, 1
      %p171 = scmp.ne.s32.totalorder %s166, %s168
      %p172 = scmp.eq.s32.totalorder %s27, 0
      %p173 = por %p171, %p172
      %p174 = scmp.ne.s32.totalorder %s166, %s168
      %p175 = scmp.eq.s32.totalorder %s32, 1
      %p176 = por %p174, %p175
      %p177 = scmp.ne.s32.totalorder %s168, %s169
      %p178 = scmp.eq.s32.totalorder %s32, 0
      %p179 = por %p177, %p178
      %p180 = scmp.ne.s32.totalorder %s168, %s169
      %p181 = scmp.eq.s32.totalorder %s33, 1
      %p182 = por %p180, %p181
      %p184 = scmp.ne.s32.totalorder %s169, %s183
      %p185 = scmp.eq.s32.totalorder %s33, 0
      %p186 = por %p184, %p185
      %s188 = sadd.s32 %s187, 1
      %p191 = scmp.eq.s32.totalorder %s27, 1
      %p192 = scmp.ne.s32.totalorder %s187, %s189
      %p193 = scmp.eq.s32.totalorder %s27, 0
      %p194 = por %p192, %p193
      %p195 = scmp.ne.s32.totalorder %s187, %s189
      %p196 = scmp.eq.s32.totalorder %s32, 1
      %p197 = por %p195, %p196
      %p198 = scmp.ne.s32.totalorder %s189, %s190
      %p199 = scmp.eq.s32.totalorder %s32, 0
      %p200 = por %p198, %p199
      %p201 = scmp.ne.s32.totalorder %s189, %s190
      %p202 = scmp.eq.s32.totalorder %s33, 1
      %p203 = por %p201, %p202
      %p205 = scmp.ne.s32.totalorder %s190, %s204
      %p206 = scmp.eq.s32.totalorder %s33, 0
      %p207 = por %p205, %p206
      %s209 = sadd.s32 %s208, 1
      %p212 = scmp.eq.s32.totalorder %s27, 1
      %p213 = scmp.ne.s32.totalorder %s208, %s210
      %p214 = scmp.eq.s32.totalorder %s27, 0
      %p215 = por %p213, %p214
      %p216 = scmp.ne.s32.totalorder %s208, %s210
      %p217 = scmp.eq.s32.totalorder %s32, 1
      %p218 = por %p216, %p217
      %p219 = scmp.ne.s32.totalorder %s210, %s211
      %p220 = scmp.eq.s32.totalorder %s32, 0
      %p221 = por %p219, %p220
      %p222 = scmp.ne.s32.totalorder %s210, %s211
      %p223 = scmp.eq.s32.totalorder %s33, 1
      %p224 = por %p222, %p223
      %p226 = scmp.ne.s32.totalorder %s211, %s225
      %p227 = scmp.eq.s32.totalorder %s33, 0
      %p228 = por %p226, %p227
      %s230 = sadd.s32 %s229, 1
      %p233 = scmp.eq.s32.totalorder %s27, 1
      %p234 = scmp.ne.s32.totalorder %s229, %s231
      %p235 = scmp.eq.s32.totalorder %s27, 0
      %p236 = por %p234, %p235
      %p237 = scmp.ne.s32.totalorder %s229, %s231
      %p238 = scmp.eq.s32.totalorder %s32, 1
      %p239 = por %p237, %p238
      %p240 = scmp.ne.s32.totalorder %s231, %s232
      %p241 = scmp.eq.s32.totalorder %s32, 0
      %p242 = por %p240, %p241
      %p243 = scmp.ne.s32.totalorder %s231, %s232
      %p244 = scmp.eq.s32.totalorder %s33, 1
      %p245 = por %p243, %p244
      %p247 = scmp.ne.s32.totalorder %s232, %s246
      %p248 = scmp.eq.s32.totalorder %s33, 0
      %p249 = por %p247, %p248
      %s251 = sadd.s32 %s250, 1
      %p254 = scmp.eq.s32.totalorder %s27, 1
      %p255 = scmp.ne.s32.totalorder %s250, %s252
      %p256 = scmp.eq.s32.totalorder %s27, 0
      %p257 = por %p255, %p256
      %p258 = scmp.ne.s32.totalorder %s250, %s252
      %p259 = scmp.eq.s32.totalorder %s32, 1
      %p260 = por %p258, %p259
      %p261 = scmp.ne.s32.totalorder %s252, %s253
      %p262 = scmp.eq.s32.totalorder %s32, 0
      %p263 = por %p261, %p262
      %p264 = scmp.ne.s32.totalorder %s252, %s253
      %p265 = scmp.eq.s32.totalorder %s33, 1
      %p266 = por %p264, %p265
      %p268 = scmp.ne.s32.totalorder %s253, %s267
      %p269 = scmp.eq.s32.totalorder %s33, 0
      %p270 = por %p268, %p269
      %s272 = sadd.s32 %s271, 1
      %p275 = scmp.eq.s32.totalorder %s27, 1
      %p276 = scmp.ne.s32.totalorder %s271, %s273
      %p277 = scmp.eq.s32.totalorder %s27, 0
      %p278 = por %p276, %p277
      %p279 = scmp.ne.s32.totalorder %s271, %s273
      %p280 = scmp.eq.s32.totalorder %s32, 1
      %p281 = por %p279, %p280
      %p282 = scmp.ne.s32.totalorder %s273, %s274
      %p283 = scmp.eq.s32.totalorder %s32, 0
      %p284 = por %p282, %p283
      %p285 = scmp.ne.s32.totalorder %s273, %s274
      %p286 = scmp.eq.s32.totalorder %s33, 1
      %p287 = por %p285, %p286
      %p289 = scmp.ne.s32.totalorder %s274, %s288
      %p290 = scmp.eq.s32.totalorder %s33, 0
      %p291 = por %p289, %p290
      %s292 = ssub.s32 %s27, %s34
      %p293 = scmp.eq.s32.totalorder %s292, 0
      %s295 = sadd.s32 %s294, 1
      %s296 = scalar_select %p293, %s294, %s295
      %p299 = pneg %p293
      %p300 = scmp.eq.s32.totalorder %s27, 1
      %p301 = por %p299, %p300
      %p302 = scmp.ne.s32.totalorder %s294, %s297
      %p303 = scmp.eq.s32.totalorder %s27, 0
      %p304 = por %p302, %p303
      %p305 = scmp.ne.s32.totalorder %s294, %s297
      %p306 = scmp.eq.s32.totalorder %s32, 1
      %p307 = por %p305, %p306
      %p308 = scmp.ne.s32.totalorder %s297, %s298
      %p309 = scmp.eq.s32.totalorder %s32, 0
      %p310 = por %p308, %p309
      %p311 = scmp.ne.s32.totalorder %s297, %s298
      %p312 = scmp.eq.s32.totalorder %s33, 1
      %p313 = por %p311, %p312
      %p315 = scmp.ne.s32.totalorder %s298, %s314
      %p316 = scmp.eq.s32.totalorder %s33, 0
      %p317 = por %p315, %p316
      %p318 = scmp.le.s32.totalorder 1, %s27
      %p319 = scmp.lt.s32.totalorder %s27, 3
      %p320 = pnand %p318, %p319
      %p321 = pneg %p320
      // Predicated region
      $region9: #{block_apply.1} parent=5 // pred_check
        _
      $region10: #{block_apply.1} parent=5 // pred_check_branch
        %323 = sbr.rel (%p320) target = $region12
      $region11: #{block_apply.1} parent=5 // pred_region
        %s324 = ssub.s32 %s27, 1
        // Predicated region
        $region13: #{block_apply.1} parent=11 // pred_check
          %p325 = pneg %p74
        $region14: #{block_apply.1} parent=11 // pred_check_branch
          %327 = sbr.rel (%p325) target = $region16
        $region15: #{block_apply.1} parent=11 // pred_region
          _
        $region16: #{block_apply.1} parent=11 // pred_fallthru
          _
        // Predicated region
        $region17: #{block_apply.1} parent=11 // pred_check
          %p328 = pneg %p95
        $region18: #{block_apply.1} parent=11 // pred_check_branch
          %330 = sbr.rel (%p328) target = $region20
        $region19: #{block_apply.1} parent=11 // pred_region
          _
        $region20: #{block_apply.1} parent=11 // pred_fallthru
          _
        // Predicated region
        $region21: #{block_apply.1} parent=11 // pred_check
          %p331 = pneg %p116
        $region22: #{block_apply.1} parent=11 // pred_check_branch
          %333 = sbr.rel (%p331) target = $region24
        $region23: #{block_apply.1} parent=11 // pred_region
          %s335 = ssub.s32 3072, 3072
          %336 = vsyncadd [#allocation6], %s335
          %s337 = sshll.u32 [#allocation5], 4
          %s338 = int_to_ptr.vmem [resolvable:$true] %s337
          %343 = dma.hbm_to_vmem [thread:$0]  %s3, 3072, %s338, [#allocation6], 192, 192, 12
        $region24: #{block_apply.1} parent=11 // pred_fallthru
          _
        // Predicated region
        $region25: #{block_apply.1} parent=11 // pred_check
          %p344 = pneg %p137
        $region26: #{block_apply.1} parent=11 // pred_check_branch
          %346 = sbr.rel (%p344) target = $region28
        $region27: #{block_apply.1} parent=11 // pred_region
          %s348 = ssub.s32 1024, 1024
          %349 = vsyncadd [#allocation6], %s348
          %s350 = sshll.u32 [#allocation7], 4
          %s351 = int_to_ptr.vmem [resolvable:$true] %s350
          %356 = dma.hbm_to_vmem [thread:$0]  %s4, 1024, %s351, [#allocation6], 64, 64, 4
        $region28: #{block_apply.1} parent=11 // pred_fallthru
          _
        // Predicated region
        $region29: #{block_apply.1} parent=11 // pred_check
          %p357 = pneg %p158
        $region30: #{block_apply.1} parent=11 // pred_check_branch
          %359 = sbr.rel (%p357) target = $region32
        $region31: #{block_apply.1} parent=11 // pred_region
          _
        $region32: #{block_apply.1} parent=11 // pred_fallthru
          _
        // Predicated region
        $region33: #{block_apply.1} parent=11 // pred_check
          %p360 = pneg %p179
        $region34: #{block_apply.1} parent=11 // pred_check_branch
          %362 = sbr.rel (%p360) target = $region36
        $region35: #{block_apply.1} parent=11 // pred_region
          _
        $region36: #{block_apply.1} parent=11 // pred_fallthru
          _
        // Predicated region
        $region37: #{block_apply.1} parent=11 // pred_check
          %p363 = pneg %p200
        $region38: #{block_apply.1} parent=11 // pred_check_branch
          %365 = sbr.rel (%p363) target = $region40
        $region39: #{block_apply.1} parent=11 // pred_region
          _
        $region40: #{block_apply.1} parent=11 // pred_fallthru
          _
        // Predicated region
        $region41: #{block_apply.1} parent=11 // pred_check
          %p366 = pneg %p221
        $region42: #{block_apply.1} parent=11 // pred_check_branch
          %368 = sbr.rel (%p366) target = $region44
        $region43: #{block_apply.1} parent=11 // pred_region
          %s370 = ssub.s32 2048, 2048
          %371 = vsyncadd [#allocation9], %s370
          %s372 = sshll.u32 [#allocation8], 4
          %s373 = int_to_ptr.vmem [resolvable:$true] %s372
          %378 = dma.hbm_to_vmem [thread:$0]  %s8, 2048, %s373, [#allocation9], 128, 128, 8
        $region44: #{block_apply.1} parent=11 // pred_fallthru
          _
        // Predicated region
        $region45: #{block_apply.1} parent=11 // pred_check
          %p379 = pneg %p242
        $region46: #{block_apply.1} parent=11 // pred_check_branch
          %381 = sbr.rel (%p379) target = $region48
        $region47: #{block_apply.1} parent=11 // pred_region
          _
        $region48: #{block_apply.1} parent=11 // pred_fallthru
          _
        // Predicated region
        $region49: #{block_apply.1} parent=11 // pred_check
          %p382 = pneg %p263
        $region50: #{block_apply.1} parent=11 // pred_check_branch
          %384 = sbr.rel (%p382) target = $region52
        $region51: #{block_apply.1} parent=11 // pred_region
          %s386 = ssub.s32 2048, 2048
          %387 = vsyncadd [#allocation9], %s386
          %s388 = sshll.u32 [#allocation10], 4
          %s389 = int_to_ptr.vmem [resolvable:$true] %s388
          %394 = dma.hbm_to_vmem [thread:$0]  %s10, 2048, %s389, [#allocation9], 64, 64, 4
        $region52: #{block_apply.1} parent=11 // pred_fallthru
          _
        // Predicated region
        $region53: #{block_apply.1} parent=11 // pred_check
          %p395 = pneg %p284
        $region54: #{block_apply.1} parent=11 // pred_check_branch
          %397 = sbr.rel (%p395) target = $region56
        $region55: #{block_apply.1} parent=11 // pred_region
          %s399 = ssub.s32 16, 16
          %400 = vsyncadd [#allocation12], %s399
          %s402 = sshll.u32 [#allocation11], 4
          %s403 = int_to_ptr.vmem [resolvable:$true] %s402
          %405 = dma.hbm_to_vmem [thread:$0]  %s11, 16, %s403, [#allocation12]
        $region56: #{block_apply.1} parent=11 // pred_fallthru
          _
      $region12: #{block_apply.1} parent=5 // pred_fallthru
        _
      %p406 = scmp.lt.s32.totalorder %s27, 2
      // Predicated region
      $region57: #{block_apply.1} parent=5 // pred_check
        %p407 = pneg %p406
      $region58: #{block_apply.1} parent=5 // pred_check_branch
        %409 = sbr.rel (%p407) target = $region60
      $region59: #{block_apply.1} parent=5 // pred_region
        // Predicated region
        $region61: #{block_apply.1} parent=59 // pred_check
          %p410 = pneg %p47
        $region62: #{block_apply.1} parent=59 // pred_check_branch
          %412 = sbr.rel (%p410) target = $region64
        $region63: #{block_apply.1} parent=59 // pred_region
          %s413 = sand.u32 %s37, 1
          %s414 = scalar_lea.sflag [#allocation3], %s413
          %s415 = sand.u32 %s37, 1
          %s416 = smul.addr %s415, 128
          %s417 = scalar_lea.vmem [#allocation2], %s416
          %s419 = ssub.s32 2048, 2048
          %420 = vsyncadd %s414, %s419
          %s421 = smul.addr %s27, 16
          %s422 = smul.addr %s421, 128
          %s423 = scalar_lea.hbm %s0, %s422
          %s424 = sshll.u32 %s417, 4
          %s425 = int_to_ptr.vmem [resolvable:$true] %s424
          %430 = dma.hbm_to_vmem [thread:$0]  %s423, 2048, %s425, %s414, 128, 128, 8
        $region64: #{block_apply.1} parent=59 // pred_fallthru
          _
      $region60: #{block_apply.1} parent=5 // pred_fallthru
        _
      %p431 = scmp.le.s32.totalorder 1, %s27
      %p432 = scmp.lt.s32.totalorder %s27, 3
      %p433 = pnand %p431, %p432
      %p434 = pneg %p433
      // Predicated region
      $region65: #{block_apply.1} parent=5 // pred_check
        _
      $region66: #{block_apply.1} parent=5 // pred_check_branch
        %436 = sbr.rel (%p433) target = $region68
      $region67: #{block_apply.1} parent=5 // pred_region
        %s437 = ssub.s32 %s27, 1
        %s438 = sand.u32 %s40, 1
        %s439 = scalar_lea.sflag [#allocation3], %s438
        %s440 = sand.u32 %s40, 1
        %s441 = smul.addr %s440, 128
        %s442 = scalar_lea.vmem [#allocation2], %s441
        // Predicated region
        $region69: #{block_apply.1} parent=67 // pred_check
          %p443 = pneg %p53
        $region70: #{block_apply.1} parent=67 // pred_check_branch
          %445 = sbr.rel (%p443) target = $region72
        $region71: #{block_apply.1} parent=67 // pred_region
          %446 = dma.done %s439, 2048
        $region72: #{block_apply.1} parent=67 // pred_fallthru
          _
        // Predicated region
        $region73: #{block_apply.1} parent=67 // pred_check
          %p447 = pneg %p116
        $region74: #{block_apply.1} parent=67 // pred_check_branch
          %449 = sbr.rel (%p447) target = $region76
        $region75: #{block_apply.1} parent=67 // pred_region
          %450 = dma.done [#allocation6], 3072
        $region76: #{block_apply.1} parent=67 // pred_fallthru
          _
        // Predicated region
        $region77: #{block_apply.1} parent=67 // pred_check
          %p451 = pneg %p137
        $region78: #{block_apply.1} parent=67 // pred_check_branch
          %453 = sbr.rel (%p451) target = $region80
        $region79: #{block_apply.1} parent=67 // pred_region
          %454 = dma.done [#allocation6], 1024
        $region80: #{block_apply.1} parent=67 // pred_fallthru
          _
        // Predicated region
        $region81: #{block_apply.1} parent=67 // pred_check
          %p455 = pneg %p221
        $region82: #{block_apply.1} parent=67 // pred_check_branch
          %457 = sbr.rel (%p455) target = $region84
        $region83: #{block_apply.1} parent=67 // pred_region
          %458 = dma.done [#allocation9], 2048
        $region84: #{block_apply.1} parent=67 // pred_fallthru
          _
        // Predicated region
        $region85: #{block_apply.1} parent=67 // pred_check
          %p459 = pneg %p263
        $region86: #{block_apply.1} parent=67 // pred_check_branch
          %461 = sbr.rel (%p459) target = $region88
        $region87: #{block_apply.1} parent=67 // pred_region
          %462 = dma.done [#allocation9], 2048
        $region88: #{block_apply.1} parent=67 // pred_fallthru
          _
        // Predicated region
        $region89: #{block_apply.1} parent=67 // pred_check
          %p463 = pneg %p284
        $region90: #{block_apply.1} parent=67 // pred_check_branch
          %465 = sbr.rel (%p463) target = $region92
        $region91: #{block_apply.1} parent=67 // pred_region
          %466 = dma.done [#allocation12], 16
        $region92: #{block_apply.1} parent=67 // pred_fallthru
          _
        %s467 = sand.u32 %s40, 1
        %s468 = scalar_lea.sflag [#allocation3], %s467
        %s469 = sand.u32 %s40, 1
        %s470 = smul.addr %s469, 128
        %s471 = scalar_lea.vmem [#allocation2], %s470
        %p472 = pneg %p53
        %p473 = pneg %p50
        %p474 = pneg %p74
        %p475 = pneg %p71
        %p476 = pneg %p95
        %p477 = pneg %p92
        %p478 = pneg %p116
        %p479 = pneg %p113
        %p480 = pneg %p137
        %p481 = pneg %p134
        %p482 = pneg %p158
        %p483 = pneg %p155
        %p484 = pneg %p179
        %p485 = pneg %p176
        %p486 = pneg %p200
        %p487 = pneg %p197
        %p488 = pneg %p221
        %p489 = pneg %p218
        %p490 = pneg %p242
        %p491 = pneg %p239
        %p492 = pneg %p263
        %p493 = pneg %p260
        %p494 = pneg %p284
        %p495 = pneg %p281
        %p496 = pneg %p310
        %p497 = pneg %p307
        %s498 = sand.u32 %s297, 1
        %s499 = scalar_lea.sflag [#allocation4], %s498
        %s500 = sand.u32 %s297, 1
        %s501 = smul.addr %s500, 128
        %s502 = scalar_lea.vmem [#allocation13], %s501
        %v504 = vld [vmem:[%s442] sm:$0xff]
        %v505 = vld [vmem:[%s442 + $0x8] sm:$0xff]
        %v506 = vld [vmem:[%s442 + $0x10] sm:$0xff]
        %v507 = vld [vmem:[%s442 + $0x18] sm:$0xff]
        %v508 = vld [vmem:[%s442 + $0x20] sm:$0xff]
        %v509 = vld [vmem:[%s442 + $0x28] sm:$0xff]
        %v510 = vld [vmem:[%s442 + $0x30] sm:$0xff]
        %v511 = vld [vmem:[%s442 + $0x38] sm:$0xff]
        %v512 = vld [vmem:[%s442 + $0x40] sm:$0xff]
        %v513 = vld [vmem:[%s442 + $0x48] sm:$0xff]
        %v514 = vld [vmem:[%s442 + $0x50] sm:$0xff]
        %v515 = vld [vmem:[%s442 + $0x58] sm:$0xff]
        %v516 = vld [vmem:[%s442 + $0x60] sm:$0xff]
        %v517 = vld [vmem:[%s442 + $0x68] sm:$0xff]
        %v518 = vld [vmem:[%s442 + $0x70] sm:$0xff]
        %v519 = vld [vmem:[%s442 + $0x78] sm:$0xff]
        %v520 = vld [vmem:[%s1] sm:$0x1]
        %v521 = vld [vmem:[%s2] sm:$0x1]
        %522 = vadd.xlane.f32.xlu0 %v504
        %v523 = vpop.xlane.xlu0 %522
        %524 = vadd.xlane.f32.xlu0 %v505
        %v525 = vpop.xlane.xlu0 %524
        %526 = vadd.xlane.f32.xlu0 %v506
        %v527 = vpop.xlane.xlu0 %526
        %528 = vadd.xlane.f32.xlu0 %v507
        %v529 = vpop.xlane.xlu0 %528
        %530 = vadd.xlane.f32.xlu0 %v508
        %v531 = vpop.xlane.xlu0 %530
        %532 = vadd.xlane.f32.xlu0 %v509
        %v533 = vpop.xlane.xlu0 %532
        %534 = vadd.xlane.f32.xlu0 %v510
        %v535 = vpop.xlane.xlu0 %534
        %536 = vadd.xlane.f32.xlu0 %v511
        %v537 = vpop.xlane.xlu0 %536
        %538 = vadd.xlane.f32.xlu0 %v512
        %v539 = vpop.xlane.xlu0 %538
        %540 = vadd.xlane.f32.xlu0 %v513
        %v541 = vpop.xlane.xlu0 %540
        %542 = vadd.xlane.f32.xlu0 %v514
        %v543 = vpop.xlane.xlu0 %542
        %544 = vadd.xlane.f32.xlu0 %v515
        %v545 = vpop.xlane.xlu0 %544
        %546 = vadd.xlane.f32.xlu0 %v516
        %v547 = vpop.xlane.xlu0 %546
        %548 = vadd.xlane.f32.xlu0 %v517
        %v549 = vpop.xlane.xlu0 %548
        %550 = vadd.xlane.f32.xlu0 %v518
        %v551 = vpop.xlane.xlu0 %550
        %552 = vadd.xlane.f32.xlu0 %v519
        %v553 = vpop.xlane.xlu0 %552
        %v554 = vrcp.pop 128.0
        %v555 = vmul.f32 %v523, %v554
        %v556 = vmul.f32 %v525, %v554
        %v557 = vmul.f32 %v527, %v554
        %v558 = vmul.f32 %v529, %v554
        %v559 = vmul.f32 %v531, %v554
        %v560 = vmul.f32 %v533, %v554
        %v561 = vmul.f32 %v535, %v554
        %v562 = vmul.f32 %v537, %v554
        %v563 = vmul.f32 %v539, %v554
        %v564 = vmul.f32 %v541, %v554
        %v565 = vmul.f32 %v543, %v554
        %v566 = vmul.f32 %v545, %v554
        %v567 = vmul.f32 %v547, %v554
        %v568 = vmul.f32 %v549, %v554
        %v569 = vmul.f32 %v551, %v554
        %v570 = vmul.f32 %v553, %v554
        %v571 = vsub.f32 %v504, %v555
        %v572 = vsub.f32 %v505, %v556
        %v573 = vsub.f32 %v506, %v557
        %v574 = vsub.f32 %v507, %v558
        %v575 = vsub.f32 %v508, %v559
        %v576 = vsub.f32 %v509, %v560
        %v577 = vsub.f32 %v510, %v561
        %v578 = vsub.f32 %v511, %v562
        %v579 = vsub.f32 %v512, %v563
        %v580 = vsub.f32 %v513, %v564
        %v581 = vsub.f32 %v514, %v565
        %v582 = vsub.f32 %v515, %v566
        %v583 = vsub.f32 %v516, %v567
        %v584 = vsub.f32 %v517, %v568
        %v585 = vsub.f32 %v518, %v569
        %v586 = vsub.f32 %v519, %v570
        %v587 = vmul.f32 %v571, %v571
        %v588 = vmul.f32 %v572, %v572
        %v589 = vmul.f32 %v573, %v573
        %v590 = vmul.f32 %v574, %v574
        %v591 = vmul.f32 %v575, %v575
        %v592 = vmul.f32 %v576, %v576
        %v593 = vmul.f32 %v577, %v577
        %v594 = vmul.f32 %v578, %v578
        %v595 = vmul.f32 %v579, %v579
        %v596 = vmul.f32 %v580, %v580
        %v597 = vmul.f32 %v581, %v581
        %v598 = vmul.f32 %v582, %v582
        %v599 = vmul.f32 %v583, %v583
        %v600 = vmul.f32 %v584, %v584
        %v601 = vmul.f32 %v585, %v585
        %v602 = vmul.f32 %v586, %v586
        %603 = vadd.xlane.f32.xlu0 %v587
        %v604 = vpop.xlane.xlu0 %603
        %605 = vadd.xlane.f32.xlu0 %v588
        %v606 = vpop.xlane.xlu0 %605
        %607 = vadd.xlane.f32.xlu0 %v589
        %v608 = vpop.xlane.xlu0 %607
        %609 = vadd.xlane.f32.xlu0 %v590
        %v610 = vpop.xlane.xlu0 %609
        %611 = vadd.xlane.f32.xlu0 %v591
        %v612 = vpop.xlane.xlu0 %611
        %613 = vadd.xlane.f32.xlu0 %v592
        %v614 = vpop.xlane.xlu0 %613
        %615 = vadd.xlane.f32.xlu0 %v593
        %v616 = vpop.xlane.xlu0 %615
        %617 = vadd.xlane.f32.xlu0 %v594
        %v618 = vpop.xlane.xlu0 %617
        %619 = vadd.xlane.f32.xlu0 %v595
        %v620 = vpop.xlane.xlu0 %619
        %621 = vadd.xlane.f32.xlu0 %v596
        %v622 = vpop.xlane.xlu0 %621
        %623 = vadd.xlane.f32.xlu0 %v597
        %v624 = vpop.xlane.xlu0 %623
        %625 = vadd.xlane.f32.xlu0 %v598
        %v626 = vpop.xlane.xlu0 %625
        %627 = vadd.xlane.f32.xlu0 %v599
        %v628 = vpop.xlane.xlu0 %627
        %629 = vadd.xlane.f32.xlu0 %v600
        %v630 = vpop.xlane.xlu0 %629
        %631 = vadd.xlane.f32.xlu0 %v601
        %v632 = vpop.xlane.xlu0 %631
        %633 = vadd.xlane.f32.xlu0 %v602
        %v634 = vpop.xlane.xlu0 %633
        %v635 = vmul.f32 %v604, %v554
        %v636 = vmul.f32 %v606, %v554
        %v637 = vmul.f32 %v608, %v554
        %v638 = vmul.f32 %v610, %v554
        %v639 = vmul.f32 %v612, %v554
        %v640 = vmul.f32 %v614, %v554
        %v641 = vmul.f32 %v616, %v554
        %v642 = vmul.f32 %v618, %v554
        %v643 = vmul.f32 %v620, %v554
        %v644 = vmul.f32 %v622, %v554
        %v645 = vmul.f32 %v624, %v554
        %v646 = vmul.f32 %v626, %v554
        %v647 = vmul.f32 %v628, %v554
        %v648 = vmul.f32 %v630, %v554
        %v649 = vmul.f32 %v632, %v554
        %v650 = vmul.f32 %v634, %v554
        %v651 = vadd.f32 %v635, 1e-05
        %v652 = vadd.f32 %v636, 1e-05
        %v653 = vadd.f32 %v637, 1e-05
        %v654 = vadd.f32 %v638, 1e-05
        %v655 = vadd.f32 %v639, 1e-05
        %v656 = vadd.f32 %v640, 1e-05
        %v657 = vadd.f32 %v641, 1e-05
        %v658 = vadd.f32 %v642, 1e-05
        %v659 = vadd.f32 %v643, 1e-05
        %v660 = vadd.f32 %v644, 1e-05
        %v661 = vadd.f32 %v645, 1e-05
        %v662 = vadd.f32 %v646, 1e-05
        %v663 = vadd.f32 %v647, 1e-05
        %v664 = vadd.f32 %v648, 1e-05
        %v665 = vadd.f32 %v649, 1e-05
        %v666 = vadd.f32 %v650, 1e-05
        %v667 = vrsqrt.pop %v651
        %v668 = vrsqrt.pop %v652
        %v669 = vrsqrt.pop %v653
        %v670 = vrsqrt.pop %v654
        %v671 = vrsqrt.pop %v655
        %v672 = vrsqrt.pop %v656
        %v673 = vrsqrt.pop %v657
        %v674 = vrsqrt.pop %v658
        %v675 = vrsqrt.pop %v659
        %v676 = vrsqrt.pop %v660
        %v677 = vrsqrt.pop %v661
        %v678 = vrsqrt.pop %v662
        %v679 = vrsqrt.pop %v663
        %v680 = vrsqrt.pop %v664
        %v681 = vrsqrt.pop %v665
        %v682 = vrsqrt.pop %v666
        %v683 = vmul.f32 %v571, %v667
        %v684 = vmul.f32 %v572, %v668
        %v685 = vmul.f32 %v573, %v669
        %v686 = vmul.f32 %v574, %v670
        %v687 = vmul.f32 %v575, %v671
        %v688 = vmul.f32 %v576, %v672
        %v689 = vmul.f32 %v577, %v673
        %v690 = vmul.f32 %v578, %v674
        %v691 = vmul.f32 %v579, %v675
        %v692 = vmul.f32 %v580, %v676
        %v693 = vmul.f32 %v581, %v677
        %v694 = vmul.f32 %v582, %v678
        %v695 = vmul.f32 %v583, %v679
        %v696 = vmul.f32 %v584, %v680
        %v697 = vmul.f32 %v585, %v681
        %v698 = vmul.f32 %v586, %v682
        %v700 = vlaneseq
        %v701 = vshrl.u32 %v700, 7
        %v702 = vsub.s32 0, %v701
        %v703 = vrot.slane %v520, %v702
        %v705 = vmul.f32 %v683, %v703
        %v706 = vmul.f32 %v684, %v703
        %v707 = vmul.f32 %v685, %v703
        %v708 = vmul.f32 %v686, %v703
        %v709 = vmul.f32 %v687, %v703
        %v710 = vmul.f32 %v688, %v703
        %v711 = vmul.f32 %v689, %v703
        %v712 = vmul.f32 %v690, %v703
        %v713 = vmul.f32 %v691, %v703
        %v714 = vmul.f32 %v692, %v703
        %v715 = vmul.f32 %v693, %v703
        %v716 = vmul.f32 %v694, %v703
        %v717 = vmul.f32 %v695, %v703
        %v718 = vmul.f32 %v696, %v703
        %v719 = vmul.f32 %v697, %v703
        %v720 = vmul.f32 %v698, %v703
        %v722 = vlaneseq
        %v723 = vshrl.u32 %v722, 7
        %v724 = vsub.s32 0, %v723
        %v725 = vrot.slane %v521, %v724
        %v727 = vadd.f32 %v705, %v725
        %v728 = vadd.f32 %v706, %v725
        %v729 = vadd.f32 %v707, %v725
        %v730 = vadd.f32 %v708, %v725
        %v731 = vadd.f32 %v709, %v725
        %v732 = vadd.f32 %v710, %v725
        %v733 = vadd.f32 %v711, %v725
        %v734 = vadd.f32 %v712, %v725
        %v735 = vadd.f32 %v713, %v725
        %v736 = vadd.f32 %v714, %v725
        %v737 = vadd.f32 %v715, %v725
        %v738 = vadd.f32 %v716, %v725
        %v739 = vadd.f32 %v717, %v725
        %v740 = vadd.f32 %v718, %v725
        %v741 = vadd.f32 %v719, %v725
        %v742 = vadd.f32 %v720, %v725
        %v743 = vpack.c.bf16 %v728, %v727
        %v744 = vpack.c.bf16 %v730, %v729
        %v745 = vpack.c.bf16 %v732, %v731
        %v746 = vpack.c.bf16 %v734, %v733
        %v747 = vpack.c.bf16 %v736, %v735
        %v748 = vpack.c.bf16 %v738, %v737
        %v749 = vpack.c.bf16 %v740, %v739
        %v750 = vpack.c.bf16 %v742, %v741
        %v751 = vld [vmem:[#allocation5] sm:$0xff]
        %v752 = vld [vmem:[#allocation5 + $0x8] sm:$0xf]
        %v753 = vld [vmem:[#allocation5 + $0xc] sm:$0xff]
        %v754 = vld [vmem:[#allocation5 + $0x14] sm:$0xf]
        %v755 = vld [vmem:[#allocation5 + $0x18] sm:$0xff]
        %v756 = vld [vmem:[#allocation5 + $0x20] sm:$0xf]
        %v757 = vld [vmem:[#allocation5 + $0x24] sm:$0xff]
        %v758 = vld [vmem:[#allocation5 + $0x2c] sm:$0xf]
        %v759 = vld [vmem:[#allocation5 + $0x30] sm:$0xff]
        %v760 = vld [vmem:[#allocation5 + $0x38] sm:$0xf]
        %v761 = vld [vmem:[#allocation5 + $0x3c] sm:$0xff]
        %v762 = vld [vmem:[#allocation5 + $0x44] sm:$0xf]
        %v763 = vld [vmem:[#allocation5 + $0x48] sm:$0xff]
        %v764 = vld [vmem:[#allocation5 + $0x50] sm:$0xf]
        %v765 = vld [vmem:[#allocation5 + $0x54] sm:$0xff]
        %v766 = vld [vmem:[#allocation5 + $0x5c] sm:$0xf]
        %v767 = vld [vmem:[#allocation5 + $0x60] sm:$0xff]
        %v768 = vld [vmem:[#allocation5 + $0x68] sm:$0xf]
        %v769 = vld [vmem:[#allocation5 + $0x6c] sm:$0xff]
        %v770 = vld [vmem:[#allocation5 + $0x74] sm:$0xf]
        %v771 = vld [vmem:[#allocation5 + $0x78] sm:$0xff]
        %v772 = vld [vmem:[#allocation5 + $0x80] sm:$0xf]
        %v773 = vld [vmem:[#allocation5 + $0x84] sm:$0xff]
        %v774 = vld [vmem:[#allocation5 + $0x8c] sm:$0xf]
        %v775 = vld [vmem:[#allocation5 + $0x90] sm:$0xff]
        %v776 = vld [vmem:[#allocation5 + $0x98] sm:$0xf]
        %v777 = vld [vmem:[#allocation5 + $0x9c] sm:$0xff]
        %v778 = vld [vmem:[#allocation5 + $0xa4] sm:$0xf]
        %v779 = vld [vmem:[#allocation5 + $0xa8] sm:$0xff]
        %v780 = vld [vmem:[#allocation5 + $0xb0] sm:$0xf]
        %v781 = vld [vmem:[#allocation5 + $0xb4] sm:$0xff]
        %v782 = vld [vmem:[#allocation5 + $0xbc] sm:$0xf]
        %v815 = vunpack.c.l.b16 %v751
        %v816 = vunpack.c.h.b16 %v751
        %v817 = vunpack.c.l.b16 %v752
        %v818 = vunpack.c.l.b16 %v753
        %v819 = vunpack.c.h.b16 %v753
        %v820 = vunpack.c.l.b16 %v754
        %v821 = vunpack.c.l.b16 %v755
        %v822 = vunpack.c.h.b16 %v755
        %v823 = vunpack.c.l.b16 %v756
        %v824 = vunpack.c.l.b16 %v757
        %v825 = vunpack.c.h.b16 %v757
        %v826 = vunpack.c.l.b16 %v758
        %v827 = vunpack.c.l.b16 %v759
        %v828 = vunpack.c.h.b16 %v759
        %v829 = vunpack.c.l.b16 %v760
        %v830 = vunpack.c.l.b16 %v761
        %v831 = vunpack.c.h.b16 %v761
        %v832 = vunpack.c.l.b16 %v762
        %v833 = vunpack.c.l.b16 %v763
        %v834 = vunpack.c.h.b16 %v763
        %v835 = vunpack.c.l.b16 %v764
        %v836 = vunpack.c.l.b16 %v765
        %v837 = vunpack.c.h.b16 %v765
        %v838 = vunpack.c.l.b16 %v766
        %v839 = vunpack.c.l.b16 %v767
        %v840 = vunpack.c.h.b16 %v767
        %v841 = vunpack.c.l.b16 %v768
        %v842 = vunpack.c.l.b16 %v769
        %v843 = vunpack.c.h.b16 %v769
        %v844 = vunpack.c.l.b16 %v770
        %v845 = vunpack.c.l.b16 %v771
        %v846 = vunpack.c.h.b16 %v771
        %v847 = vunpack.c.l.b16 %v772
        %v848 = vunpack.c.l.b16 %v773
        %v849 = vunpack.c.h.b16 %v773
        %v850 = vunpack.c.l.b16 %v774
        %v851 = vunpack.c.l.b16 %v775
        %v852 = vunpack.c.h.b16 %v775
        %v853 = vunpack.c.l.b16 %v776
        %v854 = vunpack.c.l.b16 %v777
        %v855 = vunpack.c.h.b16 %v777
        %v856 = vunpack.c.l.b16 %v778
        %v857 = vunpack.c.l.b16 %v779
        %v858 = vunpack.c.h.b16 %v779
        %v859 = vunpack.c.l.b16 %v780
        %v860 = vunpack.c.l.b16 %v781
        %v861 = vunpack.c.h.b16 %v781
        %v862 = vunpack.c.l.b16 %v782
        %v863 = vpack.c.b16 %v818, %v815
        %v864 = vpack.c.b16 %v819, %v816
        %v865 = vpack.c.b16 %v820, %v817
        %v866 = vpack.c.b16 %v824, %v821
        %v867 = vpack.c.b16 %v825, %v822
        %v868 = vpack.c.b16 %v826, %v823
        %v869 = vpack.c.b16 %v830, %v827
        %v870 = vpack.c.b16 %v831, %v828
        %v871 = vpack.c.b16 %v832, %v829
        %v872 = vpack.c.b16 %v836, %v833
        %v873 = vpack.c.b16 %v837, %v834
        %v874 = vpack.c.b16 %v838, %v835
        %v875 = vpack.c.b16 %v842, %v839
        %v876 = vpack.c.b16 %v843, %v840
        %v877 = vpack.c.b16 %v844, %v841
        %v878 = vpack.c.b16 %v848, %v845
        %v879 = vpack.c.b16 %v849, %v846
        %v880 = vpack.c.b16 %v850, %v847
        %v881 = vpack.c.b16 %v854, %v851
        %v882 = vpack.c.b16 %v855, %v852
        %v883 = vpack.c.b16 %v856, %v853
        %v884 = vpack.c.b16 %v860, %v857
        %v885 = vpack.c.b16 %v861, %v858
        %v886 = vpack.c.b16 %v862, %v859
        %911 = vmatprep.subr.bf16.mxu0 %v864
        %912 = vmatpush1.bf16.msra.mxu0 %v863
        %913 = vmatprep.subr.bf16.mxu0 %v867
        %914 = vmatpush1.bf16.msra.mxu0 %v866
        %915 = vmatprep.subr.bf16.mxu0 %v870
        %916 = vmatpush1.bf16.msra.mxu0 %v869
        %917 = vmatprep.subr.bf16.mxu0 %v873
        %918 = vmatpush1.bf16.msra.mxu0 %v872
        %919 = vmatprep.subr.bf16.mxu0 %v876
        %920 = vmatpush1.bf16.msra.mxu0 %v875
        %921 = vmatprep.subr.bf16.mxu0 %v879
        %922 = vmatpush1.bf16.msra.mxu0 %v878
        %923 = vmatprep.subr.bf16.mxu0 %v882
        %924 = vmatpush1.bf16.msra.mxu0 %v881
        %925 = vmatprep.subr.bf16.mxu0 %v885
        %926 = vmatpush1.bf16.msra.mxu0 %v884
        %927 = vmatprep.subr.bf16.mxu0 0
        %928 = vmatpush1.bf16.msra.mxu0 0
        %929 = vmatprep.subr.bf16.mxu0 0
        %930 = vmatpush1.bf16.msra.mxu0 0
        %931 = vmatprep.subr.bf16.mxu0 0
        %932 = vmatpush1.bf16.msra.mxu0 0
        %933 = vmatprep.subr.bf16.mxu0 0
        %934 = vmatpush1.bf16.msra.mxu0 0
        %935 = vmatprep.subr.bf16.mxu0 0
        %936 = vmatpush1.bf16.msra.mxu0 0
        %937 = vmatprep.subr.bf16.mxu0 0
        %938 = vmatpush1.bf16.msra.mxu0 0
        %939 = vmatprep.subr.bf16.mxu0 0
        %940 = vmatpush1.bf16.msra.mxu0 0
        %941 = vmatprep.subr.bf16.mxu0 0
        %942 = vmatpush1.bf16.msra.mxu0 0
        %943 = vmatprep.mubr.bf16.mxu0 0
        %944 = vmatmul.mubr.bf16.gmra.mrb[0].mxu0 %v743
        %v945 = vpop.f32.mrb[0].mxu0
        %v946 = vadd.f32 0.0, %v945
        %v947 = vpop.f32.mrb[0].mxu0
        %v948 = vadd.f32 0.0, %v947
        %v949 = vpop.f32.mrb[0].mxu0
        %v950 = vadd.f32 0.0, %v949
        %v951 = vpop.f32.mrb[0].mxu0
        %v952 = vadd.f32 0.0, %v951
        %953 = vmatprep.mubr.bf16.mxu0 0
        %954 = vmatmul.mubr.bf16.gmra.mrb[0].mxu0 %v744
        %v955 = vpop.f32.mrb[0].mxu0
        %v956 = vadd.f32 0.0, %v955
        %v957 = vpop.f32.mrb[0].mxu0
        %v958 = vadd.f32 0.0, %v957
        %v959 = vpop.f32.mrb[0].mxu0
        %v960 = vadd.f32 0.0, %v959
        %v961 = vpop.f32.mrb[0].mxu0
        %v962 = vadd.f32 0.0, %v961
        %963 = vmatprep.mubr.bf16.mxu0 0
        %964 = vmatmul.mubr.bf16.gmra.mrb[0].mxu0 %v745
        %v965 = vpop.f32.mrb[0].mxu0
        %v966 = vadd.f32 0.0, %v965
        %v967 = vpop.f32.mrb[0].mxu0
        %v968 = vadd.f32 0.0, %v967
        %v969 = vpop.f32.mrb[0].mxu0
        %v970 = vadd.f32 0.0, %v969
        %v971 = vpop.f32.mrb[0].mxu0
        %v972 = vadd.f32 0.0, %v971
        %973 = vmatprep.mubr.bf16.mxu0 0
        %974 = vmatmul.mubr.bf16.gmra.mrb[0].mxu0 %v746
        %v975 = vpop.f32.mrb[0].mxu0
        %v976 = vadd.f32 0.0, %v975
        %v977 = vpop.f32.mrb[0].mxu0
        %v978 = vadd.f32 0.0, %v977
        %v979 = vpop.f32.mrb[0].mxu0
        %v980 = vadd.f32 0.0, %v979
        %v981 = vpop.f32.mrb[0].mxu0
        %v982 = vadd.f32 0.0, %v981
        %983 = vmatprep.mubr.bf16.mxu0 0
        %984 = vmatmul.mubr.bf16.gmra.mrb[0].mxu0 %v747
        %v985 = vpop.f32.mrb[0].mxu0
        %v986 = vadd.f32 0.0, %v985
        %v987 = vpop.f32.mrb[0].mxu0
        %v988 = vadd.f32 0.0, %v987
        %v989 = vpop.f32.mrb[0].mxu0
        %v990 = vadd.f32 0.0, %v989
        %v991 = vpop.f32.mrb[0].mxu0
        %v992 = vadd.f32 0.0, %v991
        %993 = vmatprep.mubr.bf16.mxu0 0
        %994 = vmatmul.mubr.bf16.gmra.mrb[0].mxu0 %v748
        %v995 = vpop.f32.mrb[0].mxu0
        %v996 = vadd.f32 0.0, %v995
        %v997 = vpop.f32.mrb[0].mxu0
        %v998 = vadd.f32 0.0, %v997
        %v999 = vpop.f32.mrb[0].mxu0
        %v1000 = vadd.f32 0.0, %v999
        %v1001 = vpop.f32.mrb[0].mxu0
        %v1002 = vadd.f32 0.0, %v1001
        %1003 = vmatprep.mubr.bf16.mxu0 0
        %1004 = vmatmul.mubr.bf16.gmra.mrb[0].mxu0 %v749
        %v1005 = vpop.f32.mrb[0].mxu0
        %v1006 = vadd.f32 0.0, %v1005
        %v1007 = vpop.f32.mrb[0].mxu0
        %v1008 = vadd.f32 0.0, %v1007
        %v1009 = vpop.f32.mrb[0].mxu0
        %v1010 = vadd.f32 0.0, %v1009
        %v1011 = vpop.f32.mrb[0].mxu0
        %v1012 = vadd.f32 0.0, %v1011
        %1013 = vmatprep.mubr.bf16.mxu0 0
        %1014 = vmatmul.mubr.bf16.gmra.mrb[0].mxu0 %v750
        %v1015 = vpop.f32.mrb[0].mxu0
        %v1016 = vadd.f32 0.0, %v1015
        %v1017 = vpop.f32.mrb[0].mxu0
        %v1018 = vadd.f32 0.0, %v1017
        %v1019 = vpop.f32.mrb[0].mxu0
        %v1020 = vadd.f32 0.0, %v1019
        %v1021 = vpop.f32.mrb[0].mxu0
        %v1022 = vadd.f32 0.0, %v1021
        %1023 = vdwg.mxu0
        %1024 = vmatprep.subr.bf16.mxu0 0
        %1025 = vmatpush1.bf16.msra.mxu0 %v865
        %1026 = vmatprep.subr.bf16.mxu0 0
        %1027 = vmatpush1.bf16.msra.mxu0 %v868
        %1028 = vmatprep.subr.bf16.mxu0 0
        %1029 = vmatpush1.bf16.msra.mxu0 %v871
        %1030 = vmatprep.subr.bf16.mxu0 0
        %1031 = vmatpush1.bf16.msra.mxu0 %v874
        %1032 = vmatprep.subr.bf16.mxu0 0
        %1033 = vmatpush1.bf16.msra.mxu0 %v877
        %1034 = vmatprep.subr.bf16.mxu0 0
        %1035 = vmatpush1.bf16.msra.mxu0 %v880
        %1036 = vmatprep.subr.bf16.mxu0 0
        %1037 = vmatpush1.bf16.msra.mxu0 %v883
        %1038 = vmatprep.subr.bf16.mxu0 0
        %1039 = vmatpush1.bf16.msra.mxu0 %v886
        %1040 = vmatprep.subr.bf16.mxu0 0
        %1041 = vmatpush1.bf16.msra.mxu0 0
        %1042 = vmatprep.subr.bf16.mxu0 0
        %1043 = vmatpush1.bf16.msra.mxu0 0
        %1044 = vmatprep.subr.bf16.mxu0 0
        %1045 = vmatpush1.bf16.msra.mxu0 0
        %1046 = vmatprep.subr.bf16.mxu0 0
        %1047 = vmatpush1.bf16.msra.mxu0 0
        %1048 = vmatprep.subr.bf16.mxu0 0
        %1049 = vmatpush1.bf16.msra.mxu0 0
        %1050 = vmatprep.subr.bf16.mxu0 0
        %1051 = vmatpush1.bf16.msra.mxu0 0
        %1052 = vmatprep.subr.bf16.mxu0 0
        %1053 = vmatpush1.bf16.msra.mxu0 0
        %1054 = vmatprep.subr.bf16.mxu0 0
        %1055 = vmatpush1.bf16.msra.mxu0 0
        %1056 = vmatprep.mubr.bf16.mxu0 0
        %1057 = vmatmul.mubr.bf16.gmra.mrb[0].mxu0 %v743
        %v1058 = vpop.f32.mrb[0].mxu0
        %v1059 = vadd.f32 0.0, %v1058
        %v1060 = vpop.f32.mrb[0].mxu0
        %v1061 = vpop.f32.mrb[0].mxu0
        %v1062 = vadd.f32 0.0, %v1061
        %v1063 = vpop.f32.mrb[0].mxu0
        %1064 = vmatprep.mubr.bf16.mxu0 0
        %1065 = vmatmul.mubr.bf16.gmra.mrb[0].mxu0 %v744
        %v1066 = vpop.f32.mrb[0].mxu0
        %v1067 = vadd.f32 0.0, %v1066
        %v1068 = vpop.f32.mrb[0].mxu0
        %v1069 = vpop.f32.mrb[0].mxu0
        %v1070 = vadd.f32 0.0, %v1069
        %v1071 = vpop.f32.mrb[0].mxu0
        %1072 = vmatprep.mubr.bf16.mxu0 0
        %1073 = vmatmul.mubr.bf16.gmra.mrb[0].mxu0 %v745
        %v1074 = vpop.f32.mrb[0].mxu0
        %v1075 = vadd.f32 0.0, %v1074
        %v1076 = vpop.f32.mrb[0].mxu0
        %v1077 = vpop.f32.mrb[0].mxu0
        %v1078 = vadd.f32 0.0, %v1077
        %v1079 = vpop.f32.mrb[0].mxu0
        %1080 = vmatprep.mubr.bf16.mxu0 0
        %1081 = vmatmul.mubr.bf16.gmra.mrb[0].mxu0 %v746
        %v1082 = vpop.f32.mrb[0].mxu0
        %v1083 = vadd.f32 0.0, %v1082
        %v1084 = vpop.f32.mrb[0].mxu0
        %v1085 = vpop.f32.mrb[0].mxu0
        %v1086 = vadd.f32 0.0, %v1085
        %v1087 = vpop.f32.mrb[0].mxu0
        %1088 = vmatprep.mubr.bf16.mxu0 0
        %1089 = vmatmul.mubr.bf16.gmra.mrb[0].mxu0 %v747
        %v1090 = vpop.f32.mrb[0].mxu0
        %v1091 = vadd.f32 0.0, %v1090
        %v1092 = vpop.f32.mrb[0].mxu0
        %v1093 = vpop.f32.mrb[0].mxu0
        %v1094 = vadd.f32 0.0, %v1093
        %v1095 = vpop.f32.mrb[0].mxu0
        %1096 = vmatprep.mubr.bf16.mxu0 0
        %1097 = vmatmul.mubr.bf16.gmra.mrb[0].mxu0 %v748
        %v1098 = vpop.f32.mrb[0].mxu0
        %v1099 = vadd.f32 0.0, %v1098
        %v1100 = vpop.f32.mrb[0].mxu0
        %v1101 = vpop.f32.mrb[0].mxu0
        %v1102 = vadd.f32 0.0, %v1101
        %v1103 = vpop.f32.mrb[0].mxu0
        %1104 = vmatprep.mubr.bf16.mxu0 0
        %1105 = vmatmul.mubr.bf16.gmra.mrb[0].mxu0 %v749
        %v1106 = vpop.f32.mrb[0].mxu0
        %v1107 = vadd.f32 0.0, %v1106
        %v1108 = vpop.f32.mrb[0].mxu0
        %v1109 = vpop.f32.mrb[0].mxu0
        %v1110 = vadd.f32 0.0, %v1109
        %v1111 = vpop.f32.mrb[0].mxu0
        %1112 = vmatprep.mubr.bf16.mxu0 0
        %1113 = vmatmul.mubr.bf16.gmra.mrb[0].mxu0 %v750
        %v1114 = vpop.f32.mrb[0].mxu0
        %v1115 = vadd.f32 0.0, %v1114
        %v1116 = vpop.f32.mrb[0].mxu0
        %v1117 = vpop.f32.mrb[0].mxu0
        %v1118 = vadd.f32 0.0, %v1117
        %v1119 = vpop.f32.mrb[0].mxu0
        %1120 = vdwg.mxu0
        %v1121 = vpack.c.bf16 %v950, %v946
        %v1122 = vpack.c.bf16 %v952, %v948
        %v1123 = vpack.c.bf16 %v1062, %v1059
        %v1124 = vpack.c.bf16 %v960, %v956
        %v1125 = vpack.c.bf16 %v962, %v958
        %v1126 = vpack.c.bf16 %v1070, %v1067
        %v1127 = vpack.c.bf16 %v970, %v966
        %v1128 = vpack.c.bf16 %v972, %v968
        %v1129 = vpack.c.bf16 %v1078, %v1075
        %v1130 = vpack.c.bf16 %v980, %v976
        %v1131 = vpack.c.bf16 %v982, %v978
        %v1132 = vpack.c.bf16 %v1086, %v1083
        %v1133 = vpack.c.bf16 %v990, %v986
        %v1134 = vpack.c.bf16 %v992, %v988
        %v1135 = vpack.c.bf16 %v1094, %v1091
        %v1136 = vpack.c.bf16 %v1000, %v996
        %v1137 = vpack.c.bf16 %v1002, %v998
        %v1138 = vpack.c.bf16 %v1102, %v1099
        %v1139 = vpack.c.bf16 %v1010, %v1006
        %v1140 = vpack.c.bf16 %v1012, %v1008
        %v1141 = vpack.c.bf16 %v1110, %v1107
        %v1142 = vpack.c.bf16 %v1020, %v1016
        %v1143 = vpack.c.bf16 %v1022, %v1018
        %v1144 = vpack.c.bf16 %v1118, %v1115
        %v1145 = vlaneseq
        %v1146 = vshrl.u32 %v1145, 7
        %v1147 = vadd.s32 %v1146, 8
        %v1148 = vadd.s32 %v1146, 16
        %v1149 = vadd.s32 %v1146, 24
        %v1150 = vadd.s32 %v1146, 32
        %v1151 = vadd.s32 %v1146, 40
        %v1152 = vadd.s32 %v1146, 48
        %v1153 = vadd.s32 %v1146, 56
        %v1154 = vadd.s32 %v1146, 64
        %v1155 = vadd.s32 %v1146, 72
        %v1156 = vadd.s32 %v1146, 80
        %v1157 = vadd.s32 %v1146, 88
        %v1158 = vadd.s32 %v1146, 96
        %v1159 = vadd.s32 %v1146, 104
        %v1160 = vadd.s32 %v1146, 112
        %v1161 = vadd.s32 %v1146, 120
        %v1162 = vlaneseq
        %v1163 = vand.u32 %v1162, 127
        %vm1164 = vcmp.ge.s32.totalorder %v1146, %v1163
        %vm1165 = vcmp.ge.s32.totalorder %v1147, %v1163
        %vm1166 = vcmp.ge.s32.totalorder %v1148, %v1163
        %vm1167 = vcmp.ge.s32.totalorder %v1149, %v1163
        %vm1168 = vcmp.ge.s32.totalorder %v1150, %v1163
        %vm1169 = vcmp.ge.s32.totalorder %v1151, %v1163
        %vm1170 = vcmp.ge.s32.totalorder %v1152, %v1163
        %vm1171 = vcmp.ge.s32.totalorder %v1153, %v1163
        %vm1172 = vcmp.ge.s32.totalorder %v1154, %v1163
        %vm1173 = vcmp.ge.s32.totalorder %v1155, %v1163
        %vm1174 = vcmp.ge.s32.totalorder %v1156, %v1163
        %vm1175 = vcmp.ge.s32.totalorder %v1157, %v1163
        %vm1176 = vcmp.ge.s32.totalorder %v1158, %v1163
        %vm1177 = vcmp.ge.s32.totalorder %v1159, %v1163
        %vm1178 = vcmp.ge.s32.totalorder %v1160, %v1163
        %vm1179 = vcmp.ge.s32.totalorder %v1161, %v1163
        %vm1180 = vcmask 261120
        %v1182 = vsel %vm1180, %v1121, 0
        %v1185 = vsel %vm1180, %v1124, 0
        %v1188 = vsel %vm1180, %v1127, 0
        %v1191 = vsel %vm1180, %v1130, 0
        %v1194 = vsel %vm1180, %v1133, 0
        %v1197 = vsel %vm1180, %v1136, 0
        %v1200 = vsel %vm1180, %v1139, 0
        %v1203 = vsel %vm1180, %v1142, 0
        %v1206 = vsel %vm1180, %v1122, 0
        %v1209 = vsel %vm1180, %v1125, 0
        %v1212 = vsel %vm1180, %v1128, 0
        %v1215 = vsel %vm1180, %v1131, 0
        %v1218 = vsel %vm1180, %v1134, 0
        %v1221 = vsel %vm1180, %v1137, 0
        %v1224 = vsel %vm1180, %v1140, 0
        %v1227 = vsel %vm1180, %v1143, 0
        %1229 = vmatprep.subr.bf16.mxu0 0
        %1230 = vmatpush1.bf16.xpose.msra.mxu0 %v1206
        %1231 = vmatprep.subr.bf16.mxu0 0
        %1232 = vmatpush1.bf16.xpose.msra.mxu0 %v1209
        %1233 = vmatprep.subr.bf16.mxu0 0
        %1234 = vmatpush1.bf16.xpose.msra.mxu0 %v1212
        %1235 = vmatprep.subr.bf16.mxu0 0
        %1236 = vmatpush1.bf16.xpose.msra.mxu0 %v1215
        %1237 = vmatprep.subr.bf16.mxu0 0
        %1238 = vmatpush1.bf16.xpose.msra.mxu0 %v1218
        %1239 = vmatprep.subr.bf16.mxu0 0
        %1240 = vmatpush1.bf16.xpose.msra.mxu0 %v1221
        %1241 = vmatprep.subr.bf16.mxu0 0
        %1242 = vmatpush1.bf16.xpose.msra.mxu0 %v1224
        %1243 = vmatprep.subr.bf16.mxu0 0
        %1244 = vmatpush1.bf16.xpose.msra.mxu0 %v1227
        %1245 = vmatprep.subr.bf16.mxu0 0
        %1246 = vmatpush1.bf16.xpose.msra.mxu0 0
        %1247 = vmatprep.subr.bf16.mxu0 0
        %1248 = vmatpush1.bf16.xpose.msra.mxu0 0
        %1249 = vmatprep.subr.bf16.mxu0 0
        %1250 = vmatpush1.bf16.xpose.msra.mxu0 0
        %1251 = vmatprep.subr.bf16.mxu0 0
        %1252 = vmatpush1.bf16.xpose.msra.mxu0 0
        %1253 = vmatprep.subr.bf16.mxu0 0
        %1254 = vmatpush1.bf16.xpose.msra.mxu0 0
        %1255 = vmatprep.subr.bf16.mxu0 0
        %1256 = vmatpush1.bf16.xpose.msra.mxu0 0
        %1257 = vmatprep.subr.bf16.mxu0 0
        %1258 = vmatpush1.bf16.xpose.msra.mxu0 0
        %1259 = vmatprep.subr.bf16.mxu0 0
        %1260 = vmatpush1.bf16.xpose.msra.mxu0 0
        %1261 = vmatprep.mubr.bf16.mxu0 0
        %1262 = vmatmul.mubr.bf16.gmra.mrb[0].mxu0 %v1182
        %v1263 = vpop.f32.mrb[0].mxu0
        %v1264 = vadd.f32 0.0, %v1263
        %v1265 = vpop.f32.mrb[0].mxu0
        %v1266 = vpop.f32.mrb[0].mxu0
        %v1267 = vadd.f32 0.0, %v1266
        %v1268 = vpop.f32.mrb[0].mxu0
        %1269 = vmatprep.mubr.bf16.mxu0 0
        %1270 = vmatmul.mubr.bf16.gmra.mrb[0].mxu0 %v1185
        %v1271 = vpop.f32.mrb[0].mxu0
        %v1272 = vadd.f32 0.0, %v1271
        %v1273 = vpop.f32.mrb[0].mxu0
        %v1274 = vpop.f32.mrb[0].mxu0
        %v1275 = vadd.f32 0.0, %v1274
        %v1276 = vpop.f32.mrb[0].mxu0
        %1277 = vmatprep.mubr.bf16.mxu0 0
        %1278 = vmatmul.mubr.bf16.gmra.mrb[0].mxu0 %v1188
        %v1279 = vpop.f32.mrb[0].mxu0
        %v1280 = vadd.f32 0.0, %v1279
        %v1281 = vpop.f32.mrb[0].mxu0
        %v1282 = vpop.f32.mrb[0].mxu0
        %v1283 = vadd.f32 0.0, %v1282
        %v1284 = vpop.f32.mrb[0].mxu0
        %1285 = vmatprep.mubr.bf16.mxu0 0
        %1286 = vmatmul.mubr.bf16.gmra.mrb[0].mxu0 %v1191
        %v1287 = vpop.f32.mrb[0].mxu0
        %v1288 = vadd.f32 0.0, %v1287
        %v1289 = vpop.f32.mrb[0].mxu0
        %v1290 = vpop.f32.mrb[0].mxu0
        %v1291 = vadd.f32 0.0, %v1290
        %v1292 = vpop.f32.mrb[0].mxu0
        %1293 = vmatprep.mubr.bf16.mxu0 0
        %1294 = vmatmul.mubr.bf16.gmra.mrb[0].mxu0 %v1194
        %v1295 = vpop.f32.mrb[0].mxu0
        %v1296 = vadd.f32 0.0, %v1295
        %v1297 = vpop.f32.mrb[0].mxu0
        %v1298 = vpop.f32.mrb[0].mxu0
        %v1299 = vadd.f32 0.0, %v1298
        %v1300 = vpop.f32.mrb[0].mxu0
        %1301 = vmatprep.mubr.bf16.mxu0 0
        %1302 = vmatmul.mubr.bf16.gmra.mrb[0].mxu0 %v1197
        %v1303 = vpop.f32.mrb[0].mxu0
        %v1304 = vadd.f32 0.0, %v1303
        %v1305 = vpop.f32.mrb[0].mxu0
        %v1306 = vpop.f32.mrb[0].mxu0
        %v1307 = vadd.f32 0.0, %v1306
        %v1308 = vpop.f32.mrb[0].mxu0
        %1309 = vmatprep.mubr.bf16.mxu0 0
        %1310 = vmatmul.mubr.bf16.gmra.mrb[0].mxu0 %v1200
        %v1311 = vpop.f32.mrb[0].mxu0
        %v1312 = vadd.f32 0.0, %v1311
        %v1313 = vpop.f32.mrb[0].mxu0
        %v1314 = vpop.f32.mrb[0].mxu0
        %v1315 = vadd.f32 0.0, %v1314
        %v1316 = vpop.f32.mrb[0].mxu0
        %1317 = vmatprep.mubr.bf16.mxu0 0
        %1318 = vmatmul.mubr.bf16.gmra.mrb[0].mxu0 %v1203
        %v1319 = vpop.f32.mrb[0].mxu0
        %v1320 = vadd.f32 0.0, %v1319
        %v1321 = vpop.f32.mrb[0].mxu0
        %v1322 = vpop.f32.mrb[0].mxu0
        %v1323 = vadd.f32 0.0, %v1322
        %v1324 = vpop.f32.mrb[0].mxu0
        %1325 = vdwg.mxu0
        %v1326 = vmul.f32 %v1264, 0.088388346
        %v1327 = vmul.f32 %v1267, 0.088388346
        %v1328 = vmul.f32 %v1272, 0.088388346
        %v1329 = vmul.f32 %v1275, 0.088388346
        %v1330 = vmul.f32 %v1280, 0.088388346
        %v1331 = vmul.f32 %v1283, 0.088388346
        %v1332 = vmul.f32 %v1288, 0.088388346
        %v1333 = vmul.f32 %v1291, 0.088388346
        %v1334 = vmul.f32 %v1296, 0.088388346
        %v1335 = vmul.f32 %v1299, 0.088388346
        %v1336 = vmul.f32 %v1304, 0.088388346
        %v1337 = vmul.f32 %v1307, 0.088388346
        %v1338 = vmul.f32 %v1312, 0.088388346
        %v1339 = vmul.f32 %v1315, 0.088388346
        %v1340 = vmul.f32 %v1320, 0.088388346
        %v1341 = vmul.f32 %v1323, 0.088388346
        %v1342 = vsel %vm1164, %v1326, -1e+30
        %v1343 = vsel %vm1165, %v1327, -1e+30
        %v1344 = vsel %vm1166, %v1328, -1e+30
        %v1345 = vsel %vm1167, %v1329, -1e+30
        %v1346 = vsel %vm1168, %v1330, -1e+30
        %v1347 = vsel %vm1169, %v1331, -1e+30
        %v1348 = vsel %vm1170, %v1332, -1e+30
        %v1349 = vsel %vm1171, %v1333, -1e+30
        %v1350 = vsel %vm1172, %v1334, -1e+30
        %v1351 = vsel %vm1173, %v1335, -1e+30
        %v1352 = vsel %vm1174, %v1336, -1e+30
        %v1353 = vsel %vm1175, %v1337, -1e+30
        %v1354 = vsel %vm1176, %v1338, -1e+30
        %v1355 = vsel %vm1177, %v1339, -1e+30
        %v1356 = vsel %vm1178, %v1340, -1e+30
        %v1357 = vsel %vm1179, %v1341, -1e+30
        %1358 = vmax.xlane.f32.xlu0 %v1342
        %v1359 = vpop.xlane.xlu0 %1358
        %1360 = vmax.xlane.f32.xlu0 %v1343
        %v1361 = vpop.xlane.xlu0 %1360
        %1362 = vmax.xlane.f32.xlu0 %v1344
        %v1363 = vpop.xlane.xlu0 %1362
        %1364 = vmax.xlane.f32.xlu0 %v1345
        %v1365 = vpop.xlane.xlu0 %1364
        %1366 = vmax.xlane.f32.xlu0 %v1346
        %v1367 = vpop.xlane.xlu0 %1366
        %1368 = vmax.xlane.f32.xlu0 %v1347
        %v1369 = vpop.xlane.xlu0 %1368
        %1370 = vmax.xlane.f32.xlu0 %v1348
        %v1371 = vpop.xlane.xlu0 %1370
        %1372 = vmax.xlane.f32.xlu0 %v1349
        %v1373 = vpop.xlane.xlu0 %1372
        %1374 = vmax.xlane.f32.xlu0 %v1350
        %v1375 = vpop.xlane.xlu0 %1374
        %1376 = vmax.xlane.f32.xlu0 %v1351
        %v1377 = vpop.xlane.xlu0 %1376
        %1378 = vmax.xlane.f32.xlu0 %v1352
        %v1379 = vpop.xlane.xlu0 %1378
        %1380 = vmax.xlane.f32.xlu0 %v1353
        %v1381 = vpop.xlane.xlu0 %1380
        %1382 = vmax.xlane.f32.xlu0 %v1354
        %v1383 = vpop.xlane.xlu0 %1382
        %1384 = vmax.xlane.f32.xlu0 %v1355
        %v1385 = vpop.xlane.xlu0 %1384
        %1386 = vmax.xlane.f32.xlu0 %v1356
        %v1387 = vpop.xlane.xlu0 %1386
        %1388 = vmax.xlane.f32.xlu0 %v1357
        %v1389 = vpop.xlane.xlu0 %1388
        %v1390 = vsub.f32 %v1342, %v1359
        %v1391 = vsub.f32 %v1343, %v1361
        %v1392 = vsub.f32 %v1344, %v1363
        %v1393 = vsub.f32 %v1345, %v1365
        %v1394 = vsub.f32 %v1346, %v1367
        %v1395 = vsub.f32 %v1347, %v1369
        %v1396 = vsub.f32 %v1348, %v1371
        %v1397 = vsub.f32 %v1349, %v1373
        %v1398 = vsub.f32 %v1350, %v1375
        %v1399 = vsub.f32 %v1351, %v1377
        %v1400 = vsub.f32 %v1352, %v1379
        %v1401 = vsub.f32 %v1353, %v1381
        %v1402 = vsub.f32 %v1354, %v1383
        %v1403 = vsub.f32 %v1355, %v1385
        %v1404 = vsub.f32 %v1356, %v1387
        %v1405 = vsub.f32 %v1357, %v1389
        %v1406 = vmul.f32 %v1390, 1.442695
        %v1407 = vpow.pop %v1406
        %v1408 = vmul.f32 %v1391, 1.442695
        %v1409 = vpow.pop %v1408
        %v1410 = vmul.f32 %v1392, 1.442695
        %v1411 = vpow.pop %v1410
        %v1412 = vmul.f32 %v1393, 1.442695
        %v1413 = vpow.pop %v1412
        %v1414 = vmul.f32 %v1394, 1.442695
        %v1415 = vpow.pop %v1414
        %v1416 = vmul.f32 %v1395, 1.442695
        %v1417 = vpow.pop %v1416
        %v1418 = vmul.f32 %v1396, 1.442695
        %v1419 = vpow.pop %v1418
        %v1420 = vmul.f32 %v1397, 1.442695
        %v1421 = vpow.pop %v1420
        %v1422 = vmul.f32 %v1398, 1.442695
        %v1423 = vpow.pop %v1422
        %v1424 = vmul.f32 %v1399, 1.442695
        %v1425 = vpow.pop %v1424
        %v1426 = vmul.f32 %v1400, 1.442695
        %v1427 = vpow.pop %v1426
        %v1428 = vmul.f32 %v1401, 1.442695
        %v1429 = vpow.pop %v1428
        %v1430 = vmul.f32 %v1402, 1.442695
        %v1431 = vpow.pop %v1430
        %v1432 = vmul.f32 %v1403, 1.442695
        %v1433 = vpow.pop %v1432
        %v1434 = vmul.f32 %v1404, 1.442695
        %v1435 = vpow.pop %v1434
        %v1436 = vmul.f32 %v1405, 1.442695
        %v1437 = vpow.pop %v1436
        %1438 = vadd.xlane.f32.xlu0 %v1407
        %v1439 = vpop.xlane.xlu0 %1438
        %1440 = vadd.xlane.f32.xlu0 %v1409
        %v1441 = vpop.xlane.xlu0 %1440
        %1442 = vadd.xlane.f32.xlu0 %v1411
        %v1443 = vpop.xlane.xlu0 %1442
        %1444 = vadd.xlane.f32.xlu0 %v1413
        %v1445 = vpop.xlane.xlu0 %1444
        %1446 = vadd.xlane.f32.xlu0 %v1415
        %v1447 = vpop.xlane.xlu0 %1446
        %1448 = vadd.xlane.f32.xlu0 %v1417
        %v1449 = vpop.xlane.xlu0 %1448
        %1450 = vadd.xlane.f32.xlu0 %v1419
        %v1451 = vpop.xlane.xlu0 %1450
        %1452 = vadd.xlane.f32.xlu0 %v1421
        %v1453 = vpop.xlane.xlu0 %1452
        %1454 = vadd.xlane.f32.xlu0 %v1423
        %v1455 = vpop.xlane.xlu0 %1454
        %1456 = vadd.xlane.f32.xlu0 %v1425
        %v1457 = vpop.xlane.xlu0 %1456
        %1458 = vadd.xlane.f32.xlu0 %v1427
        %v1459 = vpop.xlane.xlu0 %1458
        %1460 = vadd.xlane.f32.xlu0 %v1429
        %v1461 = vpop.xlane.xlu0 %1460
        %1462 = vadd.xlane.f32.xlu0 %v1431
        %v1463 = vpop.xlane.xlu0 %1462
        %1464 = vadd.xlane.f32.xlu0 %v1433
        %v1465 = vpop.xlane.xlu0 %1464
        %1466 = vadd.xlane.f32.xlu0 %v1435
        %v1467 = vpop.xlane.xlu0 %1466
        %1468 = vadd.xlane.f32.xlu0 %v1437
        %v1469 = vpop.xlane.xlu0 %1468
        %v1470 = vpack.c.bf16 %v1409, %v1407
        %v1471 = vpack.c.bf16 %v1413, %v1411
        %v1472 = vpack.c.bf16 %v1417, %v1415
        %v1473 = vpack.c.bf16 %v1421, %v1419
        %v1474 = vpack.c.bf16 %v1425, %v1423
        %v1475 = vpack.c.bf16 %v1429, %v1427
        %v1476 = vpack.c.bf16 %v1433, %v1431
        %v1477 = vpack.c.bf16 %v1437, %v1435
        %v1478 = vrcp.pop %v1439
        %v1479 = vrcp.pop %v1441
        %v1480 = vrcp.pop %v1443
        %v1481 = vrcp.pop %v1445
        %v1482 = vrcp.pop %v1447
        %v1483 = vrcp.pop %v1449
        %v1484 = vrcp.pop %v1451
        %v1485 = vrcp.pop %v1453
        %v1486 = vrcp.pop %v1455
        %v1487 = vrcp.pop %v1457
        %v1488 = vrcp.pop %v1459
        %v1489 = vrcp.pop %v1461
        %v1490 = vrcp.pop %v1463
        %v1491 = vrcp.pop %v1465
        %v1492 = vrcp.pop %v1467
        %v1493 = vrcp.pop %v1469
        %1494 = vmatprep.subr.bf16.mxu0 0
        %1495 = vmatpush1.bf16.msra.mxu0 %v1123
        %1496 = vmatprep.subr.bf16.mxu0 0
        %1497 = vmatpush1.bf16.msra.mxu0 %v1126
        %1498 = vmatprep.subr.bf16.mxu0 0
        %1499 = vmatpush1.bf16.msra.mxu0 %v1129
        %1500 = vmatprep.subr.bf16.mxu0 0
        %1501 = vmatpush1.bf16.msra.mxu0 %v1132
        %1502 = vmatprep.subr.bf16.mxu0 0
        %1503 = vmatpush1.bf16.msra.mxu0 %v1135
        %1504 = vmatprep.subr.bf16.mxu0 0
        %1505 = vmatpush1.bf16.msra.mxu0 %v1138
        %1506 = vmatprep.subr.bf16.mxu0 0
        %1507 = vmatpush1.bf16.msra.mxu0 %v1141
        %1508 = vmatprep.subr.bf16.mxu0 0
        %1509 = vmatpush1.bf16.msra.mxu0 %v1144
        %1510 = vmatprep.subr.bf16.mxu0 0
        %1511 = vmatpush1.bf16.msra.mxu0 0
        %1512 = vmatprep.subr.bf16.mxu0 0
        %1513 = vmatpush1.bf16.msra.mxu0 0
        %1514 = vmatprep.subr.bf16.mxu0 0
        %1515 = vmatpush1.bf16.msra.mxu0 0
        %1516 = vmatprep.subr.bf16.mxu0 0
        %1517 = vmatpush1.bf16.msra.mxu0 0
        %1518 = vmatprep.subr.bf16.mxu0 0
        %1519 = vmatpush1.bf16.msra.mxu0 0
        %1520 = vmatprep.subr.bf16.mxu0 0
        %1521 = vmatpush1.bf16.msra.mxu0 0
        %1522 = vmatprep.subr.bf16.mxu0 0
        %1523 = vmatpush1.bf16.msra.mxu0 0
        %1524 = vmatprep.subr.bf16.mxu0 0
        %1525 = vmatpush1.bf16.msra.mxu0 0
        %1526 = vmatprep.mubr.bf16.mxu0 0
        %1527 = vmatmul.mubr.bf16.gmra.mrb[0].mxu0 %v1470
        %v1528 = vpop.f32.mrb[0].mxu0
        %v1529 = vadd.f32 0.0, %v1528
        %v1530 = vpop.f32.mrb[0].mxu0
        %v1531 = vpop.f32.mrb[0].mxu0
        %v1532 = vadd.f32 0.0, %v1531
        %v1533 = vpop.f32.mrb[0].mxu0
        %1534 = vmatprep.mubr.bf16.mxu0 0
        %1535 = vmatmul.mubr.bf16.gmra.mrb[0].mxu0 %v1471
        %v1536 = vpop.f32.mrb[0].mxu0
        %v1537 = vadd.f32 0.0, %v1536
        %v1538 = vpop.f32.mrb[0].mxu0
        %v1539 = vpop.f32.mrb[0].mxu0
        %v1540 = vadd.f32 0.0, %v1539
        %v1541 = vpop.f32.mrb[0].mxu0
        %1542 = vmatprep.mubr.bf16.mxu0 0
        %1543 = vmatmul.mubr.bf16.gmra.mrb[0].mxu0 %v1472
        %v1544 = vpop.f32.mrb[0].mxu0
        %v1545 = vadd.f32 0.0, %v1544
        %v1546 = vpop.f32.mrb[0].mxu0
        %v1547 = vpop.f32.mrb[0].mxu0
        %v1548 = vadd.f32 0.0, %v1547
        %v1549 = vpop.f32.mrb[0].mxu0
        %1550 = vmatprep.mubr.bf16.mxu0 0
        %1551 = vmatmul.mubr.bf16.gmra.mrb[0].mxu0 %v1473
        %v1552 = vpop.f32.mrb[0].mxu0
        %v1553 = vadd.f32 0.0, %v1552
        %v1554 = vpop.f32.mrb[0].mxu0
        %v1555 = vpop.f32.mrb[0].mxu0
        %v1556 = vadd.f32 0.0, %v1555
        %v1557 = vpop.f32.mrb[0].mxu0
        %1558 = vmatprep.mubr.bf16.mxu0 0
        %1559 = vmatmul.mubr.bf16.gmra.mrb[0].mxu0 %v1474
        %v1560 = vpop.f32.mrb[0].mxu0
        %v1561 = vadd.f32 0.0, %v1560
        %v1562 = vpop.f32.mrb[0].mxu0
        %v1563 = vpop.f32.mrb[0].mxu0
        %v1564 = vadd.f32 0.0, %v1563
        %v1565 = vpop.f32.mrb[0].mxu0
        %1566 = vmatprep.mubr.bf16.mxu0 0
        %1567 = vmatmul.mubr.bf16.gmra.mrb[0].mxu0 %v1475
        %v1568 = vpop.f32.mrb[0].mxu0
        %v1569 = vadd.f32 0.0, %v1568
        %v1570 = vpop.f32.mrb[0].mxu0
        %v1571 = vpop.f32.mrb[0].mxu0
        %v1572 = vadd.f32 0.0, %v1571
        %v1573 = vpop.f32.mrb[0].mxu0
        %1574 = vmatprep.mubr.bf16.mxu0 0
        %1575 = vmatmul.mubr.bf16.gmra.mrb[0].mxu0 %v1476
        %v1576 = vpop.f32.mrb[0].mxu0
        %v1577 = vadd.f32 0.0, %v1576
        %v1578 = vpop.f32.mrb[0].mxu0
        %v1579 = vpop.f32.mrb[0].mxu0
        %v1580 = vadd.f32 0.0, %v1579
        %v1581 = vpop.f32.mrb[0].mxu0
        %1582 = vmatprep.mubr.bf16.mxu0 0
        %1583 = vmatmul.mubr.bf16.gmra.mrb[0].mxu0 %v1477
        %v1584 = vpop.f32.mrb[0].mxu0
        %v1585 = vadd.f32 0.0, %v1584
        %v1586 = vpop.f32.mrb[0].mxu0
        %v1587 = vpop.f32.mrb[0].mxu0
        %v1588 = vadd.f32 0.0, %v1587
        %v1589 = vpop.f32.mrb[0].mxu0
        %1590 = vdwg.mxu0
        %v1591 = vmul.f32 %v1529, %v1478
        %v1592 = vmul.f32 %v1532, %v1479
        %v1593 = vmul.f32 %v1537, %v1480
        %v1594 = vmul.f32 %v1540, %v1481
        %v1595 = vmul.f32 %v1545, %v1482
        %v1596 = vmul.f32 %v1548, %v1483
        %v1597 = vmul.f32 %v1553, %v1484
        %v1598 = vmul.f32 %v1556, %v1485
        %v1599 = vmul.f32 %v1561, %v1486
        %v1600 = vmul.f32 %v1564, %v1487
        %v1601 = vmul.f32 %v1569, %v1488
        %v1602 = vmul.f32 %v1572, %v1489
        %v1603 = vmul.f32 %v1577, %v1490
        %v1604 = vmul.f32 %v1580, %v1491
        %v1605 = vmul.f32 %v1585, %v1492
        %v1606 = vmul.f32 %v1588, %v1493
        %1615 = vrot.lane.b32.xlu0 %v1121, 96
        %v1616 = vpop.permute.xlu0 %1615
        %1617 = vrot.lane.b32.xlu0 %v1124, 96
        %v1618 = vpop.permute.xlu0 %1617
        %1619 = vrot.lane.b32.xlu0 %v1127, 96
        %v1620 = vpop.permute.xlu0 %1619
        %1621 = vrot.lane.b32.xlu0 %v1130, 96
        %v1622 = vpop.permute.xlu0 %1621
        %1623 = vrot.lane.b32.xlu0 %v1133, 96
        %v1624 = vpop.permute.xlu0 %1623
        %1625 = vrot.lane.b32.xlu0 %v1136, 96
        %v1626 = vpop.permute.xlu0 %1625
        %1627 = vrot.lane.b32.xlu0 %v1139, 96
        %v1628 = vpop.permute.xlu0 %1627
        %1629 = vrot.lane.b32.xlu0 %v1142, 96
        %v1630 = vpop.permute.xlu0 %1629
        %1639 = vrot.lane.b32.xlu0 %v1122, 96
        %v1640 = vpop.permute.xlu0 %1639
        %1641 = vrot.lane.b32.xlu0 %v1125, 96
        %v1642 = vpop.permute.xlu0 %1641
        %1643 = vrot.lane.b32.xlu0 %v1128, 96
        %v1644 = vpop.permute.xlu0 %1643
        %1645 = vrot.lane.b32.xlu0 %v1131, 96
        %v1646 = vpop.permute.xlu0 %1645
        %1647 = vrot.lane.b32.xlu0 %v1134, 96
        %v1648 = vpop.permute.xlu0 %1647
        %1649 = vrot.lane.b32.xlu0 %v1137, 96
        %v1650 = vpop.permute.xlu0 %1649
        %1651 = vrot.lane.b32.xlu0 %v1140, 96
        %v1652 = vpop.permute.xlu0 %1651
        %1653 = vrot.lane.b32.xlu0 %v1143, 96
        %v1654 = vpop.permute.xlu0 %1653
        %v1656 = vsel %vm1180, %v1616, 0
        %v1659 = vsel %vm1180, %v1618, 0
        %v1662 = vsel %vm1180, %v1620, 0
        %v1665 = vsel %vm1180, %v1622, 0
        %v1668 = vsel %vm1180, %v1624, 0
        %v1671 = vsel %vm1180, %v1626, 0
        %v1674 = vsel %vm1180, %v1628, 0
        %v1677 = vsel %vm1180, %v1630, 0
        %v1680 = vsel %vm1180, %v1640, 0
        %v1683 = vsel %vm1180, %v1642, 0
        %v1686 = vsel %vm1180, %v1644, 0
        %v1689 = vsel %vm1180, %v1646, 0
        %v1692 = vsel %vm1180, %v1648, 0
        %v1695 = vsel %vm1180, %v1650, 0
        %v1698 = vsel %vm1180, %v1652, 0
        %v1701 = vsel %vm1180, %v1654, 0
        %1703 = vmatprep.subr.bf16.mxu0 0
        %1704 = vmatpush1.bf16.xpose.msra.mxu0 %v1680
        %1705 = vmatprep.subr.bf16.mxu0 0
        %1706 = vmatpush1.bf16.xpose.msra.mxu0 %v1683
        %1707 = vmatprep.subr.bf16.mxu0 0
        %1708 = vmatpush1.bf16.xpose.msra.mxu0 %v1686
        %1709 = vmatprep.subr.bf16.mxu0 0
        %1710 = vmatpush1.bf16.xpose.msra.mxu0 %v1689
        %1711 = vmatprep.subr.bf16.mxu0 0
        %1712 = vmatpush1.bf16.xpose.msra.mxu0 %v1692
        %1713 = vmatprep.subr.bf16.mxu0 0
        %1714 = vmatpush1.bf16.xpose.msra.mxu0 %v1695
        %1715 = vmatprep.subr.bf16.mxu0 0
        %1716 = vmatpush1.bf16.xpose.msra.mxu0 %v1698
        %1717 = vmatprep.subr.bf16.mxu0 0
        %1718 = vmatpush1.bf16.xpose.msra.mxu0 %v1701
        %1719 = vmatprep.subr.bf16.mxu0 0
        %1720 = vmatpush1.bf16.xpose.msra.mxu0 0
        %1721 = vmatprep.subr.bf16.mxu0 0
        %1722 = vmatpush1.bf16.xpose.msra.mxu0 0
        %1723 = vmatprep.subr.bf16.mxu0 0
        %1724 = vmatpush1.bf16.xpose.msra.mxu0 0
        %1725 = vmatprep.subr.bf16.mxu0 0
        %1726 = vmatpush1.bf16.xpose.msra.mxu0 0
        %1727 = vmatprep.subr.bf16.mxu0 0
        %1728 = vmatpush1.bf16.xpose.msra.mxu0 0
        %1729 = vmatprep.subr.bf16.mxu0 0
        %1730 = vmatpush1.bf16.xpose.msra.mxu0 0
        %1731 = vmatprep.subr.bf16.mxu0 0
        %1732 = vmatpush1.bf16.xpose.msra.mxu0 0
        %1733 = vmatprep.subr.bf16.mxu0 0
        %1734 = vmatpush1.bf16.xpose.msra.mxu0 0
        %1735 = vmatprep.mubr.bf16.mxu0 0
        %1736 = vmatmul.mubr.bf16.gmra.mrb[0].mxu0 %v1656
        %v1737 = vpop.f32.mrb[0].mxu0
        %v1738 = vadd.f32 0.0, %v1737
        %v1739 = vpop.f32.mrb[0].mxu0
        %v1740 = vpop.f32.mrb[0].mxu0
        %v1741 = vadd.f32 0.0, %v1740
        %v1742 = vpop.f32.mrb[0].mxu0
        %1743 = vmatprep.mubr.bf16.mxu0 0
        %1744 = vmatmul.mubr.bf16.gmra.mrb[0].mxu0 %v1659
        %v1745 = vpop.f32.mrb[0].mxu0
        %v1746 = vadd.f32 0.0, %v1745
        %v1747 = vpop.f32.mrb[0].mxu0
        %v1748 = vpop.f32.mrb[0].mxu0
        %v1749 = vadd.f32 0.0, %v1748
        %v1750 = vpop.f32.mrb[0].mxu0
        %1751 = vmatprep.mubr.bf16.mxu0 0
        %1752 = vmatmul.mubr.bf16.gmra.mrb[0].mxu0 %v1662
        %v1753 = vpop.f32.mrb[0].mxu0
        %v1754 = vadd.f32 0.0, %v1753
        %v1755 = vpop.f32.mrb[0].mxu0
        %v1756 = vpop.f32.mrb[0].mxu0
        %v1757 = vadd.f32 0.0, %v1756
        %v1758 = vpop.f32.mrb[0].mxu0
        %1759 = vmatprep.mubr.bf16.mxu0 0
        %1760 = vmatmul.mubr.bf16.gmra.mrb[0].mxu0 %v1665
        %v1761 = vpop.f32.mrb[0].mxu0
        %v1762 = vadd.f32 0.0, %v1761
        %v1763 = vpop.f32.mrb[0].mxu0
        %v1764 = vpop.f32.mrb[0].mxu0
        %v1765 = vadd.f32 0.0, %v1764
        %v1766 = vpop.f32.mrb[0].mxu0
        %1767 = vmatprep.mubr.bf16.mxu0 0
        %1768 = vmatmul.mubr.bf16.gmra.mrb[0].mxu0 %v1668
        %v1769 = vpop.f32.mrb[0].mxu0
        %v1770 = vadd.f32 0.0, %v1769
        %v1771 = vpop.f32.mrb[0].mxu0
        %v1772 = vpop.f32.mrb[0].mxu0
        %v1773 = vadd.f32 0.0, %v1772
        %v1774 = vpop.f32.mrb[0].mxu0
        %1775 = vmatprep.mubr.bf16.mxu0 0
        %1776 = vmatmul.mubr.bf16.gmra.mrb[0].mxu0 %v1671
        %v1777 = vpop.f32.mrb[0].mxu0
        %v1778 = vadd.f32 0.0, %v1777
        %v1779 = vpop.f32.mrb[0].mxu0
        %v1780 = vpop.f32.mrb[0].mxu0
        %v1781 = vadd.f32 0.0, %v1780
        %v1782 = vpop.f32.mrb[0].mxu0
        %1783 = vmatprep.mubr.bf16.mxu0 0
        %1784 = vmatmul.mubr.bf16.gmra.mrb[0].mxu0 %v1674
        %v1785 = vpop.f32.mrb[0].mxu0
        %v1786 = vadd.f32 0.0, %v1785
        %v1787 = vpop.f32.mrb[0].mxu0
        %v1788 = vpop.f32.mrb[0].mxu0
        %v1789 = vadd.f32 0.0, %v1788
        %v1790 = vpop.f32.mrb[0].mxu0
        %1791 = vmatprep.mubr.bf16.mxu0 0
        %1792 = vmatmul.mubr.bf16.gmra.mrb[0].mxu0 %v1677
        %v1793 = vpop.f32.mrb[0].mxu0
        %v1794 = vadd.f32 0.0, %v1793
        %v1795 = vpop.f32.mrb[0].mxu0
        %v1796 = vpop.f32.mrb[0].mxu0
        %v1797 = vadd.f32 0.0, %v1796
        %v1798 = vpop.f32.mrb[0].mxu0
        %1799 = vdwg.mxu0
        %v1800 = vmul.f32 %v1738, 0.088388346
        %v1801 = vmul.f32 %v1741, 0.088388346
        %v1802 = vmul.f32 %v1746, 0.088388346
        %v1803 = vmul.f32 %v1749, 0.088388346
        %v1804 = vmul.f32 %v1754, 0.088388346
        %v1805 = vmul.f32 %v1757, 0.088388346
        %v1806 = vmul.f32 %v1762, 0.088388346
        %v1807 = vmul.f32 %v1765, 0.088388346
        %v1808 = vmul.f32 %v1770, 0.088388346
        %v1809 = vmul.f32 %v1773, 0.088388346
        %v1810 = vmul.f32 %v1778, 0.088388346
        %v1811 = vmul.f32 %v1781, 0.088388346
        %v1812 = vmul.f32 %v1786, 0.088388346
        %v1813 = vmul.f32 %v1789, 0.088388346
        %v1814 = vmul.f32 %v1794, 0.088388346
        %v1815 = vmul.f32 %v1797, 0.088388346
        %v1816 = vsel %vm1164, %v1800, -1e+30
        %v1817 = vsel %vm1165, %v1801, -1e+30
        %v1818 = vsel %vm1166, %v1802, -1e+30
        %v1819 = vsel %vm1167, %v1803, -1e+30
        %v1820 = vsel %vm1168, %v1804, -1e+30
        %v1821 = vsel %vm1169, %v1805, -1e+30
        %v1822 = vsel %vm1170, %v1806, -1e+30
        %v1823 = vsel %vm1171, %v1807, -1e+30
        %v1824 = vsel %vm1172, %v1808, -1e+30
        %v1825 = vsel %vm1173, %v1809, -1e+30
        %v1826 = vsel %vm1174, %v1810, -1e+30
        %v1827 = vsel %vm1175, %v1811, -1e+30
        %v1828 = vsel %vm1176, %v1812, -1e+30
        %v1829 = vsel %vm1177, %v1813, -1e+30
        %v1830 = vsel %vm1178, %v1814, -1e+30
        %v1831 = vsel %vm1179, %v1815, -1e+30
        %1832 = vmax.xlane.f32.xlu0 %v1816
        %v1833 = vpop.xlane.xlu0 %1832
        %1834 = vmax.xlane.f32.xlu0 %v1817
        %v1835 = vpop.xlane.xlu0 %1834
        %1836 = vmax.xlane.f32.xlu0 %v1818
        %v1837 = vpop.xlane.xlu0 %1836
        %1838 = vmax.xlane.f32.xlu0 %v1819
        %v1839 = vpop.xlane.xlu0 %1838
        %1840 = vmax.xlane.f32.xlu0 %v1820
        %v1841 = vpop.xlane.xlu0 %1840
        %1842 = vmax.xlane.f32.xlu0 %v1821
        %v1843 = vpop.xlane.xlu0 %1842
        %1844 = vmax.xlane.f32.xlu0 %v1822
        %v1845 = vpop.xlane.xlu0 %1844
        %1846 = vmax.xlane.f32.xlu0 %v1823
        %v1847 = vpop.xlane.xlu0 %1846
        %1848 = vmax.xlane.f32.xlu0 %v1824
        %v1849 = vpop.xlane.xlu0 %1848
        %1850 = vmax.xlane.f32.xlu0 %v1825
        %v1851 = vpop.xlane.xlu0 %1850
        %1852 = vmax.xlane.f32.xlu0 %v1826
        %v1853 = vpop.xlane.xlu0 %1852
        %1854 = vmax.xlane.f32.xlu0 %v1827
        %v1855 = vpop.xlane.xlu0 %1854
        %1856 = vmax.xlane.f32.xlu0 %v1828
        %v1857 = vpop.xlane.xlu0 %1856
        %1858 = vmax.xlane.f32.xlu0 %v1829
        %v1859 = vpop.xlane.xlu0 %1858
        %1860 = vmax.xlane.f32.xlu0 %v1830
        %v1861 = vpop.xlane.xlu0 %1860
        %1862 = vmax.xlane.f32.xlu0 %v1831
        %v1863 = vpop.xlane.xlu0 %1862
        %v1864 = vsub.f32 %v1816, %v1833
        %v1865 = vsub.f32 %v1817, %v1835
        %v1866 = vsub.f32 %v1818, %v1837
        %v1867 = vsub.f32 %v1819, %v1839
        %v1868 = vsub.f32 %v1820, %v1841
        %v1869 = vsub.f32 %v1821, %v1843
        %v1870 = vsub.f32 %v1822, %v1845
        %v1871 = vsub.f32 %v1823, %v1847
        %v1872 = vsub.f32 %v1824, %v1849
        %v1873 = vsub.f32 %v1825, %v1851
        %v1874 = vsub.f32 %v1826, %v1853
        %v1875 = vsub.f32 %v1827, %v1855
        %v1876 = vsub.f32 %v1828, %v1857
        %v1877 = vsub.f32 %v1829, %v1859
        %v1878 = vsub.f32 %v1830, %v1861
        %v1879 = vsub.f32 %v1831, %v1863
        %v1880 = vmul.f32 %v1864, 1.442695
        %v1881 = vpow.pop %v1880
        %v1882 = vmul.f32 %v1865, 1.442695
        %v1883 = vpow.pop %v1882
        %v1884 = vmul.f32 %v1866, 1.442695
        %v1885 = vpow.pop %v1884
        %v1886 = vmul.f32 %v1867, 1.442695
        %v1887 = vpow.pop %v1886
        %v1888 = vmul.f32 %v1868, 1.442695
        %v1889 = vpow.pop %v1888
        %v1890 = vmul.f32 %v1869, 1.442695
        %v1891 = vpow.pop %v1890
        %v1892 = vmul.f32 %v1870, 1.442695
        %v1893 = vpow.pop %v1892
        %v1894 = vmul.f32 %v1871, 1.442695
        %v1895 = vpow.pop %v1894
        %v1896 = vmul.f32 %v1872, 1.442695
        %v1897 = vpow.pop %v1896
        %v1898 = vmul.f32 %v1873, 1.442695
        %v1899 = vpow.pop %v1898
        %v1900 = vmul.f32 %v1874, 1.442695
        %v1901 = vpow.pop %v1900
        %v1902 = vmul.f32 %v1875, 1.442695
        %v1903 = vpow.pop %v1902
        %v1904 = vmul.f32 %v1876, 1.442695
        %v1905 = vpow.pop %v1904
        %v1906 = vmul.f32 %v1877, 1.442695
        %v1907 = vpow.pop %v1906
        %v1908 = vmul.f32 %v1878, 1.442695
        %v1909 = vpow.pop %v1908
        %v1910 = vmul.f32 %v1879, 1.442695
        %v1911 = vpow.pop %v1910
        %1912 = vadd.xlane.f32.xlu0 %v1881
        %v1913 = vpop.xlane.xlu0 %1912
        %1914 = vadd.xlane.f32.xlu0 %v1883
        %v1915 = vpop.xlane.xlu0 %1914
        %1916 = vadd.xlane.f32.xlu0 %v1885
        %v1917 = vpop.xlane.xlu0 %1916
        %1918 = vadd.xlane.f32.xlu0 %v1887
        %v1919 = vpop.xlane.xlu0 %1918
        %1920 = vadd.xlane.f32.xlu0 %v1889
        %v1921 = vpop.xlane.xlu0 %1920
        %1922 = vadd.xlane.f32.xlu0 %v1891
        %v1923 = vpop.xlane.xlu0 %1922
        %1924 = vadd.xlane.f32.xlu0 %v1893
        %v1925 = vpop.xlane.xlu0 %1924
        %1926 = vadd.xlane.f32.xlu0 %v1895
        %v1927 = vpop.xlane.xlu0 %1926
        %1928 = vadd.xlane.f32.xlu0 %v1897
        %v1929 = vpop.xlane.xlu0 %1928
        %1930 = vadd.xlane.f32.xlu0 %v1899
        %v1931 = vpop.xlane.xlu0 %1930
        %1932 = vadd.xlane.f32.xlu0 %v1901
        %v1933 = vpop.xlane.xlu0 %1932
        %1934 = vadd.xlane.f32.xlu0 %v1903
        %v1935 = vpop.xlane.xlu0 %1934
        %1936 = vadd.xlane.f32.xlu0 %v1905
        %v1937 = vpop.xlane.xlu0 %1936
        %1938 = vadd.xlane.f32.xlu0 %v1907
        %v1939 = vpop.xlane.xlu0 %1938
        %1940 = vadd.xlane.f32.xlu0 %v1909
        %v1941 = vpop.xlane.xlu0 %1940
        %1942 = vadd.xlane.f32.xlu0 %v1911
        %v1943 = vpop.xlane.xlu0 %1942
        %v1944 = vpack.c.bf16 %v1883, %v1881
        %v1945 = vpack.c.bf16 %v1887, %v1885
        %v1946 = vpack.c.bf16 %v1891, %v1889
        %v1947 = vpack.c.bf16 %v1895, %v1893
        %v1948 = vpack.c.bf16 %v1899, %v1897
        %v1949 = vpack.c.bf16 %v1903, %v1901
        %v1950 = vpack.c.bf16 %v1907, %v1905
        %v1951 = vpack.c.bf16 %v1911, %v1909
        %v1952 = vrcp.pop %v1913
        %v1953 = vrcp.pop %v1915
        %v1954 = vrcp.pop %v1917
        %v1955 = vrcp.pop %v1919
        %v1956 = vrcp.pop %v1921
        %v1957 = vrcp.pop %v1923
        %v1958 = vrcp.pop %v1925
        %v1959 = vrcp.pop %v1927
        %v1960 = vrcp.pop %v1929
        %v1961 = vrcp.pop %v1931
        %v1962 = vrcp.pop %v1933
        %v1963 = vrcp.pop %v1935
        %v1964 = vrcp.pop %v1937
        %v1965 = vrcp.pop %v1939
        %v1966 = vrcp.pop %v1941
        %v1967 = vrcp.pop %v1943
        %1976 = vrot.lane.b32.xlu0 %v1123, 96
        %v1977 = vpop.permute.xlu0 %1976
        %1978 = vrot.lane.b32.xlu0 %v1126, 96
        %v1979 = vpop.permute.xlu0 %1978
        %1980 = vrot.lane.b32.xlu0 %v1129, 96
        %v1981 = vpop.permute.xlu0 %1980
        %1982 = vrot.lane.b32.xlu0 %v1132, 96
        %v1983 = vpop.permute.xlu0 %1982
        %1984 = vrot.lane.b32.xlu0 %v1135, 96
        %v1985 = vpop.permute.xlu0 %1984
        %1986 = vrot.lane.b32.xlu0 %v1138, 96
        %v1987 = vpop.permute.xlu0 %1986
        %1988 = vrot.lane.b32.xlu0 %v1141, 96
        %v1989 = vpop.permute.xlu0 %1988
        %1990 = vrot.lane.b32.xlu0 %v1144, 96
        %v1991 = vpop.permute.xlu0 %1990
        %2000 = vmatprep.subr.bf16.mxu0 0
        %2001 = vmatpush1.bf16.msra.mxu0 %v1977
        %2002 = vmatprep.subr.bf16.mxu0 0
        %2003 = vmatpush1.bf16.msra.mxu0 %v1979
        %2004 = vmatprep.subr.bf16.mxu0 0
        %2005 = vmatpush1.bf16.msra.mxu0 %v1981
        %2006 = vmatprep.subr.bf16.mxu0 0
        %2007 = vmatpush1.bf16.msra.mxu0 %v1983
        %2008 = vmatprep.subr.bf16.mxu0 0
        %2009 = vmatpush1.bf16.msra.mxu0 %v1985
        %2010 = vmatprep.subr.bf16.mxu0 0
        %2011 = vmatpush1.bf16.msra.mxu0 %v1987
        %2012 = vmatprep.subr.bf16.mxu0 0
        %2013 = vmatpush1.bf16.msra.mxu0 %v1989
        %2014 = vmatprep.subr.bf16.mxu0 0
        %2015 = vmatpush1.bf16.msra.mxu0 %v1991
        %2016 = vmatprep.subr.bf16.mxu0 0
        %2017 = vmatpush1.bf16.msra.mxu0 0
        %2018 = vmatprep.subr.bf16.mxu0 0
        %2019 = vmatpush1.bf16.msra.mxu0 0
        %2020 = vmatprep.subr.bf16.mxu0 0
        %2021 = vmatpush1.bf16.msra.mxu0 0
        %2022 = vmatprep.subr.bf16.mxu0 0
        %2023 = vmatpush1.bf16.msra.mxu0 0
        %2024 = vmatprep.subr.bf16.mxu0 0
        %2025 = vmatpush1.bf16.msra.mxu0 0
        %2026 = vmatprep.subr.bf16.mxu0 0
        %2027 = vmatpush1.bf16.msra.mxu0 0
        %2028 = vmatprep.subr.bf16.mxu0 0
        %2029 = vmatpush1.bf16.msra.mxu0 0
        %2030 = vmatprep.subr.bf16.mxu0 0
        %2031 = vmatpush1.bf16.msra.mxu0 0
        %2032 = vmatprep.mubr.bf16.mxu0 0
        %2033 = vmatmul.mubr.bf16.gmra.mrb[0].mxu0 %v1944
        %v2034 = vpop.f32.mrb[0].mxu0
        %v2035 = vadd.f32 0.0, %v2034
        %v2036 = vpop.f32.mrb[0].mxu0
        %v2037 = vpop.f32.mrb[0].mxu0
        %v2038 = vadd.f32 0.0, %v2037
        %v2039 = vpop.f32.mrb[0].mxu0
        %2040 = vmatprep.mubr.bf16.mxu0 0
        %2041 = vmatmul.mubr.bf16.gmra.mrb[0].mxu0 %v1945
        %v2042 = vpop.f32.mrb[0].mxu0
        %v2043 = vadd.f32 0.0, %v2042
        %v2044 = vpop.f32.mrb[0].mxu0
        %v2045 = vpop.f32.mrb[0].mxu0
        %v2046 = vadd.f32 0.0, %v2045
        %v2047 = vpop.f32.mrb[0].mxu0
        %2048 = vmatprep.mubr.bf16.mxu0 0
        %2049 = vmatmul.mubr.bf16.gmra.mrb[0].mxu0 %v1946
        %v2050 = vpop.f32.mrb[0].mxu0
        %v2051 = vadd.f32 0.0, %v2050
        %v2052 = vpop.f32.mrb[0].mxu0
        %v2053 = vpop.f32.mrb[0].mxu0
        %v2054 = vadd.f32 0.0, %v2053
        %v2055 = vpop.f32.mrb[0].mxu0
        %2056 = vmatprep.mubr.bf16.mxu0 0
        %2057 = vmatmul.mubr.bf16.gmra.mrb[0].mxu0 %v1947
        %v2058 = vpop.f32.mrb[0].mxu0
        %v2059 = vadd.f32 0.0, %v2058
        %v2060 = vpop.f32.mrb[0].mxu0
        %v2061 = vpop.f32.mrb[0].mxu0
        %v2062 = vadd.f32 0.0, %v2061
        %v2063 = vpop.f32.mrb[0].mxu0
        %2064 = vmatprep.mubr.bf16.mxu0 0
        %2065 = vmatmul.mubr.bf16.gmra.mrb[0].mxu0 %v1948
        %v2066 = vpop.f32.mrb[0].mxu0
        %v2067 = vadd.f32 0.0, %v2066
        %v2068 = vpop.f32.mrb[0].mxu0
        %v2069 = vpop.f32.mrb[0].mxu0
        %v2070 = vadd.f32 0.0, %v2069
        %v2071 = vpop.f32.mrb[0].mxu0
        %2072 = vmatprep.mubr.bf16.mxu0 0
        %2073 = vmatmul.mubr.bf16.gmra.mrb[0].mxu0 %v1949
        %v2074 = vpop.f32.mrb[0].mxu0
        %v2075 = vadd.f32 0.0, %v2074
        %v2076 = vpop.f32.mrb[0].mxu0
        %v2077 = vpop.f32.mrb[0].mxu0
        %v2078 = vadd.f32 0.0, %v2077
        %v2079 = vpop.f32.mrb[0].mxu0
        %2080 = vmatprep.mubr.bf16.mxu0 0
        %2081 = vmatmul.mubr.bf16.gmra.mrb[0].mxu0 %v1950
        %v2082 = vpop.f32.mrb[0].mxu0
        %v2083 = vadd.f32 0.0, %v2082
        %v2084 = vpop.f32.mrb[0].mxu0
        %v2085 = vpop.f32.mrb[0].mxu0
        %v2086 = vadd.f32 0.0, %v2085
        %v2087 = vpop.f32.mrb[0].mxu0
        %2088 = vmatprep.mubr.bf16.mxu0 0
        %2089 = vmatmul.mubr.bf16.gmra.mrb[0].mxu0 %v1951
        %v2090 = vpop.f32.mrb[0].mxu0
        %v2091 = vadd.f32 0.0, %v2090
        %v2092 = vpop.f32.mrb[0].mxu0
        %v2093 = vpop.f32.mrb[0].mxu0
        %v2094 = vadd.f32 0.0, %v2093
        %v2095 = vpop.f32.mrb[0].mxu0
        %2096 = vdwg.mxu0
        %v2097 = vmul.f32 %v2035, %v1952
        %v2098 = vmul.f32 %v2038, %v1953
        %v2099 = vmul.f32 %v2043, %v1954
        %v2100 = vmul.f32 %v2046, %v1955
        %v2101 = vmul.f32 %v2051, %v1956
        %v2102 = vmul.f32 %v2054, %v1957
        %v2103 = vmul.f32 %v2059, %v1958
        %v2104 = vmul.f32 %v2062, %v1959
        %v2105 = vmul.f32 %v2067, %v1960
        %v2106 = vmul.f32 %v2070, %v1961
        %v2107 = vmul.f32 %v2075, %v1962
        %v2108 = vmul.f32 %v2078, %v1963
        %v2109 = vmul.f32 %v2083, %v1964
        %v2110 = vmul.f32 %v2086, %v1965
        %v2111 = vmul.f32 %v2091, %v1966
        %v2112 = vmul.f32 %v2094, %v1967
        %2113 = vrot.lane.b32.xlu0 %v1121, 64
        %v2114 = vpop.permute.xlu0 %2113
        %2115 = vrot.lane.b32.xlu0 %v1124, 64
        %v2116 = vpop.permute.xlu0 %2115
        %2117 = vrot.lane.b32.xlu0 %v1127, 64
        %v2118 = vpop.permute.xlu0 %2117
        %2119 = vrot.lane.b32.xlu0 %v1130, 64
        %v2120 = vpop.permute.xlu0 %2119
        %2121 = vrot.lane.b32.xlu0 %v1133, 64
        %v2122 = vpop.permute.xlu0 %2121
        %2123 = vrot.lane.b32.xlu0 %v1136, 64
        %v2124 = vpop.permute.xlu0 %2123
        %2125 = vrot.lane.b32.xlu0 %v1139, 64
        %v2126 = vpop.permute.xlu0 %2125
        %2127 = vrot.lane.b32.xlu0 %v1142, 64
        %v2128 = vpop.permute.xlu0 %2127
        %2129 = vrot.lane.b32.xlu0 %v1122, 64
        %v2130 = vpop.permute.xlu0 %2129
        %2131 = vrot.lane.b32.xlu0 %v1125, 64
        %v2132 = vpop.permute.xlu0 %2131
        %2133 = vrot.lane.b32.xlu0 %v1128, 64
        %v2134 = vpop.permute.xlu0 %2133
        %2135 = vrot.lane.b32.xlu0 %v1131, 64
        %v2136 = vpop.permute.xlu0 %2135
        %2137 = vrot.lane.b32.xlu0 %v1134, 64
        %v2138 = vpop.permute.xlu0 %2137
        %2139 = vrot.lane.b32.xlu0 %v1137, 64
        %v2140 = vpop.permute.xlu0 %2139
        %2141 = vrot.lane.b32.xlu0 %v1140, 64
        %v2142 = vpop.permute.xlu0 %2141
        %2143 = vrot.lane.b32.xlu0 %v1143, 64
        %v2144 = vpop.permute.xlu0 %2143
        %v2146 = vsel %vm1180, %v2114, 0
        %v2149 = vsel %vm1180, %v2116, 0
        %v2152 = vsel %vm1180, %v2118, 0
        %v2155 = vsel %vm1180, %v2120, 0
        %v2158 = vsel %vm1180, %v2122, 0
        %v2161 = vsel %vm1180, %v2124, 0
        %v2164 = vsel %vm1180, %v2126, 0
        %v2167 = vsel %vm1180, %v2128, 0
        %v2170 = vsel %vm1180, %v2130, 0
        %v2173 = vsel %vm1180, %v2132, 0
        %v2176 = vsel %vm1180, %v2134, 0
        %v2179 = vsel %vm1180, %v2136, 0
        %v2182 = vsel %vm1180, %v2138, 0
        %v2185 = vsel %vm1180, %v2140, 0
        %v2188 = vsel %vm1180, %v2142, 0
        %v2191 = vsel %vm1180, %v2144, 0
        %2193 = vmatprep.subr.bf16.mxu0 0
        %2194 = vmatpush1.bf16.xpose.msra.mxu0 %v2170
        %2195 = vmatprep.subr.bf16.mxu0 0
        %2196 = vmatpush1.bf16.xpose.msra.mxu0 %v2173
        %2197 = vmatprep.subr.bf16.mxu0 0
        %2198 = vmatpush1.bf16.xpose.msra.mxu0 %v2176
        %2199 = vmatprep.subr.bf16.mxu0 0
        %2200 = vmatpush1.bf16.xpose.msra.mxu0 %v2179
        %2201 = vmatprep.subr.bf16.mxu0 0
        %2202 = vmatpush1.bf16.xpose.msra.mxu0 %v2182
        %2203 = vmatprep.subr.bf16.mxu0 0
        %2204 = vmatpush1.bf16.xpose.msra.mxu0 %v2185
        %2205 = vmatprep.subr.bf16.mxu0 0
        %2206 = vmatpush1.bf16.xpose.msra.mxu0 %v2188
        %2207 = vmatprep.subr.bf16.mxu0 0
        %2208 = vmatpush1.bf16.xpose.msra.mxu0 %v2191
        %2209 = vmatprep.subr.bf16.mxu0 0
        %2210 = vmatpush1.bf16.xpose.msra.mxu0 0
        %2211 = vmatprep.subr.bf16.mxu0 0
        %2212 = vmatpush1.bf16.xpose.msra.mxu0 0
        %2213 = vmatprep.subr.bf16.mxu0 0
        %2214 = vmatpush1.bf16.xpose.msra.mxu0 0
        %2215 = vmatprep.subr.bf16.mxu0 0
        %2216 = vmatpush1.bf16.xpose.msra.mxu0 0
        %2217 = vmatprep.subr.bf16.mxu0 0
        %2218 = vmatpush1.bf16.xpose.msra.mxu0 0
        %2219 = vmatprep.subr.bf16.mxu0 0
        %2220 = vmatpush1.bf16.xpose.msra.mxu0 0
        %2221 = vmatprep.subr.bf16.mxu0 0
        %2222 = vmatpush1.bf16.xpose.msra.mxu0 0
        %2223 = vmatprep.subr.bf16.mxu0 0
        %2224 = vmatpush1.bf16.xpose.msra.mxu0 0
        %2225 = vmatprep.mubr.bf16.mxu0 0
        %2226 = vmatmul.mubr.bf16.gmra.mrb[0].mxu0 %v2146
        %v2227 = vpop.f32.mrb[0].mxu0
        %v2228 = vadd.f32 0.0, %v2227
        %v2229 = vpop.f32.mrb[0].mxu0
        %v2230 = vpop.f32.mrb[0].mxu0
        %v2231 = vadd.f32 0.0, %v2230
        %v2232 = vpop.f32.mrb[0].mxu0
        %2233 = vmatprep.mubr.bf16.mxu0 0
        %2234 = vmatmul.mubr.bf16.gmra.mrb[0].mxu0 %v2149
        %v2235 = vpop.f32.mrb[0].mxu0
        %v2236 = vadd.f32 0.0, %v2235
        %v2237 = vpop.f32.mrb[0].mxu0
        %v2238 = vpop.f32.mrb[0].mxu0
        %v2239 = vadd.f32 0.0, %v2238
        %v2240 = vpop.f32.mrb[0].mxu0
        %2241 = vmatprep.mubr.bf16.mxu0 0
        %2242 = vmatmul.mubr.bf16.gmra.mrb[0].mxu0 %v2152
        %v2243 = vpop.f32.mrb[0].mxu0
        %v2244 = vadd.f32 0.0, %v2243
        %v2245 = vpop.f32.mrb[0].mxu0
        %v2246 = vpop.f32.mrb[0].mxu0
        %v2247 = vadd.f32 0.0, %v2246
        %v2248 = vpop.f32.mrb[0].mxu0
        %2249 = vmatprep.mubr.bf16.mxu0 0
        %2250 = vmatmul.mubr.bf16.gmra.mrb[0].mxu0 %v2155
        %v2251 = vpop.f32.mrb[0].mxu0
        %v2252 = vadd.f32 0.0, %v2251
        %v2253 = vpop.f32.mrb[0].mxu0
        %v2254 = vpop.f32.mrb[0].mxu0
        %v2255 = vadd.f32 0.0, %v2254
        %v2256 = vpop.f32.mrb[0].mxu0
        %2257 = vmatprep.mubr.bf16.mxu0 0
        %2258 = vmatmul.mubr.bf16.gmra.mrb[0].mxu0 %v2158
        %v2259 = vpop.f32.mrb[0].mxu0
        %v2260 = vadd.f32 0.0, %v2259
        %v2261 = vpop.f32.mrb[0].mxu0
        %v2262 = vpop.f32.mrb[0].mxu0
        %v2263 = vadd.f32 0.0, %v2262
        %v2264 = vpop.f32.mrb[0].mxu0
        %2265 = vmatprep.mubr.bf16.mxu0 0
        %2266 = vmatmul.mubr.bf16.gmra.mrb[0].mxu0 %v2161
        %v2267 = vpop.f32.mrb[0].mxu0
        %v2268 = vadd.f32 0.0, %v2267
        %v2269 = vpop.f32.mrb[0].mxu0
        %v2270 = vpop.f32.mrb[0].mxu0
        %v2271 = vadd.f32 0.0, %v2270
        %v2272 = vpop.f32.mrb[0].mxu0
        %2273 = vmatprep.mubr.bf16.mxu0 0
        %2274 = vmatmul.mubr.bf16.gmra.mrb[0].mxu0 %v2164
        %v2275 = vpop.f32.mrb[0].mxu0
        %v2276 = vadd.f32 0.0, %v2275
        %v2277 = vpop.f32.mrb[0].mxu0
        %v2278 = vpop.f32.mrb[0].mxu0
        %v2279 = vadd.f32 0.0, %v2278
        %v2280 = vpop.f32.mrb[0].mxu0
        %2281 = vmatprep.mubr.bf16.mxu0 0
        %2282 = vmatmul.mubr.bf16.gmra.mrb[0].mxu0 %v2167
        %v2283 = vpop.f32.mrb[0].mxu0
        %v2284 = vadd.f32 0.0, %v2283
        %v2285 = vpop.f32.mrb[0].mxu0
        %v2286 = vpop.f32.mrb[0].mxu0
        %v2287 = vadd.f32 0.0, %v2286
        %v2288 = vpop.f32.mrb[0].mxu0
        %2289 = vdwg.mxu0
        %v2290 = vmul.f32 %v2228, 0.088388346
        %v2291 = vmul.f32 %v2231, 0.088388346
        %v2292 = vmul.f32 %v2236, 0.088388346
        %v2293 = vmul.f32 %v2239, 0.088388346
        %v2294 = vmul.f32 %v2244, 0.088388346
        %v2295 = vmul.f32 %v2247, 0.088388346
        %v2296 = vmul.f32 %v2252, 0.088388346
        %v2297 = vmul.f32 %v2255, 0.088388346
        %v2298 = vmul.f32 %v2260, 0.088388346
        %v2299 = vmul.f32 %v2263, 0.088388346
        %v2300 = vmul.f32 %v2268, 0.088388346
        %v2301 = vmul.f32 %v2271, 0.088388346
        %v2302 = vmul.f32 %v2276, 0.088388346
        %v2303 = vmul.f32 %v2279, 0.088388346
        %v2304 = vmul.f32 %v2284, 0.088388346
        %v2305 = vmul.f32 %v2287, 0.088388346
        %v2306 = vsel %vm1164, %v2290, -1e+30
        %v2307 = vsel %vm1165, %v2291, -1e+30
        %v2308 = vsel %vm1166, %v2292, -1e+30
        %v2309 = vsel %vm1167, %v2293, -1e+30
        %v2310 = vsel %vm1168, %v2294, -1e+30
        %v2311 = vsel %vm1169, %v2295, -1e+30
        %v2312 = vsel %vm1170, %v2296, -1e+30
        %v2313 = vsel %vm1171, %v2297, -1e+30
        %v2314 = vsel %vm1172, %v2298, -1e+30
        %v2315 = vsel %vm1173, %v2299, -1e+30
        %v2316 = vsel %vm1174, %v2300, -1e+30
        %v2317 = vsel %vm1175, %v2301, -1e+30
        %v2318 = vsel %vm1176, %v2302, -1e+30
        %v2319 = vsel %vm1177, %v2303, -1e+30
        %v2320 = vsel %vm1178, %v2304, -1e+30
        %v2321 = vsel %vm1179, %v2305, -1e+30
        %2322 = vmax.xlane.f32.xlu0 %v2306
        %v2323 = vpop.xlane.xlu0 %2322
        %2324 = vmax.xlane.f32.xlu0 %v2307
        %v2325 = vpop.xlane.xlu0 %2324
        %2326 = vmax.xlane.f32.xlu0 %v2308
        %v2327 = vpop.xlane.xlu0 %2326
        %2328 = vmax.xlane.f32.xlu0 %v2309
        %v2329 = vpop.xlane.xlu0 %2328
        %2330 = vmax.xlane.f32.xlu0 %v2310
        %v2331 = vpop.xlane.xlu0 %2330
        %2332 = vmax.xlane.f32.xlu0 %v2311
        %v2333 = vpop.xlane.xlu0 %2332
        %2334 = vmax.xlane.f32.xlu0 %v2312
        %v2335 = vpop.xlane.xlu0 %2334
        %2336 = vmax.xlane.f32.xlu0 %v2313
        %v2337 = vpop.xlane.xlu0 %2336
        %2338 = vmax.xlane.f32.xlu0 %v2314
        %v2339 = vpop.xlane.xlu0 %2338
        %2340 = vmax.xlane.f32.xlu0 %v2315
        %v2341 = vpop.xlane.xlu0 %2340
        %2342 = vmax.xlane.f32.xlu0 %v2316
        %v2343 = vpop.xlane.xlu0 %2342
        %2344 = vmax.xlane.f32.xlu0 %v2317
        %v2345 = vpop.xlane.xlu0 %2344
        %2346 = vmax.xlane.f32.xlu0 %v2318
        %v2347 = vpop.xlane.xlu0 %2346
        %2348 = vmax.xlane.f32.xlu0 %v2319
        %v2349 = vpop.xlane.xlu0 %2348
        %2350 = vmax.xlane.f32.xlu0 %v2320
        %v2351 = vpop.xlane.xlu0 %2350
        %2352 = vmax.xlane.f32.xlu0 %v2321
        %v2353 = vpop.xlane.xlu0 %2352
        %v2354 = vsub.f32 %v2306, %v2323
        %v2355 = vsub.f32 %v2307, %v2325
        %v2356 = vsub.f32 %v2308, %v2327
        %v2357 = vsub.f32 %v2309, %v2329
        %v2358 = vsub.f32 %v2310, %v2331
        %v2359 = vsub.f32 %v2311, %v2333
        %v2360 = vsub.f32 %v2312, %v2335
        %v2361 = vsub.f32 %v2313, %v2337
        %v2362 = vsub.f32 %v2314, %v2339
        %v2363 = vsub.f32 %v2315, %v2341
        %v2364 = vsub.f32 %v2316, %v2343
        %v2365 = vsub.f32 %v2317, %v2345
        %v2366 = vsub.f32 %v2318, %v2347
        %v2367 = vsub.f32 %v2319, %v2349
        %v2368 = vsub.f32 %v2320, %v2351
        %v2369 = vsub.f32 %v2321, %v2353
        %v2370 = vmul.f32 %v2354, 1.442695
        %v2371 = vpow.pop %v2370
        %v2372 = vmul.f32 %v2355, 1.442695
        %v2373 = vpow.pop %v2372
        %v2374 = vmul.f32 %v2356, 1.442695
        %v2375 = vpow.pop %v2374
        %v2376 = vmul.f32 %v2357, 1.442695
        %v2377 = vpow.pop %v2376
        %v2378 = vmul.f32 %v2358, 1.442695
        %v2379 = vpow.pop %v2378
        %v2380 = vmul.f32 %v2359, 1.442695
        %v2381 = vpow.pop %v2380
        %v2382 = vmul.f32 %v2360, 1.442695
        %v2383 = vpow.pop %v2382
        %v2384 = vmul.f32 %v2361, 1.442695
        %v2385 = vpow.pop %v2384
        %v2386 = vmul.f32 %v2362, 1.442695
        %v2387 = vpow.pop %v2386
        %v2388 = vmul.f32 %v2363, 1.442695
        %v2389 = vpow.pop %v2388
        %v2390 = vmul.f32 %v2364, 1.442695
        %v2391 = vpow.pop %v2390
        %v2392 = vmul.f32 %v2365, 1.442695
        %v2393 = vpow.pop %v2392
        %v2394 = vmul.f32 %v2366, 1.442695
        %v2395 = vpow.pop %v2394
        %v2396 = vmul.f32 %v2367, 1.442695
        %v2397 = vpow.pop %v2396
        %v2398 = vmul.f32 %v2368, 1.442695
        %v2399 = vpow.pop %v2398
        %v2400 = vmul.f32 %v2369, 1.442695
        %v2401 = vpow.pop %v2400
        %2402 = vadd.xlane.f32.xlu0 %v2371
        %v2403 = vpop.xlane.xlu0 %2402
        %2404 = vadd.xlane.f32.xlu0 %v2373
        %v2405 = vpop.xlane.xlu0 %2404
        %2406 = vadd.xlane.f32.xlu0 %v2375
        %v2407 = vpop.xlane.xlu0 %2406
        %2408 = vadd.xlane.f32.xlu0 %v2377
        %v2409 = vpop.xlane.xlu0 %2408
        %2410 = vadd.xlane.f32.xlu0 %v2379
        %v2411 = vpop.xlane.xlu0 %2410
        %2412 = vadd.xlane.f32.xlu0 %v2381
        %v2413 = vpop.xlane.xlu0 %2412
        %2414 = vadd.xlane.f32.xlu0 %v2383
        %v2415 = vpop.xlane.xlu0 %2414
        %2416 = vadd.xlane.f32.xlu0 %v2385
        %v2417 = vpop.xlane.xlu0 %2416
        %2418 = vadd.xlane.f32.xlu0 %v2387
        %v2419 = vpop.xlane.xlu0 %2418
        %2420 = vadd.xlane.f32.xlu0 %v2389
        %v2421 = vpop.xlane.xlu0 %2420
        %2422 = vadd.xlane.f32.xlu0 %v2391
        %v2423 = vpop.xlane.xlu0 %2422
        %2424 = vadd.xlane.f32.xlu0 %v2393
        %v2425 = vpop.xlane.xlu0 %2424
        %2426 = vadd.xlane.f32.xlu0 %v2395
        %v2427 = vpop.xlane.xlu0 %2426
        %2428 = vadd.xlane.f32.xlu0 %v2397
        %v2429 = vpop.xlane.xlu0 %2428
        %2430 = vadd.xlane.f32.xlu0 %v2399
        %v2431 = vpop.xlane.xlu0 %2430
        %2432 = vadd.xlane.f32.xlu0 %v2401
        %v2433 = vpop.xlane.xlu0 %2432
        %v2434 = vpack.c.bf16 %v2373, %v2371
        %v2435 = vpack.c.bf16 %v2377, %v2375
        %v2436 = vpack.c.bf16 %v2381, %v2379
        %v2437 = vpack.c.bf16 %v2385, %v2383
        %v2438 = vpack.c.bf16 %v2389, %v2387
        %v2439 = vpack.c.bf16 %v2393, %v2391
        %v2440 = vpack.c.bf16 %v2397, %v2395
        %v2441 = vpack.c.bf16 %v2401, %v2399
        %v2442 = vrcp.pop %v2403
        %v2443 = vrcp.pop %v2405
        %v2444 = vrcp.pop %v2407
        %v2445 = vrcp.pop %v2409
        %v2446 = vrcp.pop %v2411
        %v2447 = vrcp.pop %v2413
        %v2448 = vrcp.pop %v2415
        %v2449 = vrcp.pop %v2417
        %v2450 = vrcp.pop %v2419
        %v2451 = vrcp.pop %v2421
        %v2452 = vrcp.pop %v2423
        %v2453 = vrcp.pop %v2425
        %v2454 = vrcp.pop %v2427
        %v2455 = vrcp.pop %v2429
        %v2456 = vrcp.pop %v2431
        %v2457 = vrcp.pop %v2433
        %2458 = vrot.lane.b32.xlu0 %v1123, 64
        %v2459 = vpop.permute.xlu0 %2458
        %2460 = vrot.lane.b32.xlu0 %v1126, 64
        %v2461 = vpop.permute.xlu0 %2460
        %2462 = vrot.lane.b32.xlu0 %v1129, 64
        %v2463 = vpop.permute.xlu0 %2462
        %2464 = vrot.lane.b32.xlu0 %v1132, 64
        %v2465 = vpop.permute.xlu0 %2464
        %2466 = vrot.lane.b32.xlu0 %v1135, 64
        %v2467 = vpop.permute.xlu0 %2466
        %2468 = vrot.lane.b32.xlu0 %v1138, 64
        %v2469 = vpop.permute.xlu0 %2468
        %2470 = vrot.lane.b32.xlu0 %v1141, 64
        %v2471 = vpop.permute.xlu0 %2470
        %2472 = vrot.lane.b32.xlu0 %v1144, 64
        %v2473 = vpop.permute.xlu0 %2472
        %2482 = vmatprep.subr.bf16.mxu0 0
        %2483 = vmatpush1.bf16.msra.mxu0 %v2459
        %2484 = vmatprep.subr.bf16.mxu0 0
        %2485 = vmatpush1.bf16.msra.mxu0 %v2461
        %2486 = vmatprep.subr.bf16.mxu0 0
        %2487 = vmatpush1.bf16.msra.mxu0 %v2463
        %2488 = vmatprep.subr.bf16.mxu0 0
        %2489 = vmatpush1.bf16.msra.mxu0 %v2465
        %2490 = vmatprep.subr.bf16.mxu0 0
        %2491 = vmatpush1.bf16.msra.mxu0 %v2467
        %2492 = vmatprep.subr.bf16.mxu0 0
        %2493 = vmatpush1.bf16.msra.mxu0 %v2469
        %2494 = vmatprep.subr.bf16.mxu0 0
        %2495 = vmatpush1.bf16.msra.mxu0 %v2471
        %2496 = vmatprep.subr.bf16.mxu0 0
        %2497 = vmatpush1.bf16.msra.mxu0 %v2473
        %2498 = vmatprep.subr.bf16.mxu0 0
        %2499 = vmatpush1.bf16.msra.mxu0 0
        %2500 = vmatprep.subr.bf16.mxu0 0
        %2501 = vmatpush1.bf16.msra.mxu0 0
        %2502 = vmatprep.subr.bf16.mxu0 0
        %2503 = vmatpush1.bf16.msra.mxu0 0
        %2504 = vmatprep.subr.bf16.mxu0 0
        %2505 = vmatpush1.bf16.msra.mxu0 0
        %2506 = vmatprep.subr.bf16.mxu0 0
        %2507 = vmatpush1.bf16.msra.mxu0 0
        %2508 = vmatprep.subr.bf16.mxu0 0
        %2509 = vmatpush1.bf16.msra.mxu0 0
        %2510 = vmatprep.subr.bf16.mxu0 0
        %2511 = vmatpush1.bf16.msra.mxu0 0
        %2512 = vmatprep.subr.bf16.mxu0 0
        %2513 = vmatpush1.bf16.msra.mxu0 0
        %2514 = vmatprep.mubr.bf16.mxu0 0
        %2515 = vmatmul.mubr.bf16.gmra.mrb[0].mxu0 %v2434
        %v2516 = vpop.f32.mrb[0].mxu0
        %v2517 = vadd.f32 0.0, %v2516
        %v2518 = vpop.f32.mrb[0].mxu0
        %v2519 = vpop.f32.mrb[0].mxu0
        %v2520 = vadd.f32 0.0, %v2519
        %v2521 = vpop.f32.mrb[0].mxu0
        %2522 = vmatprep.mubr.bf16.mxu0 0
        %2523 = vmatmul.mubr.bf16.gmra.mrb[0].mxu0 %v2435
        %v2524 = vpop.f32.mrb[0].mxu0
        %v2525 = vadd.f32 0.0, %v2524
        %v2526 = vpop.f32.mrb[0].mxu0
        %v2527 = vpop.f32.mrb[0].mxu0
        %v2528 = vadd.f32 0.0, %v2527
        %v2529 = vpop.f32.mrb[0].mxu0
        %2530 = vmatprep.mubr.bf16.mxu0 0
        %2531 = vmatmul.mubr.bf16.gmra.mrb[0].mxu0 %v2436
        %v2532 = vpop.f32.mrb[0].mxu0
        %v2533 = vadd.f32 0.0, %v2532
        %v2534 = vpop.f32.mrb[0].mxu0
        %v2535 = vpop.f32.mrb[0].mxu0
        %v2536 = vadd.f32 0.0, %v2535
        %v2537 = vpop.f32.mrb[0].mxu0
        %2538 = vmatprep.mubr.bf16.mxu0 0
        %2539 = vmatmul.mubr.bf16.gmra.mrb[0].mxu0 %v2437
        %v2540 = vpop.f32.mrb[0].mxu0
        %v2541 = vadd.f32 0.0, %v2540
        %v2542 = vpop.f32.mrb[0].mxu0
        %v2543 = vpop.f32.mrb[0].mxu0
        %v2544 = vadd.f32 0.0, %v2543
        %v2545 = vpop.f32.mrb[0].mxu0
        %2546 = vmatprep.mubr.bf16.mxu0 0
        %2547 = vmatmul.mubr.bf16.gmra.mrb[0].mxu0 %v2438
        %v2548 = vpop.f32.mrb[0].mxu0
        %v2549 = vadd.f32 0.0, %v2548
        %v2550 = vpop.f32.mrb[0].mxu0
        %v2551 = vpop.f32.mrb[0].mxu0
        %v2552 = vadd.f32 0.0, %v2551
        %v2553 = vpop.f32.mrb[0].mxu0
        %2554 = vmatprep.mubr.bf16.mxu0 0
        %2555 = vmatmul.mubr.bf16.gmra.mrb[0].mxu0 %v2439
        %v2556 = vpop.f32.mrb[0].mxu0
        %v2557 = vadd.f32 0.0, %v2556
        %v2558 = vpop.f32.mrb[0].mxu0
        %v2559 = vpop.f32.mrb[0].mxu0
        %v2560 = vadd.f32 0.0, %v2559
        %v2561 = vpop.f32.mrb[0].mxu0
        %2562 = vmatprep.mubr.bf16.mxu0 0
        %2563 = vmatmul.mubr.bf16.gmra.mrb[0].mxu0 %v2440
        %v2564 = vpop.f32.mrb[0].mxu0
        %v2565 = vadd.f32 0.0, %v2564
        %v2566 = vpop.f32.mrb[0].mxu0
        %v2567 = vpop.f32.mrb[0].mxu0
        %v2568 = vadd.f32 0.0, %v2567
        %v2569 = vpop.f32.mrb[0].mxu0
        %2570 = vmatprep.mubr.bf16.mxu0 0
        %2571 = vmatmul.mubr.bf16.gmra.mrb[0].mxu0 %v2441
        %v2572 = vpop.f32.mrb[0].mxu0
        %v2573 = vadd.f32 0.0, %v2572
        %v2574 = vpop.f32.mrb[0].mxu0
        %v2575 = vpop.f32.mrb[0].mxu0
        %v2576 = vadd.f32 0.0, %v2575
        %v2577 = vpop.f32.mrb[0].mxu0
        %2578 = vdwg.mxu0
        %v2579 = vmul.f32 %v2517, %v2442
        %v2580 = vmul.f32 %v2520, %v2443
        %v2581 = vmul.f32 %v2525, %v2444
        %v2582 = vmul.f32 %v2528, %v2445
        %v2583 = vmul.f32 %v2533, %v2446
        %v2584 = vmul.f32 %v2536, %v2447
        %v2585 = vmul.f32 %v2541, %v2448
        %v2586 = vmul.f32 %v2544, %v2449
        %v2587 = vmul.f32 %v2549, %v2450
        %v2588 = vmul.f32 %v2552, %v2451
        %v2589 = vmul.f32 %v2557, %v2452
        %v2590 = vmul.f32 %v2560, %v2453
        %v2591 = vmul.f32 %v2565, %v2454
        %v2592 = vmul.f32 %v2568, %v2455
        %v2593 = vmul.f32 %v2573, %v2456
        %v2594 = vmul.f32 %v2576, %v2457
        %2595 = vrot.lane.b32.xlu0 %v1121, 32
        %v2596 = vpop.permute.xlu0 %2595
        %2597 = vrot.lane.b32.xlu0 %v1124, 32
        %v2598 = vpop.permute.xlu0 %2597
        %2599 = vrot.lane.b32.xlu0 %v1127, 32
        %v2600 = vpop.permute.xlu0 %2599
        %2601 = vrot.lane.b32.xlu0 %v1130, 32
        %v2602 = vpop.permute.xlu0 %2601
        %2603 = vrot.lane.b32.xlu0 %v1133, 32
        %v2604 = vpop.permute.xlu0 %2603
        %2605 = vrot.lane.b32.xlu0 %v1136, 32
        %v2606 = vpop.permute.xlu0 %2605
        %2607 = vrot.lane.b32.xlu0 %v1139, 32
        %v2608 = vpop.permute.xlu0 %2607
        %2609 = vrot.lane.b32.xlu0 %v1142, 32
        %v2610 = vpop.permute.xlu0 %2609
        %2611 = vrot.lane.b32.xlu0 %v1122, 32
        %v2612 = vpop.permute.xlu0 %2611
        %2613 = vrot.lane.b32.xlu0 %v1125, 32
        %v2614 = vpop.permute.xlu0 %2613
        %2615 = vrot.lane.b32.xlu0 %v1128, 32
        %v2616 = vpop.permute.xlu0 %2615
        %2617 = vrot.lane.b32.xlu0 %v1131, 32
        %v2618 = vpop.permute.xlu0 %2617
        %2619 = vrot.lane.b32.xlu0 %v1134, 32
        %v2620 = vpop.permute.xlu0 %2619
        %2621 = vrot.lane.b32.xlu0 %v1137, 32
        %v2622 = vpop.permute.xlu0 %2621
        %2623 = vrot.lane.b32.xlu0 %v1140, 32
        %v2624 = vpop.permute.xlu0 %2623
        %2625 = vrot.lane.b32.xlu0 %v1143, 32
        %v2626 = vpop.permute.xlu0 %2625
        %v2628 = vsel %vm1180, %v2596, 0
        %v2631 = vsel %vm1180, %v2598, 0
        %v2634 = vsel %vm1180, %v2600, 0
        %v2637 = vsel %vm1180, %v2602, 0
        %v2640 = vsel %vm1180, %v2604, 0
        %v2643 = vsel %vm1180, %v2606, 0
        %v2646 = vsel %vm1180, %v2608, 0
        %v2649 = vsel %vm1180, %v2610, 0
        %v2652 = vsel %vm1180, %v2612, 0
        %v2655 = vsel %vm1180, %v2614, 0
        %v2658 = vsel %vm1180, %v2616, 0
        %v2661 = vsel %vm1180, %v2618, 0
        %v2664 = vsel %vm1180, %v2620, 0
        %v2667 = vsel %vm1180, %v2622, 0
        %v2670 = vsel %vm1180, %v2624, 0
        %v2673 = vsel %vm1180, %v2626, 0
        %2675 = vmatprep.subr.bf16.mxu0 0
        %2676 = vmatpush1.bf16.xpose.msra.mxu0 %v2652
        %2677 = vmatprep.subr.bf16.mxu0 0
        %2678 = vmatpush1.bf16.xpose.msra.mxu0 %v2655
        %2679 = vmatprep.subr.bf16.mxu0 0
        %2680 = vmatpush1.bf16.xpose.msra.mxu0 %v2658
        %2681 = vmatprep.subr.bf16.mxu0 0
        %2682 = vmatpush1.bf16.xpose.msra.mxu0 %v2661
        %2683 = vmatprep.subr.bf16.mxu0 0
        %2684 = vmatpush1.bf16.xpose.msra.mxu0 %v2664
        %2685 = vmatprep.subr.bf16.mxu0 0
        %2686 = vmatpush1.bf16.xpose.msra.mxu0 %v2667
        %2687 = vmatprep.subr.bf16.mxu0 0
        %2688 = vmatpush1.bf16.xpose.msra.mxu0 %v2670
        %2689 = vmatprep.subr.bf16.mxu0 0
        %2690 = vmatpush1.bf16.xpose.msra.mxu0 %v2673
        %2691 = vmatprep.subr.bf16.mxu0 0
        %2692 = vmatpush1.bf16.xpose.msra.mxu0 0
        %2693 = vmatprep.subr.bf16.mxu0 0
        %2694 = vmatpush1.bf16.xpose.msra.mxu0 0
        %2695 = vmatprep.subr.bf16.mxu0 0
        %2696 = vmatpush1.bf16.xpose.msra.mxu0 0
        %2697 = vmatprep.subr.bf16.mxu0 0
        %2698 = vmatpush1.bf16.xpose.msra.mxu0 0
        %2699 = vmatprep.subr.bf16.mxu0 0
        %2700 = vmatpush1.bf16.xpose.msra.mxu0 0
        %2701 = vmatprep.subr.bf16.mxu0 0
        %2702 = vmatpush1.bf16.xpose.msra.mxu0 0
        %2703 = vmatprep.subr.bf16.mxu0 0
        %2704 = vmatpush1.bf16.xpose.msra.mxu0 0
        %2705 = vmatprep.subr.bf16.mxu0 0
        %2706 = vmatpush1.bf16.xpose.msra.mxu0 0
        %2707 = vmatprep.mubr.bf16.mxu0 0
        %2708 = vmatmul.mubr.bf16.gmra.mrb[0].mxu0 %v2628
        %v2709 = vpop.f32.mrb[0].mxu0
        %v2710 = vadd.f32 0.0, %v2709
        %v2711 = vpop.f32.mrb[0].mxu0
        %v2712 = vpop.f32.mrb[0].mxu0
        %v2713 = vadd.f32 0.0, %v2712
        %v2714 = vpop.f32.mrb[0].mxu0
        %2715 = vmatprep.mubr.bf16.mxu0 0
        %2716 = vmatmul.mubr.bf16.gmra.mrb[0].mxu0 %v2631
        %v2717 = vpop.f32.mrb[0].mxu0
        %v2718 = vadd.f32 0.0, %v2717
        %v2719 = vpop.f32.mrb[0].mxu0
        %v2720 = vpop.f32.mrb[0].mxu0
        %v2721 = vadd.f32 0.0, %v2720
        %v2722 = vpop.f32.mrb[0].mxu0
        %2723 = vmatprep.mubr.bf16.mxu0 0
        %2724 = vmatmul.mubr.bf16.gmra.mrb[0].mxu0 %v2634
        %v2725 = vpop.f32.mrb[0].mxu0
        %v2726 = vadd.f32 0.0, %v2725
        %v2727 = vpop.f32.mrb[0].mxu0
        %v2728 = vpop.f32.mrb[0].mxu0
        %v2729 = vadd.f32 0.0, %v2728
        %v2730 = vpop.f32.mrb[0].mxu0
        %2731 = vmatprep.mubr.bf16.mxu0 0
        %2732 = vmatmul.mubr.bf16.gmra.mrb[0].mxu0 %v2637
        %v2733 = vpop.f32.mrb[0].mxu0
        %v2734 = vadd.f32 0.0, %v2733
        %v2735 = vpop.f32.mrb[0].mxu0
        %v2736 = vpop.f32.mrb[0].mxu0
        %v2737 = vadd.f32 0.0, %v2736
        %v2738 = vpop.f32.mrb[0].mxu0
        %2739 = vmatprep.mubr.bf16.mxu0 0
        %2740 = vmatmul.mubr.bf16.gmra.mrb[0].mxu0 %v2640
        %v2741 = vpop.f32.mrb[0].mxu0
        %v2742 = vadd.f32 0.0, %v2741
        %v2743 = vpop.f32.mrb[0].mxu0
        %v2744 = vpop.f32.mrb[0].mxu0
        %v2745 = vadd.f32 0.0, %v2744
        %v2746 = vpop.f32.mrb[0].mxu0
        %2747 = vmatprep.mubr.bf16.mxu0 0
        %2748 = vmatmul.mubr.bf16.gmra.mrb[0].mxu0 %v2643
        %v2749 = vpop.f32.mrb[0].mxu0
        %v2750 = vadd.f32 0.0, %v2749
        %v2751 = vpop.f32.mrb[0].mxu0
        %v2752 = vpop.f32.mrb[0].mxu0
        %v2753 = vadd.f32 0.0, %v2752
        %v2754 = vpop.f32.mrb[0].mxu0
        %2755 = vmatprep.mubr.bf16.mxu0 0
        %2756 = vmatmul.mubr.bf16.gmra.mrb[0].mxu0 %v2646
        %v2757 = vpop.f32.mrb[0].mxu0
        %v2758 = vadd.f32 0.0, %v2757
        %v2759 = vpop.f32.mrb[0].mxu0
        %v2760 = vpop.f32.mrb[0].mxu0
        %v2761 = vadd.f32 0.0, %v2760
        %v2762 = vpop.f32.mrb[0].mxu0
        %2763 = vmatprep.mubr.bf16.mxu0 0
        %2764 = vmatmul.mubr.bf16.gmra.mrb[0].mxu0 %v2649
        %v2765 = vpop.f32.mrb[0].mxu0
        %v2766 = vadd.f32 0.0, %v2765
        %v2767 = vpop.f32.mrb[0].mxu0
        %v2768 = vpop.f32.mrb[0].mxu0
        %v2769 = vadd.f32 0.0, %v2768
        %v2770 = vpop.f32.mrb[0].mxu0
        %2771 = vdwg.mxu0
        %v2772 = vmul.f32 %v2710, 0.088388346
        %v2773 = vmul.f32 %v2713, 0.088388346
        %v2774 = vmul.f32 %v2718, 0.088388346
        %v2775 = vmul.f32 %v2721, 0.088388346
        %v2776 = vmul.f32 %v2726, 0.088388346
        %v2777 = vmul.f32 %v2729, 0.088388346
        %v2778 = vmul.f32 %v2734, 0.088388346
        %v2779 = vmul.f32 %v2737, 0.088388346
        %v2780 = vmul.f32 %v2742, 0.088388346
        %v2781 = vmul.f32 %v2745, 0.088388346
        %v2782 = vmul.f32 %v2750, 0.088388346
        %v2783 = vmul.f32 %v2753, 0.088388346
        %v2784 = vmul.f32 %v2758, 0.088388346
        %v2785 = vmul.f32 %v2761, 0.088388346
        %v2786 = vmul.f32 %v2766, 0.088388346
        %v2787 = vmul.f32 %v2769, 0.088388346
        %v2788 = vsel %vm1164, %v2772, -1e+30
        %v2789 = vsel %vm1165, %v2773, -1e+30
        %v2790 = vsel %vm1166, %v2774, -1e+30
        %v2791 = vsel %vm1167, %v2775, -1e+30
        %v2792 = vsel %vm1168, %v2776, -1e+30
        %v2793 = vsel %vm1169, %v2777, -1e+30
        %v2794 = vsel %vm1170, %v2778, -1e+30
        %v2795 = vsel %vm1171, %v2779, -1e+30
        %v2796 = vsel %vm1172, %v2780, -1e+30
        %v2797 = vsel %vm1173, %v2781, -1e+30
        %v2798 = vsel %vm1174, %v2782, -1e+30
        %v2799 = vsel %vm1175, %v2783, -1e+30
        %v2800 = vsel %vm1176, %v2784, -1e+30
        %v2801 = vsel %vm1177, %v2785, -1e+30
        %v2802 = vsel %vm1178, %v2786, -1e+30
        %v2803 = vsel %vm1179, %v2787, -1e+30
        %2804 = vmax.xlane.f32.xlu0 %v2788
        %v2805 = vpop.xlane.xlu0 %2804
        %2806 = vmax.xlane.f32.xlu0 %v2789
        %v2807 = vpop.xlane.xlu0 %2806
        %2808 = vmax.xlane.f32.xlu0 %v2790
        %v2809 = vpop.xlane.xlu0 %2808
        %2810 = vmax.xlane.f32.xlu0 %v2791
        %v2811 = vpop.xlane.xlu0 %2810
        %2812 = vmax.xlane.f32.xlu0 %v2792
        %v2813 = vpop.xlane.xlu0 %2812
        %2814 = vmax.xlane.f32.xlu0 %v2793
        %v2815 = vpop.xlane.xlu0 %2814
        %2816 = vmax.xlane.f32.xlu0 %v2794
        %v2817 = vpop.xlane.xlu0 %2816
        %2818 = vmax.xlane.f32.xlu0 %v2795
        %v2819 = vpop.xlane.xlu0 %2818
        %2820 = vmax.xlane.f32.xlu0 %v2796
        %v2821 = vpop.xlane.xlu0 %2820
        %2822 = vmax.xlane.f32.xlu0 %v2797
        %v2823 = vpop.xlane.xlu0 %2822
        %2824 = vmax.xlane.f32.xlu0 %v2798
        %v2825 = vpop.xlane.xlu0 %2824
        %2826 = vmax.xlane.f32.xlu0 %v2799
        %v2827 = vpop.xlane.xlu0 %2826
        %2828 = vmax.xlane.f32.xlu0 %v2800
        %v2829 = vpop.xlane.xlu0 %2828
        %2830 = vmax.xlane.f32.xlu0 %v2801
        %v2831 = vpop.xlane.xlu0 %2830
        %2832 = vmax.xlane.f32.xlu0 %v2802
        %v2833 = vpop.xlane.xlu0 %2832
        %2834 = vmax.xlane.f32.xlu0 %v2803
        %v2835 = vpop.xlane.xlu0 %2834
        %v2836 = vsub.f32 %v2788, %v2805
        %v2837 = vsub.f32 %v2789, %v2807
        %v2838 = vsub.f32 %v2790, %v2809
        %v2839 = vsub.f32 %v2791, %v2811
        %v2840 = vsub.f32 %v2792, %v2813
        %v2841 = vsub.f32 %v2793, %v2815
        %v2842 = vsub.f32 %v2794, %v2817
        %v2843 = vsub.f32 %v2795, %v2819
        %v2844 = vsub.f32 %v2796, %v2821
        %v2845 = vsub.f32 %v2797, %v2823
        %v2846 = vsub.f32 %v2798, %v2825
        %v2847 = vsub.f32 %v2799, %v2827
        %v2848 = vsub.f32 %v2800, %v2829
        %v2849 = vsub.f32 %v2801, %v2831
        %v2850 = vsub.f32 %v2802, %v2833
        %v2851 = vsub.f32 %v2803, %v2835
        %v2852 = vmul.f32 %v2836, 1.442695
        %v2853 = vpow.pop %v2852
        %v2854 = vmul.f32 %v2837, 1.442695
        %v2855 = vpow.pop %v2854
        %v2856 = vmul.f32 %v2838, 1.442695
        %v2857 = vpow.pop %v2856
        %v2858 = vmul.f32 %v2839, 1.442695
        %v2859 = vpow.pop %v2858
        %v2860 = vmul.f32 %v2840, 1.442695
        %v2861 = vpow.pop %v2860
        %v2862 = vmul.f32 %v2841, 1.442695
        %v2863 = vpow.pop %v2862
        %v2864 = vmul.f32 %v2842, 1.442695
        %v2865 = vpow.pop %v2864
        %v2866 = vmul.f32 %v2843, 1.442695
        %v2867 = vpow.pop %v2866
        %v2868 = vmul.f32 %v2844, 1.442695
        %v2869 = vpow.pop %v2868
        %v2870 = vmul.f32 %v2845, 1.442695
        %v2871 = vpow.pop %v2870
        %v2872 = vmul.f32 %v2846, 1.442695
        %v2873 = vpow.pop %v2872
        %v2874 = vmul.f32 %v2847, 1.442695
        %v2875 = vpow.pop %v2874
        %v2876 = vmul.f32 %v2848, 1.442695
        %v2877 = vpow.pop %v2876
        %v2878 = vmul.f32 %v2849, 1.442695
        %v2879 = vpow.pop %v2878
        %v2880 = vmul.f32 %v2850, 1.442695
        %v2881 = vpow.pop %v2880
        %v2882 = vmul.f32 %v2851, 1.442695
        %v2883 = vpow.pop %v2882
        %2884 = vadd.xlane.f32.xlu0 %v2853
        %v2885 = vpop.xlane.xlu0 %2884
        %2886 = vadd.xlane.f32.xlu0 %v2855
        %v2887 = vpop.xlane.xlu0 %2886
        %2888 = vadd.xlane.f32.xlu0 %v2857
        %v2889 = vpop.xlane.xlu0 %2888
        %2890 = vadd.xlane.f32.xlu0 %v2859
        %v2891 = vpop.xlane.xlu0 %2890
        %2892 = vadd.xlane.f32.xlu0 %v2861
        %v2893 = vpop.xlane.xlu0 %2892
        %2894 = vadd.xlane.f32.xlu0 %v2863
        %v2895 = vpop.xlane.xlu0 %2894
        %2896 = vadd.xlane.f32.xlu0 %v2865
        %v2897 = vpop.xlane.xlu0 %2896
        %2898 = vadd.xlane.f32.xlu0 %v2867
        %v2899 = vpop.xlane.xlu0 %2898
        %2900 = vadd.xlane.f32.xlu0 %v2869
        %v2901 = vpop.xlane.xlu0 %2900
        %2902 = vadd.xlane.f32.xlu0 %v2871
        %v2903 = vpop.xlane.xlu0 %2902
        %2904 = vadd.xlane.f32.xlu0 %v2873
        %v2905 = vpop.xlane.xlu0 %2904
        %2906 = vadd.xlane.f32.xlu0 %v2875
        %v2907 = vpop.xlane.xlu0 %2906
        %2908 = vadd.xlane.f32.xlu0 %v2877
        %v2909 = vpop.xlane.xlu0 %2908
        %2910 = vadd.xlane.f32.xlu0 %v2879
        %v2911 = vpop.xlane.xlu0 %2910
        %2912 = vadd.xlane.f32.xlu0 %v2881
        %v2913 = vpop.xlane.xlu0 %2912
        %2914 = vadd.xlane.f32.xlu0 %v2883
        %v2915 = vpop.xlane.xlu0 %2914
        %v2916 = vpack.c.bf16 %v2855, %v2853
        %v2917 = vpack.c.bf16 %v2859, %v2857
        %v2918 = vpack.c.bf16 %v2863, %v2861
        %v2919 = vpack.c.bf16 %v2867, %v2865
        %v2920 = vpack.c.bf16 %v2871, %v2869
        %v2921 = vpack.c.bf16 %v2875, %v2873
        %v2922 = vpack.c.bf16 %v2879, %v2877
        %v2923 = vpack.c.bf16 %v2883, %v2881
        %v2924 = vrcp.pop %v2885
        %v2925 = vrcp.pop %v2887
        %v2926 = vrcp.pop %v2889
        %v2927 = vrcp.pop %v2891
        %v2928 = vrcp.pop %v2893
        %v2929 = vrcp.pop %v2895
        %v2930 = vrcp.pop %v2897
        %v2931 = vrcp.pop %v2899
        %v2932 = vrcp.pop %v2901
        %v2933 = vrcp.pop %v2903
        %v2934 = vrcp.pop %v2905
        %v2935 = vrcp.pop %v2907
        %v2936 = vrcp.pop %v2909
        %v2937 = vrcp.pop %v2911
        %v2938 = vrcp.pop %v2913
        %v2939 = vrcp.pop %v2915
        %2940 = vrot.lane.b32.xlu0 %v1123, 32
        %v2941 = vpop.permute.xlu0 %2940
        %2942 = vrot.lane.b32.xlu0 %v1126, 32
        %v2943 = vpop.permute.xlu0 %2942
        %2944 = vrot.lane.b32.xlu0 %v1129, 32
        %v2945 = vpop.permute.xlu0 %2944
        %2946 = vrot.lane.b32.xlu0 %v1132, 32
        %v2947 = vpop.permute.xlu0 %2946
        %2948 = vrot.lane.b32.xlu0 %v1135, 32
        %v2949 = vpop.permute.xlu0 %2948
        %2950 = vrot.lane.b32.xlu0 %v1138, 32
        %v2951 = vpop.permute.xlu0 %2950
        %2952 = vrot.lane.b32.xlu0 %v1141, 32
        %v2953 = vpop.permute.xlu0 %2952
        %2954 = vrot.lane.b32.xlu0 %v1144, 32
        %v2955 = vpop.permute.xlu0 %2954
        %2964 = vmatprep.subr.bf16.mxu0 0
        %2965 = vmatpush1.bf16.msra.mxu0 %v2941
        %2966 = vmatprep.subr.bf16.mxu0 0
        %2967 = vmatpush1.bf16.msra.mxu0 %v2943
        %2968 = vmatprep.subr.bf16.mxu0 0
        %2969 = vmatpush1.bf16.msra.mxu0 %v2945
        %2970 = vmatprep.subr.bf16.mxu0 0
        %2971 = vmatpush1.bf16.msra.mxu0 %v2947
        %2972 = vmatprep.subr.bf16.mxu0 0
        %2973 = vmatpush1.bf16.msra.mxu0 %v2949
        %2974 = vmatprep.subr.bf16.mxu0 0
        %2975 = vmatpush1.bf16.msra.mxu0 %v2951
        %2976 = vmatprep.subr.bf16.mxu0 0
        %2977 = vmatpush1.bf16.msra.mxu0 %v2953
        %2978 = vmatprep.subr.bf16.mxu0 0
        %2979 = vmatpush1.bf16.msra.mxu0 %v2955
        %2980 = vmatprep.subr.bf16.mxu0 0
        %2981 = vmatpush1.bf16.msra.mxu0 0
        %2982 = vmatprep.subr.bf16.mxu0 0
        %2983 = vmatpush1.bf16.msra.mxu0 0
        %2984 = vmatprep.subr.bf16.mxu0 0
        %2985 = vmatpush1.bf16.msra.mxu0 0
        %2986 = vmatprep.subr.bf16.mxu0 0
        %2987 = vmatpush1.bf16.msra.mxu0 0
        %2988 = vmatprep.subr.bf16.mxu0 0
        %2989 = vmatpush1.bf16.msra.mxu0 0
        %2990 = vmatprep.subr.bf16.mxu0 0
        %2991 = vmatpush1.bf16.msra.mxu0 0
        %2992 = vmatprep.subr.bf16.mxu0 0
        %2993 = vmatpush1.bf16.msra.mxu0 0
        %2994 = vmatprep.subr.bf16.mxu0 0
        %2995 = vmatpush1.bf16.msra.mxu0 0
        %2996 = vmatprep.mubr.bf16.mxu0 0
        %2997 = vmatmul.mubr.bf16.gmra.mrb[0].mxu0 %v2916
        %v2998 = vpop.f32.mrb[0].mxu0
        %v2999 = vadd.f32 0.0, %v2998
        %v3000 = vpop.f32.mrb[0].mxu0
        %v3001 = vpop.f32.mrb[0].mxu0
        %v3002 = vadd.f32 0.0, %v3001
        %v3003 = vpop.f32.mrb[0].mxu0
        %3004 = vmatprep.mubr.bf16.mxu0 0
        %3005 = vmatmul.mubr.bf16.gmra.mrb[0].mxu0 %v2917
        %v3006 = vpop.f32.mrb[0].mxu0
        %v3007 = vadd.f32 0.0, %v3006
        %v3008 = vpop.f32.mrb[0].mxu0
        %v3009 = vpop.f32.mrb[0].mxu0
        %v3010 = vadd.f32 0.0, %v3009
        %v3011 = vpop.f32.mrb[0].mxu0
        %3012 = vmatprep.mubr.bf16.mxu0 0
        %3013 = vmatmul.mubr.bf16.gmra.mrb[0].mxu0 %v2918
        %v3014 = vpop.f32.mrb[0].mxu0
        %v3015 = vadd.f32 0.0, %v3014
        %v3016 = vpop.f32.mrb[0].mxu0
        %v3017 = vpop.f32.mrb[0].mxu0
        %v3018 = vadd.f32 0.0, %v3017
        %v3019 = vpop.f32.mrb[0].mxu0
        %3020 = vmatprep.mubr.bf16.mxu0 0
        %3021 = vmatmul.mubr.bf16.gmra.mrb[0].mxu0 %v2919
        %v3022 = vpop.f32.mrb[0].mxu0
        %v3023 = vadd.f32 0.0, %v3022
        %v3024 = vpop.f32.mrb[0].mxu0
        %v3025 = vpop.f32.mrb[0].mxu0
        %v3026 = vadd.f32 0.0, %v3025
        %v3027 = vpop.f32.mrb[0].mxu0
        %3028 = vmatprep.mubr.bf16.mxu0 0
        %3029 = vmatmul.mubr.bf16.gmra.mrb[0].mxu0 %v2920
        %v3030 = vpop.f32.mrb[0].mxu0
        %v3031 = vadd.f32 0.0, %v3030
        %v3032 = vpop.f32.mrb[0].mxu0
        %v3033 = vpop.f32.mrb[0].mxu0
        %v3034 = vadd.f32 0.0, %v3033
        %v3035 = vpop.f32.mrb[0].mxu0
        %3036 = vmatprep.mubr.bf16.mxu0 0
        %3037 = vmatmul.mubr.bf16.gmra.mrb[0].mxu0 %v2921
        %v3038 = vpop.f32.mrb[0].mxu0
        %v3039 = vadd.f32 0.0, %v3038
        %v3040 = vpop.f32.mrb[0].mxu0
        %v3041 = vpop.f32.mrb[0].mxu0
        %v3042 = vadd.f32 0.0, %v3041
        %v3043 = vpop.f32.mrb[0].mxu0
        %3044 = vmatprep.mubr.bf16.mxu0 0
        %3045 = vmatmul.mubr.bf16.gmra.mrb[0].mxu0 %v2922
        %v3046 = vpop.f32.mrb[0].mxu0
        %v3047 = vadd.f32 0.0, %v3046
        %v3048 = vpop.f32.mrb[0].mxu0
        %v3049 = vpop.f32.mrb[0].mxu0
        %v3050 = vadd.f32 0.0, %v3049
        %v3051 = vpop.f32.mrb[0].mxu0
        %3052 = vmatprep.mubr.bf16.mxu0 0
        %3053 = vmatmul.mubr.bf16.gmra.mrb[0].mxu0 %v2923
        %v3054 = vpop.f32.mrb[0].mxu0
        %v3055 = vadd.f32 0.0, %v3054
        %v3056 = vpop.f32.mrb[0].mxu0
        %v3057 = vpop.f32.mrb[0].mxu0
        %v3058 = vadd.f32 0.0, %v3057
        %v3059 = vpop.f32.mrb[0].mxu0
        %3060 = vdwg.mxu0
        %v3061 = vmul.f32 %v2999, %v2924
        %v3062 = vmul.f32 %v3002, %v2925
        %v3063 = vmul.f32 %v3007, %v2926
        %v3064 = vmul.f32 %v3010, %v2927
        %v3065 = vmul.f32 %v3015, %v2928
        %v3066 = vmul.f32 %v3018, %v2929
        %v3067 = vmul.f32 %v3023, %v2930
        %v3068 = vmul.f32 %v3026, %v2931
        %v3069 = vmul.f32 %v3031, %v2932
        %v3070 = vmul.f32 %v3034, %v2933
        %v3071 = vmul.f32 %v3039, %v2934
        %v3072 = vmul.f32 %v3042, %v2935
        %v3073 = vmul.f32 %v3047, %v2936
        %v3074 = vmul.f32 %v3050, %v2937
        %v3075 = vmul.f32 %v3055, %v2938
        %v3076 = vmul.f32 %v3058, %v2939
        %3093 = vrot.lane.b32.xlu0 %v2097, 32
        %v3094 = vpop.permute.xlu0 %3093
        %3095 = vrot.lane.b32.xlu0 %v2098, 32
        %v3096 = vpop.permute.xlu0 %3095
        %3097 = vrot.lane.b32.xlu0 %v2099, 32
        %v3098 = vpop.permute.xlu0 %3097
        %3099 = vrot.lane.b32.xlu0 %v2100, 32
        %v3100 = vpop.permute.xlu0 %3099
        %3101 = vrot.lane.b32.xlu0 %v2101, 32
        %v3102 = vpop.permute.xlu0 %3101
        %3103 = vrot.lane.b32.xlu0 %v2102, 32
        %v3104 = vpop.permute.xlu0 %3103
        %3105 = vrot.lane.b32.xlu0 %v2103, 32
        %v3106 = vpop.permute.xlu0 %3105
        %3107 = vrot.lane.b32.xlu0 %v2104, 32
        %v3108 = vpop.permute.xlu0 %3107
        %3109 = vrot.lane.b32.xlu0 %v2105, 32
        %v3110 = vpop.permute.xlu0 %3109
        %3111 = vrot.lane.b32.xlu0 %v2106, 32
        %v3112 = vpop.permute.xlu0 %3111
        %3113 = vrot.lane.b32.xlu0 %v2107, 32
        %v3114 = vpop.permute.xlu0 %3113
        %3115 = vrot.lane.b32.xlu0 %v2108, 32
        %v3116 = vpop.permute.xlu0 %3115
        %3117 = vrot.lane.b32.xlu0 %v2109, 32
        %v3118 = vpop.permute.xlu0 %3117
        %3119 = vrot.lane.b32.xlu0 %v2110, 32
        %v3120 = vpop.permute.xlu0 %3119
        %3121 = vrot.lane.b32.xlu0 %v2111, 32
        %v3122 = vpop.permute.xlu0 %3121
        %3123 = vrot.lane.b32.xlu0 %v2112, 32
        %v3124 = vpop.permute.xlu0 %3123
        %3157 = vrot.lane.b32.xlu0 %v2579, 64
        %v3158 = vpop.permute.xlu0 %3157
        %3159 = vrot.lane.b32.xlu0 %v2580, 64
        %v3160 = vpop.permute.xlu0 %3159
        %3161 = vrot.lane.b32.xlu0 %v2581, 64
        %v3162 = vpop.permute.xlu0 %3161
        %3163 = vrot.lane.b32.xlu0 %v2582, 64
        %v3164 = vpop.permute.xlu0 %3163
        %3165 = vrot.lane.b32.xlu0 %v2583, 64
        %v3166 = vpop.permute.xlu0 %3165
        %3167 = vrot.lane.b32.xlu0 %v2584, 64
        %v3168 = vpop.permute.xlu0 %3167
        %3169 = vrot.lane.b32.xlu0 %v2585, 64
        %v3170 = vpop.permute.xlu0 %3169
        %3171 = vrot.lane.b32.xlu0 %v2586, 64
        %v3172 = vpop.permute.xlu0 %3171
        %3173 = vrot.lane.b32.xlu0 %v2587, 64
        %v3174 = vpop.permute.xlu0 %3173
        %3175 = vrot.lane.b32.xlu0 %v2588, 64
        %v3176 = vpop.permute.xlu0 %3175
        %3177 = vrot.lane.b32.xlu0 %v2589, 64
        %v3178 = vpop.permute.xlu0 %3177
        %3179 = vrot.lane.b32.xlu0 %v2590, 64
        %v3180 = vpop.permute.xlu0 %3179
        %3181 = vrot.lane.b32.xlu0 %v2591, 64
        %v3182 = vpop.permute.xlu0 %3181
        %3183 = vrot.lane.b32.xlu0 %v2592, 64
        %v3184 = vpop.permute.xlu0 %3183
        %3185 = vrot.lane.b32.xlu0 %v2593, 64
        %v3186 = vpop.permute.xlu0 %3185
        %3187 = vrot.lane.b32.xlu0 %v2594, 64
        %v3188 = vpop.permute.xlu0 %3187
        %3221 = vrot.lane.b32.xlu0 %v3061, 96
        %v3222 = vpop.permute.xlu0 %3221
        %3223 = vrot.lane.b32.xlu0 %v3062, 96
        %v3224 = vpop.permute.xlu0 %3223
        %3225 = vrot.lane.b32.xlu0 %v3063, 96
        %v3226 = vpop.permute.xlu0 %3225
        %3227 = vrot.lane.b32.xlu0 %v3064, 96
        %v3228 = vpop.permute.xlu0 %3227
        %3229 = vrot.lane.b32.xlu0 %v3065, 96
        %v3230 = vpop.permute.xlu0 %3229
        %3231 = vrot.lane.b32.xlu0 %v3066, 96
        %v3232 = vpop.permute.xlu0 %3231
        %3233 = vrot.lane.b32.xlu0 %v3067, 96
        %v3234 = vpop.permute.xlu0 %3233
        %3235 = vrot.lane.b32.xlu0 %v3068, 96
        %v3236 = vpop.permute.xlu0 %3235
        %3237 = vrot.lane.b32.xlu0 %v3069, 96
        %v3238 = vpop.permute.xlu0 %3237
        %3239 = vrot.lane.b32.xlu0 %v3070, 96
        %v3240 = vpop.permute.xlu0 %3239
        %3241 = vrot.lane.b32.xlu0 %v3071, 96
        %v3242 = vpop.permute.xlu0 %3241
        %3243 = vrot.lane.b32.xlu0 %v3072, 96
        %v3244 = vpop.permute.xlu0 %3243
        %3245 = vrot.lane.b32.xlu0 %v3073, 96
        %v3246 = vpop.permute.xlu0 %3245
        %3247 = vrot.lane.b32.xlu0 %v3074, 96
        %v3248 = vpop.permute.xlu0 %3247
        %3249 = vrot.lane.b32.xlu0 %v3075, 96
        %v3250 = vpop.permute.xlu0 %3249
        %3251 = vrot.lane.b32.xlu0 %v3076, 96
        %v3252 = vpop.permute.xlu0 %3251
        %v3269 = vsel %vm1180, %v1591, %v3094
        %v3270 = vsel %vm1180, %v1592, %v3096
        %v3271 = vsel %vm1180, %v1593, %v3098
        %v3272 = vsel %vm1180, %v1594, %v3100
        %v3273 = vsel %vm1180, %v1595, %v3102
        %v3274 = vsel %vm1180, %v1596, %v3104
        %v3275 = vsel %vm1180, %v1597, %v3106
        %v3276 = vsel %vm1180, %v1598, %v3108
        %v3277 = vsel %vm1180, %v1599, %v3110
        %v3278 = vsel %vm1180, %v1600, %v3112
        %v3279 = vsel %vm1180, %v1601, %v3114
        %v3280 = vsel %vm1180, %v1602, %v3116
        %v3281 = vsel %vm1180, %v1603, %v3118
        %v3282 = vsel %vm1180, %v1604, %v3120
        %v3283 = vsel %vm1180, %v1605, %v3122
        %v3284 = vsel %vm1180, %v1606, %v3124
        %vm3285 = vcmask 523264
        %v3286 = vsel %vm3285, %v3269, %v3158
        %v3287 = vsel %vm3285, %v3270, %v3160
        %v3288 = vsel %vm3285, %v3271, %v3162
        %v3289 = vsel %vm3285, %v3272, %v3164
        %v3290 = vsel %vm3285, %v3273, %v3166
        %v3291 = vsel %vm3285, %v3274, %v3168
        %v3292 = vsel %vm3285, %v3275, %v3170
        %v3293 = vsel %vm3285, %v3276, %v3172
        %v3294 = vsel %vm3285, %v3277, %v3174
        %v3295 = vsel %vm3285, %v3278, %v3176
        %v3296 = vsel %vm3285, %v3279, %v3178
        %v3297 = vsel %vm3285, %v3280, %v3180
        %v3298 = vsel %vm3285, %v3281, %v3182
        %v3299 = vsel %vm3285, %v3282, %v3184
        %v3300 = vsel %vm3285, %v3283, %v3186
        %v3301 = vsel %vm3285, %v3284, %v3188
        %vm3302 = vcmask 785408
        %v3303 = vsel %vm3302, %v3286, %v3222
        %v3304 = vsel %vm3302, %v3287, %v3224
        %v3305 = vsel %vm3302, %v3288, %v3226
        %v3306 = vsel %vm3302, %v3289, %v3228
        %v3307 = vsel %vm3302, %v3290, %v3230
        %v3308 = vsel %vm3302, %v3291, %v3232
        %v3309 = vsel %vm3302, %v3292, %v3234
        %v3310 = vsel %vm3302, %v3293, %v3236
        %v3311 = vsel %vm3302, %v3294, %v3238
        %v3312 = vsel %vm3302, %v3295, %v3240
        %v3313 = vsel %vm3302, %v3296, %v3242
        %v3314 = vsel %vm3302, %v3297, %v3244
        %v3315 = vsel %vm3302, %v3298, %v3246
        %v3316 = vsel %vm3302, %v3299, %v3248
        %v3317 = vsel %vm3302, %v3300, %v3250
        %v3318 = vsel %vm3302, %v3301, %v3252
        %v3319 = vpack.c.bf16 %v3304, %v3303
        %v3320 = vpack.c.bf16 %v3306, %v3305
        %v3321 = vpack.c.bf16 %v3308, %v3307
        %v3322 = vpack.c.bf16 %v3310, %v3309
        %v3323 = vpack.c.bf16 %v3312, %v3311
        %v3324 = vpack.c.bf16 %v3314, %v3313
        %v3325 = vpack.c.bf16 %v3316, %v3315
        %v3326 = vpack.c.bf16 %v3318, %v3317
        %v3327 = vld [vmem:[#allocation7] sm:$0xf]
        %v3328 = vld [vmem:[#allocation7 + $0x4] sm:$0xf]
        %v3329 = vld [vmem:[#allocation7 + $0x8] sm:$0xf]
        %v3330 = vld [vmem:[#allocation7 + $0xc] sm:$0xf]
        %v3331 = vld [vmem:[#allocation7 + $0x10] sm:$0xf]
        %v3332 = vld [vmem:[#allocation7 + $0x14] sm:$0xf]
        %v3333 = vld [vmem:[#allocation7 + $0x18] sm:$0xf]
        %v3334 = vld [vmem:[#allocation7 + $0x1c] sm:$0xf]
        %v3335 = vld [vmem:[#allocation7 + $0x20] sm:$0xf]
        %v3336 = vld [vmem:[#allocation7 + $0x24] sm:$0xf]
        %v3337 = vld [vmem:[#allocation7 + $0x28] sm:$0xf]
        %v3338 = vld [vmem:[#allocation7 + $0x2c] sm:$0xf]
        %v3339 = vld [vmem:[#allocation7 + $0x30] sm:$0xf]
        %v3340 = vld [vmem:[#allocation7 + $0x34] sm:$0xf]
        %v3341 = vld [vmem:[#allocation7 + $0x38] sm:$0xf]
        %v3342 = vld [vmem:[#allocation7 + $0x3c] sm:$0xf]
        %v3343 = vld [vmem:[%s5] sm:$0x1]
        %v3345 = vlaneseq
        %v3346 = vshrl.u32 %v3345, 7
        %v3347 = vsub.s32 0, %v3346
        %v3348 = vrot.slane %v3343, %v3347
        %v3366 = vunpack.c.l.b16 %v3327
        %v3367 = vunpack.c.l.b16 %v3328
        %v3368 = vunpack.c.l.b16 %v3329
        %v3369 = vunpack.c.l.b16 %v3330
        %v3370 = vunpack.c.l.b16 %v3331
        %v3371 = vunpack.c.l.b16 %v3332
        %v3372 = vunpack.c.l.b16 %v3333
        %v3373 = vunpack.c.l.b16 %v3334
        %v3374 = vunpack.c.l.b16 %v3335
        %v3375 = vunpack.c.l.b16 %v3336
        %v3376 = vunpack.c.l.b16 %v3337
        %v3377 = vunpack.c.l.b16 %v3338
        %v3378 = vunpack.c.l.b16 %v3339
        %v3379 = vunpack.c.l.b16 %v3340
        %v3380 = vunpack.c.l.b16 %v3341
        %v3381 = vunpack.c.l.b16 %v3342
        %v3382 = vpack.c.b16 %v3367, %v3366
        %v3383 = vpack.c.b16 %v3369, %v3368
        %v3384 = vpack.c.b16 %v3371, %v3370
        %v3385 = vpack.c.b16 %v3373, %v3372
        %v3386 = vpack.c.b16 %v3375, %v3374
        %v3387 = vpack.c.b16 %v3377, %v3376
        %v3388 = vpack.c.b16 %v3379, %v3378
        %v3389 = vpack.c.b16 %v3381, %v3380
        %3398 = vmatprep.subr.bf16.mxu0 0
        %3399 = vmatpush1.bf16.msra.mxu0 %v3382
        %3400 = vmatprep.subr.bf16.mxu0 0
        %3401 = vmatpush1.bf16.msra.mxu0 %v3383
        %3402 = vmatprep.subr.bf16.mxu0 0
        %3403 = vmatpush1.bf16.msra.mxu0 %v3384
        %3404 = vmatprep.subr.bf16.mxu0 0
        %3405 = vmatpush1.bf16.msra.mxu0 %v3385
        %3406 = vmatprep.subr.bf16.mxu0 0
        %3407 = vmatpush1.bf16.msra.mxu0 %v3386
        %3408 = vmatprep.subr.bf16.mxu0 0
        %3409 = vmatpush1.bf16.msra.mxu0 %v3387
        %3410 = vmatprep.subr.bf16.mxu0 0
        %3411 = vmatpush1.bf16.msra.mxu0 %v3388
        %3412 = vmatprep.subr.bf16.mxu0 0
        %3413 = vmatpush1.bf16.msra.mxu0 %v3389
        %3414 = vmatprep.subr.bf16.mxu0 0
        %3415 = vmatpush1.bf16.msra.mxu0 0
        %3416 = vmatprep.subr.bf16.mxu0 0
        %3417 = vmatpush1.bf16.msra.mxu0 0
        %3418 = vmatprep.subr.bf16.mxu0 0
        %3419 = vmatpush1.bf16.msra.mxu0 0
        %3420 = vmatprep.subr.bf16.mxu0 0
        %3421 = vmatpush1.bf16.msra.mxu0 0
        %3422 = vmatprep.subr.bf16.mxu0 0
        %3423 = vmatpush1.bf16.msra.mxu0 0
        %3424 = vmatprep.subr.bf16.mxu0 0
        %3425 = vmatpush1.bf16.msra.mxu0 0
        %3426 = vmatprep.subr.bf16.mxu0 0
        %3427 = vmatpush1.bf16.msra.mxu0 0
        %3428 = vmatprep.subr.bf16.mxu0 0
        %3429 = vmatpush1.bf16.msra.mxu0 0
        %3430 = vmatprep.mubr.bf16.mxu0 0
        %3431 = vmatmul.mubr.bf16.gmra.mrb[0].mxu0 %v3319
        %v3432 = vpop.f32.mrb[0].mxu0
        %v3433 = vadd.f32 %v3348, %v3432
        %v3434 = vpop.f32.mrb[0].mxu0
        %v3435 = vpop.f32.mrb[0].mxu0
        %v3436 = vadd.f32 %v3348, %v3435
        %v3437 = vpop.f32.mrb[0].mxu0
        %3438 = vmatprep.mubr.bf16.mxu0 0
        %3439 = vmatmul.mubr.bf16.gmra.mrb[0].mxu0 %v3320
        %v3440 = vpop.f32.mrb[0].mxu0
        %v3441 = vadd.f32 %v3348, %v3440
        %v3442 = vpop.f32.mrb[0].mxu0
        %v3443 = vpop.f32.mrb[0].mxu0
        %v3444 = vadd.f32 %v3348, %v3443
        %v3445 = vpop.f32.mrb[0].mxu0
        %3446 = vmatprep.mubr.bf16.mxu0 0
        %3447 = vmatmul.mubr.bf16.gmra.mrb[0].mxu0 %v3321
        %v3448 = vpop.f32.mrb[0].mxu0
        %v3449 = vadd.f32 %v3348, %v3448
        %v3450 = vpop.f32.mrb[0].mxu0
        %v3451 = vpop.f32.mrb[0].mxu0
        %v3452 = vadd.f32 %v3348, %v3451
        %v3453 = vpop.f32.mrb[0].mxu0
        %3454 = vmatprep.mubr.bf16.mxu0 0
        %3455 = vmatmul.mubr.bf16.gmra.mrb[0].mxu0 %v3322
        %v3456 = vpop.f32.mrb[0].mxu0
        %v3457 = vadd.f32 %v3348, %v3456
        %v3458 = vpop.f32.mrb[0].mxu0
        %v3459 = vpop.f32.mrb[0].mxu0
        %v3460 = vadd.f32 %v3348, %v3459
        %v3461 = vpop.f32.mrb[0].mxu0
        %3462 = vmatprep.mubr.bf16.mxu0 0
        %3463 = vmatmul.mubr.bf16.gmra.mrb[0].mxu0 %v3323
        %v3464 = vpop.f32.mrb[0].mxu0
        %v3465 = vadd.f32 %v3348, %v3464
        %v3466 = vpop.f32.mrb[0].mxu0
        %v3467 = vpop.f32.mrb[0].mxu0
        %v3468 = vadd.f32 %v3348, %v3467
        %v3469 = vpop.f32.mrb[0].mxu0
        %3470 = vmatprep.mubr.bf16.mxu0 0
        %3471 = vmatmul.mubr.bf16.gmra.mrb[0].mxu0 %v3324
        %v3472 = vpop.f32.mrb[0].mxu0
        %v3473 = vadd.f32 %v3348, %v3472
        %v3474 = vpop.f32.mrb[0].mxu0
        %v3475 = vpop.f32.mrb[0].mxu0
        %v3476 = vadd.f32 %v3348, %v3475
        %v3477 = vpop.f32.mrb[0].mxu0
        %3478 = vmatprep.mubr.bf16.mxu0 0
        %3479 = vmatmul.mubr.bf16.gmra.mrb[0].mxu0 %v3325
        %v3480 = vpop.f32.mrb[0].mxu0
        %v3481 = vadd.f32 %v3348, %v3480
        %v3482 = vpop.f32.mrb[0].mxu0
        %v3483 = vpop.f32.mrb[0].mxu0
        %v3484 = vadd.f32 %v3348, %v3483
        %v3485 = vpop.f32.mrb[0].mxu0
        %3486 = vmatprep.mubr.bf16.mxu0 0
        %3487 = vmatmul.mubr.bf16.gmra.mrb[0].mxu0 %v3326
        %v3488 = vpop.f32.mrb[0].mxu0
        %v3489 = vadd.f32 %v3348, %v3488
        %v3490 = vpop.f32.mrb[0].mxu0
        %v3491 = vpop.f32.mrb[0].mxu0
        %v3492 = vadd.f32 %v3348, %v3491
        %v3493 = vpop.f32.mrb[0].mxu0
        %3494 = vdwg.mxu0
        %v3495 = vadd.f32 %v727, %v3433
        %v3496 = vadd.f32 %v728, %v3436
        %v3497 = vadd.f32 %v729, %v3441
        %v3498 = vadd.f32 %v730, %v3444
        %v3499 = vadd.f32 %v731, %v3449
        %v3500 = vadd.f32 %v732, %v3452
        %v3501 = vadd.f32 %v733, %v3457
        %v3502 = vadd.f32 %v734, %v3460
        %v3503 = vadd.f32 %v735, %v3465
        %v3504 = vadd.f32 %v736, %v3468
        %v3505 = vadd.f32 %v737, %v3473
        %v3506 = vadd.f32 %v738, %v3476
        %v3507 = vadd.f32 %v739, %v3481
        %v3508 = vadd.f32 %v740, %v3484
        %v3509 = vadd.f32 %v741, %v3489
        %v3510 = vadd.f32 %v742, %v3492
        %v3511 = vld [vmem:[%s6] sm:$0x1]
        %v3512 = vld [vmem:[%s7] sm:$0x1]
        %3513 = vadd.xlane.f32.xlu0 %v3495
        %v3514 = vpop.xlane.xlu0 %3513
        %3515 = vadd.xlane.f32.xlu0 %v3496
        %v3516 = vpop.xlane.xlu0 %3515
        %3517 = vadd.xlane.f32.xlu0 %v3497
        %v3518 = vpop.xlane.xlu0 %3517
        %3519 = vadd.xlane.f32.xlu0 %v3498
        %v3520 = vpop.xlane.xlu0 %3519
        %3521 = vadd.xlane.f32.xlu0 %v3499
        %v3522 = vpop.xlane.xlu0 %3521
        %3523 = vadd.xlane.f32.xlu0 %v3500
        %v3524 = vpop.xlane.xlu0 %3523
        %3525 = vadd.xlane.f32.xlu0 %v3501
        %v3526 = vpop.xlane.xlu0 %3525
        %3527 = vadd.xlane.f32.xlu0 %v3502
        %v3528 = vpop.xlane.xlu0 %3527
        %3529 = vadd.xlane.f32.xlu0 %v3503
        %v3530 = vpop.xlane.xlu0 %3529
        %3531 = vadd.xlane.f32.xlu0 %v3504
        %v3532 = vpop.xlane.xlu0 %3531
        %3533 = vadd.xlane.f32.xlu0 %v3505
        %v3534 = vpop.xlane.xlu0 %3533
        %3535 = vadd.xlane.f32.xlu0 %v3506
        %v3536 = vpop.xlane.xlu0 %3535
        %3537 = vadd.xlane.f32.xlu0 %v3507
        %v3538 = vpop.xlane.xlu0 %3537
        %3539 = vadd.xlane.f32.xlu0 %v3508
        %v3540 = vpop.xlane.xlu0 %3539
        %3541 = vadd.xlane.f32.xlu0 %v3509
        %v3542 = vpop.xlane.xlu0 %3541
        %3543 = vadd.xlane.f32.xlu0 %v3510
        %v3544 = vpop.xlane.xlu0 %3543
        %v3545 = vmul.f32 %v3514, %v554
        %v3546 = vmul.f32 %v3516, %v554
        %v3547 = vmul.f32 %v3518, %v554
        %v3548 = vmul.f32 %v3520, %v554
        %v3549 = vmul.f32 %v3522, %v554
        %v3550 = vmul.f32 %v3524, %v554
        %v3551 = vmul.f32 %v3526, %v554
        %v3552 = vmul.f32 %v3528, %v554
        %v3553 = vmul.f32 %v3530, %v554
        %v3554 = vmul.f32 %v3532, %v554
        %v3555 = vmul.f32 %v3534, %v554
        %v3556 = vmul.f32 %v3536, %v554
        %v3557 = vmul.f32 %v3538, %v554
        %v3558 = vmul.f32 %v3540, %v554
        %v3559 = vmul.f32 %v3542, %v554
        %v3560 = vmul.f32 %v3544, %v554
        %v3561 = vsub.f32 %v3495, %v3545
        %v3562 = vsub.f32 %v3496, %v3546
        %v3563 = vsub.f32 %v3497, %v3547
        %v3564 = vsub.f32 %v3498, %v3548
        %v3565 = vsub.f32 %v3499, %v3549
        %v3566 = vsub.f32 %v3500, %v3550
        %v3567 = vsub.f32 %v3501, %v3551
        %v3568 = vsub.f32 %v3502, %v3552
        %v3569 = vsub.f32 %v3503, %v3553
        %v3570 = vsub.f32 %v3504, %v3554
        %v3571 = vsub.f32 %v3505, %v3555
        %v3572 = vsub.f32 %v3506, %v3556
        %v3573 = vsub.f32 %v3507, %v3557
        %v3574 = vsub.f32 %v3508, %v3558
        %v3575 = vsub.f32 %v3509, %v3559
        %v3576 = vsub.f32 %v3510, %v3560
        %v3577 = vmul.f32 %v3561, %v3561
        %v3578 = vmul.f32 %v3562, %v3562
        %v3579 = vmul.f32 %v3563, %v3563
        %v3580 = vmul.f32 %v3564, %v3564
        %v3581 = vmul.f32 %v3565, %v3565
        %v3582 = vmul.f32 %v3566, %v3566
        %v3583 = vmul.f32 %v3567, %v3567
        %v3584 = vmul.f32 %v3568, %v3568
        %v3585 = vmul.f32 %v3569, %v3569
        %v3586 = vmul.f32 %v3570, %v3570
        %v3587 = vmul.f32 %v3571, %v3571
        %v3588 = vmul.f32 %v3572, %v3572
        %v3589 = vmul.f32 %v3573, %v3573
        %v3590 = vmul.f32 %v3574, %v3574
        %v3591 = vmul.f32 %v3575, %v3575
        %v3592 = vmul.f32 %v3576, %v3576
        %3593 = vadd.xlane.f32.xlu0 %v3577
        %v3594 = vpop.xlane.xlu0 %3593
        %3595 = vadd.xlane.f32.xlu0 %v3578
        %v3596 = vpop.xlane.xlu0 %3595
        %3597 = vadd.xlane.f32.xlu0 %v3579
        %v3598 = vpop.xlane.xlu0 %3597
        %3599 = vadd.xlane.f32.xlu0 %v3580
        %v3600 = vpop.xlane.xlu0 %3599
        %3601 = vadd.xlane.f32.xlu0 %v3581
        %v3602 = vpop.xlane.xlu0 %3601
        %3603 = vadd.xlane.f32.xlu0 %v3582
        %v3604 = vpop.xlane.xlu0 %3603
        %3605 = vadd.xlane.f32.xlu0 %v3583
        %v3606 = vpop.xlane.xlu0 %3605
        %3607 = vadd.xlane.f32.xlu0 %v3584
        %v3608 = vpop.xlane.xlu0 %3607
        %3609 = vadd.xlane.f32.xlu0 %v3585
        %v3610 = vpop.xlane.xlu0 %3609
        %3611 = vadd.xlane.f32.xlu0 %v3586
        %v3612 = vpop.xlane.xlu0 %3611
        %3613 = vadd.xlane.f32.xlu0 %v3587
        %v3614 = vpop.xlane.xlu0 %3613
        %3615 = vadd.xlane.f32.xlu0 %v3588
        %v3616 = vpop.xlane.xlu0 %3615
        %3617 = vadd.xlane.f32.xlu0 %v3589
        %v3618 = vpop.xlane.xlu0 %3617
        %3619 = vadd.xlane.f32.xlu0 %v3590
        %v3620 = vpop.xlane.xlu0 %3619
        %3621 = vadd.xlane.f32.xlu0 %v3591
        %v3622 = vpop.xlane.xlu0 %3621
        %3623 = vadd.xlane.f32.xlu0 %v3592
        %v3624 = vpop.xlane.xlu0 %3623
        %v3625 = vmul.f32 %v3594, %v554
        %v3626 = vmul.f32 %v3596, %v554
        %v3627 = vmul.f32 %v3598, %v554
        %v3628 = vmul.f32 %v3600, %v554
        %v3629 = vmul.f32 %v3602, %v554
        %v3630 = vmul.f32 %v3604, %v554
        %v3631 = vmul.f32 %v3606, %v554
        %v3632 = vmul.f32 %v3608, %v554
        %v3633 = vmul.f32 %v3610, %v554
        %v3634 = vmul.f32 %v3612, %v554
        %v3635 = vmul.f32 %v3614, %v554
        %v3636 = vmul.f32 %v3616, %v554
        %v3637 = vmul.f32 %v3618, %v554
        %v3638 = vmul.f32 %v3620, %v554
        %v3639 = vmul.f32 %v3622, %v554
        %v3640 = vmul.f32 %v3624, %v554
        %v3641 = vadd.f32 %v3625, 1e-05
        %v3642 = vadd.f32 %v3626, 1e-05
        %v3643 = vadd.f32 %v3627, 1e-05
        %v3644 = vadd.f32 %v3628, 1e-05
        %v3645 = vadd.f32 %v3629, 1e-05
        %v3646 = vadd.f32 %v3630, 1e-05
        %v3647 = vadd.f32 %v3631, 1e-05
        %v3648 = vadd.f32 %v3632, 1e-05
        %v3649 = vadd.f32 %v3633, 1e-05
        %v3650 = vadd.f32 %v3634, 1e-05
        %v3651 = vadd.f32 %v3635, 1e-05
        %v3652 = vadd.f32 %v3636, 1e-05
        %v3653 = vadd.f32 %v3637, 1e-05
        %v3654 = vadd.f32 %v3638, 1e-05
        %v3655 = vadd.f32 %v3639, 1e-05
        %v3656 = vadd.f32 %v3640, 1e-05
        %v3657 = vrsqrt.pop %v3641
        %v3658 = vrsqrt.pop %v3642
        %v3659 = vrsqrt.pop %v3643
        %v3660 = vrsqrt.pop %v3644
        %v3661 = vrsqrt.pop %v3645
        %v3662 = vrsqrt.pop %v3646
        %v3663 = vrsqrt.pop %v3647
        %v3664 = vrsqrt.pop %v3648
        %v3665 = vrsqrt.pop %v3649
        %v3666 = vrsqrt.pop %v3650
        %v3667 = vrsqrt.pop %v3651
        %v3668 = vrsqrt.pop %v3652
        %v3669 = vrsqrt.pop %v3653
        %v3670 = vrsqrt.pop %v3654
        %v3671 = vrsqrt.pop %v3655
        %v3672 = vrsqrt.pop %v3656
        %v3673 = vmul.f32 %v3561, %v3657
        %v3674 = vmul.f32 %v3562, %v3658
        %v3675 = vmul.f32 %v3563, %v3659
        %v3676 = vmul.f32 %v3564, %v3660
        %v3677 = vmul.f32 %v3565, %v3661
        %v3678 = vmul.f32 %v3566, %v3662
        %v3679 = vmul.f32 %v3567, %v3663
        %v3680 = vmul.f32 %v3568, %v3664
        %v3681 = vmul.f32 %v3569, %v3665
        %v3682 = vmul.f32 %v3570, %v3666
        %v3683 = vmul.f32 %v3571, %v3667
        %v3684 = vmul.f32 %v3572, %v3668
        %v3685 = vmul.f32 %v3573, %v3669
        %v3686 = vmul.f32 %v3574, %v3670
        %v3687 = vmul.f32 %v3575, %v3671
        %v3688 = vmul.f32 %v3576, %v3672
        %v3690 = vlaneseq
        %v3691 = vshrl.u32 %v3690, 7
        %v3692 = vsub.s32 0, %v3691
        %v3693 = vrot.slane %v3511, %v3692
        %v3695 = vmul.f32 %v3673, %v3693
        %v3696 = vmul.f32 %v3674, %v3693
        %v3697 = vmul.f32 %v3675, %v3693
        %v3698 = vmul.f32 %v3676, %v3693
        %v3699 = vmul.f32 %v3677, %v3693
        %v3700 = vmul.f32 %v3678, %v3693
        %v3701 = vmul.f32 %v3679, %v3693
        %v3702 = vmul.f32 %v3680, %v3693
        %v3703 = vmul.f32 %v3681, %v3693
        %v3704 = vmul.f32 %v3682, %v3693
        %v3705 = vmul.f32 %v3683, %v3693
        %v3706 = vmul.f32 %v3684, %v3693
        %v3707 = vmul.f32 %v3685, %v3693
        %v3708 = vmul.f32 %v3686, %v3693
        %v3709 = vmul.f32 %v3687, %v3693
        %v3710 = vmul.f32 %v3688, %v3693
        %v3712 = vlaneseq
        %v3713 = vshrl.u32 %v3712, 7
        %v3714 = vsub.s32 0, %v3713
        %v3715 = vrot.slane %v3512, %v3714
        %v3717 = vadd.f32 %v3695, %v3715
        %v3718 = vadd.f32 %v3696, %v3715
        %v3719 = vadd.f32 %v3697, %v3715
        %v3720 = vadd.f32 %v3698, %v3715
        %v3721 = vadd.f32 %v3699, %v3715
        %v3722 = vadd.f32 %v3700, %v3715
        %v3723 = vadd.f32 %v3701, %v3715
        %v3724 = vadd.f32 %v3702, %v3715
        %v3725 = vadd.f32 %v3703, %v3715
        %v3726 = vadd.f32 %v3704, %v3715
        %v3727 = vadd.f32 %v3705, %v3715
        %v3728 = vadd.f32 %v3706, %v3715
        %v3729 = vadd.f32 %v3707, %v3715
        %v3730 = vadd.f32 %v3708, %v3715
        %v3731 = vadd.f32 %v3709, %v3715
        %v3732 = vadd.f32 %v3710, %v3715
        %v3733 = vpack.c.bf16 %v3718, %v3717
        %v3734 = vpack.c.bf16 %v3720, %v3719
        %v3735 = vpack.c.bf16 %v3722, %v3721
        %v3736 = vpack.c.bf16 %v3724, %v3723
        %v3737 = vpack.c.bf16 %v3726, %v3725
        %v3738 = vpack.c.bf16 %v3728, %v3727
        %v3739 = vpack.c.bf16 %v3730, %v3729
        %v3740 = vpack.c.bf16 %v3732, %v3731
        %v3741 = vld [vmem:[#allocation8] sm:$0xff]
        %v3742 = vld [vmem:[#allocation8 + $0x8] sm:$0xff]
        %v3743 = vld [vmem:[#allocation8 + $0x10] sm:$0xff]
        %v3744 = vld [vmem:[#allocation8 + $0x18] sm:$0xff]
        %v3745 = vld [vmem:[#allocation8 + $0x20] sm:$0xff]
        %v3746 = vld [vmem:[#allocation8 + $0x28] sm:$0xff]
        %v3747 = vld [vmem:[#allocation8 + $0x30] sm:$0xff]
        %v3748 = vld [vmem:[#allocation8 + $0x38] sm:$0xff]
        %v3749 = vld [vmem:[#allocation8 + $0x40] sm:$0xff]
        %v3750 = vld [vmem:[#allocation8 + $0x48] sm:$0xff]
        %v3751 = vld [vmem:[#allocation8 + $0x50] sm:$0xff]
        %v3752 = vld [vmem:[#allocation8 + $0x58] sm:$0xff]
        %v3753 = vld [vmem:[#allocation8 + $0x60] sm:$0xff]
        %v3754 = vld [vmem:[#allocation8 + $0x68] sm:$0xff]
        %v3755 = vld [vmem:[#allocation8 + $0x70] sm:$0xff]
        %v3756 = vld [vmem:[#allocation8 + $0x78] sm:$0xff]
        %v3757 = vld [vmem:[%s9] sm:$0x3]
        %v3759 = vlaneseq
        %v3760 = vshrl.u32 %v3759, 7
        %v3761 = vsub.s32 0, %v3760
        %v3762 = vrot.slane %v3757, %v3761
        %v3763 = vlaneseq
        %v3764 = vshrl.u32 %v3763, 7
        %v3765 = vsub.s32 1, %v3764
        %v3766 = vrot.slane %v3757, %v3765
        %v3785 = vunpack.c.l.b16 %v3741
        %v3786 = vunpack.c.h.b16 %v3741
        %v3787 = vunpack.c.l.b16 %v3742
        %v3788 = vunpack.c.h.b16 %v3742
        %v3789 = vunpack.c.l.b16 %v3743
        %v3790 = vunpack.c.h.b16 %v3743
        %v3791 = vunpack.c.l.b16 %v3744
        %v3792 = vunpack.c.h.b16 %v3744
        %v3793 = vunpack.c.l.b16 %v3745
        %v3794 = vunpack.c.h.b16 %v3745
        %v3795 = vunpack.c.l.b16 %v3746
        %v3796 = vunpack.c.h.b16 %v3746
        %v3797 = vunpack.c.l.b16 %v3747
        %v3798 = vunpack.c.h.b16 %v3747
        %v3799 = vunpack.c.l.b16 %v3748
        %v3800 = vunpack.c.h.b16 %v3748
        %v3801 = vunpack.c.l.b16 %v3749
        %v3802 = vunpack.c.h.b16 %v3749
        %v3803 = vunpack.c.l.b16 %v3750
        %v3804 = vunpack.c.h.b16 %v3750
        %v3805 = vunpack.c.l.b16 %v3751
        %v3806 = vunpack.c.h.b16 %v3751
        %v3807 = vunpack.c.l.b16 %v3752
        %v3808 = vunpack.c.h.b16 %v3752
        %v3809 = vunpack.c.l.b16 %v3753
        %v3810 = vunpack.c.h.b16 %v3753
        %v3811 = vunpack.c.l.b16 %v3754
        %v3812 = vunpack.c.h.b16 %v3754
        %v3813 = vunpack.c.l.b16 %v3755
        %v3814 = vunpack.c.h.b16 %v3755
        %v3815 = vunpack.c.l.b16 %v3756
        %v3816 = vunpack.c.h.b16 %v3756
        %v3817 = vpack.c.b16 %v3787, %v3785
        %v3818 = vpack.c.b16 %v3788, %v3786
        %v3819 = vpack.c.b16 %v3791, %v3789
        %v3820 = vpack.c.b16 %v3792, %v3790
        %v3821 = vpack.c.b16 %v3795, %v3793
        %v3822 = vpack.c.b16 %v3796, %v3794
        %v3823 = vpack.c.b16 %v3799, %v3797
        %v3824 = vpack.c.b16 %v3800, %v3798
        %v3825 = vpack.c.b16 %v3803, %v3801
        %v3826 = vpack.c.b16 %v3804, %v3802
        %v3827 = vpack.c.b16 %v3807, %v3805
        %v3828 = vpack.c.b16 %v3808, %v3806
        %v3829 = vpack.c.b16 %v3811, %v3809
        %v3830 = vpack.c.b16 %v3812, %v3810
        %v3831 = vpack.c.b16 %v3815, %v3813
        %v3832 = vpack.c.b16 %v3816, %v3814
        %3849 = vmatprep.subr.bf16.mxu0 %v3818
        %3850 = vmatpush1.bf16.msra.mxu0 %v3817
        %3851 = vmatprep.subr.bf16.mxu0 %v3820
        %3852 = vmatpush1.bf16.msra.mxu0 %v3819
        %3853 = vmatprep.subr.bf16.mxu0 %v3822
        %3854 = vmatpush1.bf16.msra.mxu0 %v3821
        %3855 = vmatprep.subr.bf16.mxu0 %v3824
        %3856 = vmatpush1.bf16.msra.mxu0 %v3823
        %3857 = vmatprep.subr.bf16.mxu0 %v3826
        %3858 = vmatpush1.bf16.msra.mxu0 %v3825
        %3859 = vmatprep.subr.bf16.mxu0 %v3828
        %3860 = vmatpush1.bf16.msra.mxu0 %v3827
        %3861 = vmatprep.subr.bf16.mxu0 %v3830
        %3862 = vmatpush1.bf16.msra.mxu0 %v3829
        %3863 = vmatprep.subr.bf16.mxu0 %v3832
        %3864 = vmatpush1.bf16.msra.mxu0 %v3831
        %3865 = vmatprep.subr.bf16.mxu0 0
        %3866 = vmatpush1.bf16.msra.mxu0 0
        %3867 = vmatprep.subr.bf16.mxu0 0
        %3868 = vmatpush1.bf16.msra.mxu0 0
        %3869 = vmatprep.subr.bf16.mxu0 0
        %3870 = vmatpush1.bf16.msra.mxu0 0
        %3871 = vmatprep.subr.bf16.mxu0 0
        %3872 = vmatpush1.bf16.msra.mxu0 0
        %3873 = vmatprep.subr.bf16.mxu0 0
        %3874 = vmatpush1.bf16.msra.mxu0 0
        %3875 = vmatprep.subr.bf16.mxu0 0
        %3876 = vmatpush1.bf16.msra.mxu0 0
        %3877 = vmatprep.subr.bf16.mxu0 0
        %3878 = vmatpush1.bf16.msra.mxu0 0
        %3879 = vmatprep.subr.bf16.mxu0 0
        %3880 = vmatpush1.bf16.msra.mxu0 0
        %3881 = vmatprep.mubr.bf16.mxu0 0
        %3882 = vmatmul.mubr.bf16.gmra.mrb[0].mxu0 %v3733
        %v3883 = vpop.f32.mrb[0].mxu0
        %v3884 = vadd.f32 %v3762, %v3883
        %v3885 = vpop.f32.mrb[0].mxu0
        %v3886 = vadd.f32 %v3766, %v3885
        %v3887 = vpop.f32.mrb[0].mxu0
        %v3888 = vadd.f32 %v3762, %v3887
        %v3889 = vpop.f32.mrb[0].mxu0
        %v3890 = vadd.f32 %v3766, %v3889
        %3891 = vmatprep.mubr.bf16.mxu0 0
        %3892 = vmatmul.mubr.bf16.gmra.mrb[0].mxu0 %v3734
        %v3893 = vpop.f32.mrb[0].mxu0
        %v3894 = vadd.f32 %v3762, %v3893
        %v3895 = vpop.f32.mrb[0].mxu0
        %v3896 = vadd.f32 %v3766, %v3895
        %v3897 = vpop.f32.mrb[0].mxu0
        %v3898 = vadd.f32 %v3762, %v3897
        %v3899 = vpop.f32.mrb[0].mxu0
        %v3900 = vadd.f32 %v3766, %v3899
        %3901 = vmatprep.mubr.bf16.mxu0 0
        %3902 = vmatmul.mubr.bf16.gmra.mrb[0].mxu0 %v3735
        %v3903 = vpop.f32.mrb[0].mxu0
        %v3904 = vadd.f32 %v3762, %v3903
        %v3905 = vpop.f32.mrb[0].mxu0
        %v3906 = vadd.f32 %v3766, %v3905
        %v3907 = vpop.f32.mrb[0].mxu0
        %v3908 = vadd.f32 %v3762, %v3907
        %v3909 = vpop.f32.mrb[0].mxu0
        %v3910 = vadd.f32 %v3766, %v3909
        %3911 = vmatprep.mubr.bf16.mxu0 0
        %3912 = vmatmul.mubr.bf16.gmra.mrb[0].mxu0 %v3736
        %v3913 = vpop.f32.mrb[0].mxu0
        %v3914 = vadd.f32 %v3762, %v3913
        %v3915 = vpop.f32.mrb[0].mxu0
        %v3916 = vadd.f32 %v3766, %v3915
        %v3917 = vpop.f32.mrb[0].mxu0
        %v3918 = vadd.f32 %v3762, %v3917
        %v3919 = vpop.f32.mrb[0].mxu0
        %v3920 = vadd.f32 %v3766, %v3919
        %3921 = vmatprep.mubr.bf16.mxu0 0
        %3922 = vmatmul.mubr.bf16.gmra.mrb[0].mxu0 %v3737
        %v3923 = vpop.f32.mrb[0].mxu0
        %v3924 = vadd.f32 %v3762, %v3923
        %v3925 = vpop.f32.mrb[0].mxu0
        %v3926 = vadd.f32 %v3766, %v3925
        %v3927 = vpop.f32.mrb[0].mxu0
        %v3928 = vadd.f32 %v3762, %v3927
        %v3929 = vpop.f32.mrb[0].mxu0
        %v3930 = vadd.f32 %v3766, %v3929
        %3931 = vmatprep.mubr.bf16.mxu0 0
        %3932 = vmatmul.mubr.bf16.gmra.mrb[0].mxu0 %v3738
        %v3933 = vpop.f32.mrb[0].mxu0
        %v3934 = vadd.f32 %v3762, %v3933
        %v3935 = vpop.f32.mrb[0].mxu0
        %v3936 = vadd.f32 %v3766, %v3935
        %v3937 = vpop.f32.mrb[0].mxu0
        %v3938 = vadd.f32 %v3762, %v3937
        %v3939 = vpop.f32.mrb[0].mxu0
        %v3940 = vadd.f32 %v3766, %v3939
        %3941 = vmatprep.mubr.bf16.mxu0 0
        %3942 = vmatmul.mubr.bf16.gmra.mrb[0].mxu0 %v3739
        %v3943 = vpop.f32.mrb[0].mxu0
        %v3944 = vadd.f32 %v3762, %v3943
        %v3945 = vpop.f32.mrb[0].mxu0
        %v3946 = vadd.f32 %v3766, %v3945
        %v3947 = vpop.f32.mrb[0].mxu0
        %v3948 = vadd.f32 %v3762, %v3947
        %v3949 = vpop.f32.mrb[0].mxu0
        %v3950 = vadd.f32 %v3766, %v3949
        %3951 = vmatprep.mubr.bf16.mxu0 0
        %3952 = vmatmul.mubr.bf16.gmra.mrb[0].mxu0 %v3740
        %v3953 = vpop.f32.mrb[0].mxu0
        %v3954 = vadd.f32 %v3762, %v3953
        %v3955 = vpop.f32.mrb[0].mxu0
        %v3956 = vadd.f32 %v3766, %v3955
        %v3957 = vpop.f32.mrb[0].mxu0
        %v3958 = vadd.f32 %v3762, %v3957
        %v3959 = vpop.f32.mrb[0].mxu0
        %v3960 = vadd.f32 %v3766, %v3959
        %3961 = vdwg.mxu0
        %v3962 = vmax.f32 %v3884, 0.0
        %v3963 = vmax.f32 %v3886, 0.0
        %v3964 = vmax.f32 %v3888, 0.0
        %v3965 = vmax.f32 %v3890, 0.0
        %v3966 = vmax.f32 %v3894, 0.0
        %v3967 = vmax.f32 %v3896, 0.0
        %v3968 = vmax.f32 %v3898, 0.0
        %v3969 = vmax.f32 %v3900, 0.0
        %v3970 = vmax.f32 %v3904, 0.0
        %v3971 = vmax.f32 %v3906, 0.0
        %v3972 = vmax.f32 %v3908, 0.0
        %v3973 = vmax.f32 %v3910, 0.0
        %v3974 = vmax.f32 %v3914, 0.0
        %v3975 = vmax.f32 %v3916, 0.0
        %v3976 = vmax.f32 %v3918, 0.0
        %v3977 = vmax.f32 %v3920, 0.0
        %v3978 = vmax.f32 %v3924, 0.0
        %v3979 = vmax.f32 %v3926, 0.0
        %v3980 = vmax.f32 %v3928, 0.0
        %v3981 = vmax.f32 %v3930, 0.0
        %v3982 = vmax.f32 %v3934, 0.0
        %v3983 = vmax.f32 %v3936, 0.0
        %v3984 = vmax.f32 %v3938, 0.0
        %v3985 = vmax.f32 %v3940, 0.0
        %v3986 = vmax.f32 %v3944, 0.0
        %v3987 = vmax.f32 %v3946, 0.0
        %v3988 = vmax.f32 %v3948, 0.0
        %v3989 = vmax.f32 %v3950, 0.0
        %v3990 = vmax.f32 %v3954, 0.0
        %v3991 = vmax.f32 %v3956, 0.0
        %v3992 = vmax.f32 %v3958, 0.0
        %v3993 = vmax.f32 %v3960, 0.0
        %v3994 = vpack.c.bf16 %v3964, %v3962
        %v3995 = vpack.c.bf16 %v3965, %v3963
        %v3996 = vpack.c.bf16 %v3968, %v3966
        %v3997 = vpack.c.bf16 %v3969, %v3967
        %v3998 = vpack.c.bf16 %v3972, %v3970
        %v3999 = vpack.c.bf16 %v3973, %v3971
        %v4000 = vpack.c.bf16 %v3976, %v3974
        %v4001 = vpack.c.bf16 %v3977, %v3975
        %v4002 = vpack.c.bf16 %v3980, %v3978
        %v4003 = vpack.c.bf16 %v3981, %v3979
        %v4004 = vpack.c.bf16 %v3984, %v3982
        %v4005 = vpack.c.bf16 %v3985, %v3983
        %v4006 = vpack.c.bf16 %v3988, %v3986
        %v4007 = vpack.c.bf16 %v3989, %v3987
        %v4008 = vpack.c.bf16 %v3992, %v3990
        %v4009 = vpack.c.bf16 %v3993, %v3991
        %v4010 = vld [vmem:[#allocation10] sm:$0xf]
        %v4011 = vld [vmem:[#allocation10 + $0x4] sm:$0xf]
        %v4012 = vld [vmem:[#allocation10 + $0x8] sm:$0xf]
        %v4013 = vld [vmem:[#allocation10 + $0xc] sm:$0xf]
        %v4014 = vld [vmem:[#allocation10 + $0x10] sm:$0xf]
        %v4015 = vld [vmem:[#allocation10 + $0x14] sm:$0xf]
        %v4016 = vld [vmem:[#allocation10 + $0x18] sm:$0xf]
        %v4017 = vld [vmem:[#allocation10 + $0x1c] sm:$0xf]
        %v4018 = vld [vmem:[#allocation10 + $0x20] sm:$0xf]
        %v4019 = vld [vmem:[#allocation10 + $0x24] sm:$0xf]
        %v4020 = vld [vmem:[#allocation10 + $0x28] sm:$0xf]
        %v4021 = vld [vmem:[#allocation10 + $0x2c] sm:$0xf]
        %v4022 = vld [vmem:[#allocation10 + $0x30] sm:$0xf]
        %v4023 = vld [vmem:[#allocation10 + $0x34] sm:$0xf]
        %v4024 = vld [vmem:[#allocation10 + $0x38] sm:$0xf]
        %v4025 = vld [vmem:[#allocation10 + $0x3c] sm:$0xf]
        %v4026 = vld [vmem:[#allocation10 + $0x40] sm:$0xf]
        %v4027 = vld [vmem:[#allocation10 + $0x44] sm:$0xf]
        %v4028 = vld [vmem:[#allocation10 + $0x48] sm:$0xf]
        %v4029 = vld [vmem:[#allocation10 + $0x4c] sm:$0xf]
        %v4030 = vld [vmem:[#allocation10 + $0x50] sm:$0xf]
        %v4031 = vld [vmem:[#allocation10 + $0x54] sm:$0xf]
        %v4032 = vld [vmem:[#allocation10 + $0x58] sm:$0xf]
        %v4033 = vld [vmem:[#allocation10 + $0x5c] sm:$0xf]
        %v4034 = vld [vmem:[#allocation10 + $0x60] sm:$0xf]
        %v4035 = vld [vmem:[#allocation10 + $0x64] sm:$0xf]
        %v4036 = vld [vmem:[#allocation10 + $0x68] sm:$0xf]
        %v4037 = vld [vmem:[#allocation10 + $0x6c] sm:$0xf]
        %v4038 = vld [vmem:[#allocation10 + $0x70] sm:$0xf]
        %v4039 = vld [vmem:[#allocation10 + $0x74] sm:$0xf]
        %v4040 = vld [vmem:[#allocation10 + $0x78] sm:$0xf]
        %v4041 = vld [vmem:[#allocation10 + $0x7c] sm:$0xf]
        %v4042 = vld [vmem:[#allocation11] sm:$0x1]
        %v4044 = vlaneseq
        %v4045 = vshrl.u32 %v4044, 7
        %v4046 = vsub.s32 0, %v4045
        %v4047 = vrot.slane %v4042, %v4046
        %v4081 = vunpack.c.l.b16 %v4010
        %v4082 = vunpack.c.l.b16 %v4011
        %v4083 = vunpack.c.l.b16 %v4012
        %v4084 = vunpack.c.l.b16 %v4013
        %v4085 = vunpack.c.l.b16 %v4014
        %v4086 = vunpack.c.l.b16 %v4015
        %v4087 = vunpack.c.l.b16 %v4016
        %v4088 = vunpack.c.l.b16 %v4017
        %v4089 = vunpack.c.l.b16 %v4018
        %v4090 = vunpack.c.l.b16 %v4019
        %v4091 = vunpack.c.l.b16 %v4020
        %v4092 = vunpack.c.l.b16 %v4021
        %v4093 = vunpack.c.l.b16 %v4022
        %v4094 = vunpack.c.l.b16 %v4023
        %v4095 = vunpack.c.l.b16 %v4024
        %v4096 = vunpack.c.l.b16 %v4025
        %v4097 = vunpack.c.l.b16 %v4026
        %v4098 = vunpack.c.l.b16 %v4027
        %v4099 = vunpack.c.l.b16 %v4028
        %v4100 = vunpack.c.l.b16 %v4029
        %v4101 = vunpack.c.l.b16 %v4030
        %v4102 = vunpack.c.l.b16 %v4031
        %v4103 = vunpack.c.l.b16 %v4032
        %v4104 = vunpack.c.l.b16 %v4033
        %v4105 = vunpack.c.l.b16 %v4034
        %v4106 = vunpack.c.l.b16 %v4035
        %v4107 = vunpack.c.l.b16 %v4036
        %v4108 = vunpack.c.l.b16 %v4037
        %v4109 = vunpack.c.l.b16 %v4038
        %v4110 = vunpack.c.l.b16 %v4039
        %v4111 = vunpack.c.l.b16 %v4040
        %v4112 = vunpack.c.l.b16 %v4041
        %v4113 = vpack.c.b16 %v4082, %v4081
        %v4114 = vpack.c.b16 %v4084, %v4083
        %v4115 = vpack.c.b16 %v4086, %v4085
        %v4116 = vpack.c.b16 %v4088, %v4087
        %v4117 = vpack.c.b16 %v4090, %v4089
        %v4118 = vpack.c.b16 %v4092, %v4091
        %v4119 = vpack.c.b16 %v4094, %v4093
        %v4120 = vpack.c.b16 %v4096, %v4095
        %v4121 = vpack.c.b16 %v4098, %v4097
        %v4122 = vpack.c.b16 %v4100, %v4099
        %v4123 = vpack.c.b16 %v4102, %v4101
        %v4124 = vpack.c.b16 %v4104, %v4103
        %v4125 = vpack.c.b16 %v4106, %v4105
        %v4126 = vpack.c.b16 %v4108, %v4107
        %v4127 = vpack.c.b16 %v4110, %v4109
        %v4128 = vpack.c.b16 %v4112, %v4111
        %4145 = vmatprep.subr.bf16.mxu0 0
        %4146 = vmatpush1.bf16.msra.mxu0 %v4113
        %4147 = vmatprep.subr.bf16.mxu0 0
        %4148 = vmatpush1.bf16.msra.mxu0 %v4114
        %4149 = vmatprep.subr.bf16.mxu0 0
        %4150 = vmatpush1.bf16.msra.mxu0 %v4115
        %4151 = vmatprep.subr.bf16.mxu0 0
        %4152 = vmatpush1.bf16.msra.mxu0 %v4116
        %4153 = vmatprep.subr.bf16.mxu0 0
        %4154 = vmatpush1.bf16.msra.mxu0 %v4117
        %4155 = vmatprep.subr.bf16.mxu0 0
        %4156 = vmatpush1.bf16.msra.mxu0 %v4118
        %4157 = vmatprep.subr.bf16.mxu0 0
        %4158 = vmatpush1.bf16.msra.mxu0 %v4119
        %4159 = vmatprep.subr.bf16.mxu0 0
        %4160 = vmatpush1.bf16.msra.mxu0 %v4120
        %4161 = vmatprep.subr.bf16.mxu0 0
        %4162 = vmatpush1.bf16.msra.mxu0 %v4121
        %4163 = vmatprep.subr.bf16.mxu0 0
        %4164 = vmatpush1.bf16.msra.mxu0 %v4122
        %4165 = vmatprep.subr.bf16.mxu0 0
        %4166 = vmatpush1.bf16.msra.mxu0 %v4123
        %4167 = vmatprep.subr.bf16.mxu0 0
        %4168 = vmatpush1.bf16.msra.mxu0 %v4124
        %4169 = vmatprep.subr.bf16.mxu0 0
        %4170 = vmatpush1.bf16.msra.mxu0 %v4125
        %4171 = vmatprep.subr.bf16.mxu0 0
        %4172 = vmatpush1.bf16.msra.mxu0 %v4126
        %4173 = vmatprep.subr.bf16.mxu0 0
        %4174 = vmatpush1.bf16.msra.mxu0 %v4127
        %4175 = vmatprep.subr.bf16.mxu0 0
        %4176 = vmatpush1.bf16.msra.mxu0 %v4128
        %4177 = vmatprep.mubr.bf16.mxu0 %v3995
        %4178 = vmatmul.mubr.bf16.gmra.mrb[0].mxu0 %v3994
        %v4179 = vpop.f32.mrb[0].mxu0
        %v4180 = vadd.f32 %v4047, %v4179
        %v4181 = vpop.f32.mrb[0].mxu0
        %v4182 = vpop.f32.mrb[0].mxu0
        %v4183 = vadd.f32 %v4047, %v4182
        %v4184 = vpop.f32.mrb[0].mxu0
        %4185 = vmatprep.mubr.bf16.mxu0 %v3997
        %4186 = vmatmul.mubr.bf16.gmra.mrb[0].mxu0 %v3996
        %v4187 = vpop.f32.mrb[0].mxu0
        %v4188 = vadd.f32 %v4047, %v4187
        %v4189 = vpop.f32.mrb[0].mxu0
        %v4190 = vpop.f32.mrb[0].mxu0
        %v4191 = vadd.f32 %v4047, %v4190
        %v4192 = vpop.f32.mrb[0].mxu0
        %4193 = vmatprep.mubr.bf16.mxu0 %v3999
        %4194 = vmatmul.mubr.bf16.gmra.mrb[0].mxu0 %v3998
        %v4195 = vpop.f32.mrb[0].mxu0
        %v4196 = vadd.f32 %v4047, %v4195
        %v4197 = vpop.f32.mrb[0].mxu0
        %v4198 = vpop.f32.mrb[0].mxu0
        %v4199 = vadd.f32 %v4047, %v4198
        %v4200 = vpop.f32.mrb[0].mxu0
        %4201 = vmatprep.mubr.bf16.mxu0 %v4001
        %4202 = vmatmul.mubr.bf16.gmra.mrb[0].mxu0 %v4000
        %v4203 = vpop.f32.mrb[0].mxu0
        %v4204 = vadd.f32 %v4047, %v4203
        %v4205 = vpop.f32.mrb[0].mxu0
        %v4206 = vpop.f32.mrb[0].mxu0
        %v4207 = vadd.f32 %v4047, %v4206
        %v4208 = vpop.f32.mrb[0].mxu0
        %4209 = vmatprep.mubr.bf16.mxu0 %v4003
        %4210 = vmatmul.mubr.bf16.gmra.mrb[0].mxu0 %v4002
        %v4211 = vpop.f32.mrb[0].mxu0
        %v4212 = vadd.f32 %v4047, %v4211
        %v4213 = vpop.f32.mrb[0].mxu0
        %v4214 = vpop.f32.mrb[0].mxu0
        %v4215 = vadd.f32 %v4047, %v4214
        %v4216 = vpop.f32.mrb[0].mxu0
        %4217 = vmatprep.mubr.bf16.mxu0 %v4005
        %4218 = vmatmul.mubr.bf16.gmra.mrb[0].mxu0 %v4004
        %v4219 = vpop.f32.mrb[0].mxu0
        %v4220 = vadd.f32 %v4047, %v4219
        %v4221 = vpop.f32.mrb[0].mxu0
        %v4222 = vpop.f32.mrb[0].mxu0
        %v4223 = vadd.f32 %v4047, %v4222
        %v4224 = vpop.f32.mrb[0].mxu0
        %4225 = vmatprep.mubr.bf16.mxu0 %v4007
        %4226 = vmatmul.mubr.bf16.gmra.mrb[0].mxu0 %v4006
        %v4227 = vpop.f32.mrb[0].mxu0
        %v4228 = vadd.f32 %v4047, %v4227
        %v4229 = vpop.f32.mrb[0].mxu0
        %v4230 = vpop.f32.mrb[0].mxu0
        %v4231 = vadd.f32 %v4047, %v4230
        %v4232 = vpop.f32.mrb[0].mxu0
        %4233 = vmatprep.mubr.bf16.mxu0 %v4009
        %4234 = vmatmul.mubr.bf16.gmra.mrb[0].mxu0 %v4008
        %v4235 = vpop.f32.mrb[0].mxu0
        %v4236 = vadd.f32 %v4047, %v4235
        %v4237 = vpop.f32.mrb[0].mxu0
        %v4238 = vpop.f32.mrb[0].mxu0
        %v4239 = vadd.f32 %v4047, %v4238
        %v4240 = vpop.f32.mrb[0].mxu0
        %4241 = vdwg.mxu0
        %v4242 = vadd.f32 %v4180, %v3717
        %v4243 = vadd.f32 %v4183, %v3718
        %v4244 = vadd.f32 %v4188, %v3719
        %v4245 = vadd.f32 %v4191, %v3720
        %v4246 = vadd.f32 %v4196, %v3721
        %v4247 = vadd.f32 %v4199, %v3722
        %v4248 = vadd.f32 %v4204, %v3723
        %v4249 = vadd.f32 %v4207, %v3724
        %v4250 = vadd.f32 %v4212, %v3725
        %v4251 = vadd.f32 %v4215, %v3726
        %v4252 = vadd.f32 %v4220, %v3727
        %v4253 = vadd.f32 %v4223, %v3728
        %v4254 = vadd.f32 %v4228, %v3729
        %v4255 = vadd.f32 %v4231, %v3730
        %v4256 = vadd.f32 %v4236, %v3731
        %v4257 = vadd.f32 %v4239, %v3732
        %4258 = vst [vmem:[%s502] sm:$0xff] %v4242
        %4259 = vst [vmem:[%s502 + $0x8] sm:$0xff] %v4243
        %4260 = vst [vmem:[%s502 + $0x10] sm:$0xff] %v4244
        %4261 = vst [vmem:[%s502 + $0x18] sm:$0xff] %v4245
        %4262 = vst [vmem:[%s502 + $0x20] sm:$0xff] %v4246
        %4263 = vst [vmem:[%s502 + $0x28] sm:$0xff] %v4247
        %4264 = vst [vmem:[%s502 + $0x30] sm:$0xff] %v4248
        %4265 = vst [vmem:[%s502 + $0x38] sm:$0xff] %v4249
        %4266 = vst [vmem:[%s502 + $0x40] sm:$0xff] %v4250
        %4267 = vst [vmem:[%s502 + $0x48] sm:$0xff] %v4251
        %4268 = vst [vmem:[%s502 + $0x50] sm:$0xff] %v4252
        %4269 = vst [vmem:[%s502 + $0x58] sm:$0xff] %v4253
        %4270 = vst [vmem:[%s502 + $0x60] sm:$0xff] %v4254
        %4271 = vst [vmem:[%s502 + $0x68] sm:$0xff] %v4255
        %4272 = vst [vmem:[%s502 + $0x70] sm:$0xff] %v4256
        %4273 = vst [vmem:[%s502 + $0x78] sm:$0xff] %v4257
        %s4274 = sand.u32 %s297, 1
        %s4275 = scalar_lea.sflag [#allocation4], %s4274
        %s4276 = sand.u32 %s297, 1
        %s4277 = smul.addr %s4276, 128
        %s4278 = scalar_lea.vmem [#allocation13], %s4277
        // Predicated region
        $region93: #{block_apply.1} parent=67 // pred_check
          %p4279 = pneg %p307
        $region94: #{block_apply.1} parent=67 // pred_check_branch
          %4281 = sbr.rel (%p4279) target = $region96
        $region95: #{block_apply.1} parent=67 // pred_region
          %s4283 = ssub.s32 2048, 2048
          %4284 = vsyncadd %s4275, %s4283
          %s4285 = smul.addr %s32, 16
          %s4286 = smul.addr %s4285, 128
          %s4287 = scalar_lea.hbm %s12, %s4286
          %s4288 = sshll.u32 %s4278, 4
          %s4289 = int_to_ptr.vmem [resolvable:$true] %s4288
          %4294 = dma.vmem_to_hbm [thread:$0]  %s4289, 2048, %s4287, %s4275, 128, 128, 8
        $region96: #{block_apply.1} parent=67 // pred_fallthru
          _
      $region68: #{block_apply.1} parent=5 // pred_fallthru
        _
      %p4295 = scmp.le.s32.totalorder 2, %s27
      // Predicated region
      $region97: #{block_apply.1} parent=5 // pred_check
        %p4296 = pneg %p4295
      $region98: #{block_apply.1} parent=5 // pred_check_branch
        %4298 = sbr.rel (%p4296) target = $region100
      $region99: #{block_apply.1} parent=5 // pred_region
        %s4299 = ssub.s32 %s27, 2
        // Predicated region
        $region101: #{block_apply.1} parent=99 // pred_check
          %p4300 = pneg %p313
        $region102: #{block_apply.1} parent=99 // pred_check_branch
          %4302 = sbr.rel (%p4300) target = $region104
        $region103: #{block_apply.1} parent=99 // pred_region
          %s4303 = sand.u32 %s298, 1
          %s4304 = scalar_lea.sflag [#allocation4], %s4303
          %s4305 = sand.u32 %s298, 1
          %s4306 = smul.addr %s4305, 128
          %s4307 = scalar_lea.vmem [#allocation13], %s4306
          %4308 = dma.done %s4304, 2048
        $region104: #{block_apply.1} parent=99 // pred_fallthru
          _
      $region100: #{block_apply.1} parent=5 // pred_fallthru
        _
    $region6: #{block_apply.1} parent=1 // loop_footer
      %s31 = sadd.s32 1, %s27
    $region7: #{block_apply.1} parent=1 // loop_footer_branch
      %26 = sbr.rel target = $region3
    $region8: #{block_apply.1} parent=1 // loop_exit
      _
    %4309 = vsyncpa [#allocation3], 1
    %s4310 = scalar_lea.sflag [#allocation3], 1
    %4311 = vsyncpa %s4310, 1
    %4312 = vsyncpa [#allocation6], 1
    %4313 = vsyncpa [#allocation9], 1
    %4314 = vsyncpa [#allocation12], 1
    %4315 = vsyncpa [#allocation4], 1
    %s4316 = scalar_lea.sflag [#allocation4], 1
    %4317 = vsyncpa %s4316, 1

</llo_original>
